<compile_context>
chip_gen: v7x
topology: tpu7x:2x2x1
jax: 0.10.0
libtpu: 0.0.40
codegen_flags: <defaults>
</compile_context>

<pallas_src>
import functools

import jax
import jax.numpy as jnp
import numpy as np
from jax import lax
from jax.experimental import pallas as pl
from jax.experimental.pallas import tpu as pltpu


def _sdssm_kernel(p,                        # Lp-norm order (static python float)
                  x_ref,                    # (bb, cl, D)  batch-block x time-chunk of the input
                  wsel_ref, bsel_ref,       # (D, K), (1, K)   A_selector
                  wb_ref,                   # (D, H)           B projection (no bias)
                  adict_ref,                # (K, H*H)         A_dict[k, n1*H + n2]
                  gamma_ref, beta_ref,      # (1, H), (1, H)   LayerNorm affine
                  wr_ref, br_ref,           # (H, O), (1, O)   readout
                  out_ref,                  # (bb, O)
                  h_ref,                    # scratch (bb, 1, H)       hidden-state carry
                  tmat_ref,                 # scratch (bb, cl, H, H)   per-step transitions
                  u_ref):                   # scratch (bb, cl, H)      per-step input drive
    bb, cl, D = x_ref.shape
    H = wb_ref.shape[1]
    HH = H * H
    t_idx = pl.program_id(1)

    # ---- carry init at the first time chunk of each batch block -------------------------
    @pl.when(t_idx == 0)
    def _():
        h_ref[...] = jnp.zeros_like(h_ref)

    # ---- batched (whole chunk at once) precompute, lane-dense ---------------------------
    x2 = x_ref[...].reshape(bb * cl, D)                       # rows ordered (b, t)

    # Two clean projections (no mid-lane-tile slicing of a fused result).
    u = jnp.dot(x2, wb_ref[...], preferred_element_type=jnp.float32)                 # (N, H)
    logits = jnp.dot(x2, wsel_ref[...], preferred_element_type=jnp.float32) + bsel_ref[...]

    # Softmax over the K transition matrices (numerically stable).
    logits = logits - jnp.max(logits, axis=-1, keepdims=True)
    e = jnp.exp(logits)
    sel = e / jnp.sum(e, axis=-1, keepdims=True)              # (N, K)

    # Mix transition matrices for ALL steps of the chunk with one MXU matmul:
    #   a_flat[r, n1*H + n2] = sum_k sel[r, k] * A_dict[k, n1, n2]
    a_flat = jnp.dot(sel, adict_ref[...], preferred_element_type=jnp.float32)        # (N, HH)

    # One-hot routing matrices generated in-kernel (no HBM inputs for them):
    #   ssum  [n1*H+n2, j] = (n2 == j)   -> sums |A|^p over n1, keeps n2
    #   sbcast[j, n1*H+n2] = (n2 == j)   -> broadcasts an n2-vector over n1
    c1 = lax.broadcasted_iota(jnp.int32, (HH, H), 0)
    j1 = lax.broadcasted_iota(jnp.int32, (HH, H), 1)
    j2 = lax.broadcasted_iota(jnp.int32, (H, HH), 0)
    c2 = lax.broadcasted_iota(jnp.int32, (H, HH), 1)
    if (H & (H - 1)) == 0:                                    # H power of two -> cheap bit-and
        n2_c1 = c1 & (H - 1)
        n2_c2 = c2 & (H - 1)
    else:
        n2_c1 = c1 % H
        n2_c2 = c2 % H
    ssum = (n2_c1 == j1).astype(jnp.float32)                  # (HH, H)
    sbcast = (n2_c2 == j2).astype(jnp.float32)                # (H, HH)

    # Lp column norms (over n1) and pre-scaling of A by 1/norm, all lane-dense.
    a_pow = jnp.power(jnp.abs(a_flat), p)                                             # (N, HH)
    norm_p = jnp.dot(a_pow, ssum, preferred_element_type=jnp.float32)                 # (N, H)
    inv_norm = 1.0 / jnp.power(norm_p, 1.0 / p)                                        # (N, H)
    inv_exp = jnp.dot(inv_norm, sbcast, preferred_element_type=jnp.float32)           # (N, HH)
    t_flat = a_flat * inv_exp                                 # pre-normalized transitions

    # One relayout into batched-matmul form, staged into VMEM scratch so the recurrence loop
    # loads small per-step slices instead of keeping huge SSA values live across the loop.
    tmat_ref[...] = t_flat.reshape(bb, cl, H, H)              # [b, t, n1, n2]
    u_ref[...] = u.reshape(bb, cl, H)                         # [b, t, n1]

    # ---- sequential recurrence within the chunk: ONE batched matvec + add per step ------
    h = h_ref[...]                                            # (bb, 1, H)
    for i in range(cl):                                       # cl is static -> full unroll
        t_i = tmat_ref[:, i]                                  # (bb, H, H)  static ref slice
        u_i = u_ref[:, i:i + 1, :]                            # (bb, 1, H)
        # new_h[b, 0, n1] = sum_n2 T[b, n1, n2] * h[b, 0, n2]
        h = jnp.einsum('bom,bnm->bon', h, t_i,
                       preferred_element_type=jnp.float32) + u_i
    h_ref[...] = h                                            # carry to the next time chunk

    # ---- final LayerNorm (eps=1e-5, affine) + readout, only at the last time chunk ------
    @pl.when(t_idx == pl.num_programs(1) - 1)
    def _():
        hf = h[:, 0, :]                                       # (bb, H)
        mean = jnp.mean(hf, axis=-1, keepdims=True)
        var = jnp.mean(jnp.square(hf - mean), axis=-1, keepdims=True)
        hn = (hf - mean) * lax.rsqrt(var + 1e-5)
        hn = hn * gamma_ref[...] + beta_ref[...]
        out_ref[...] = jnp.dot(hn, wr_ref[...], preferred_element_type=jnp.float32) + br_ref[...]


def _vmem_limit_bytes():
    """Per-generation VMEM limit: ~3/4 of physical capacity, capped at 100 MiB."""
    try:
        cap = pltpu.get_tpu_info().vmem_capacity_bytes
    except Exception:
        cap = 64 * 1024 * 1024                                # conservative (v7x-sized) default
    return int(min(cap * 3 // 4, 100 * 1024 * 1024))


def _choose_batch_block(B):
    # Keep the sublane-facing output block either a multiple of 8 or the full batch.
    return 8 if (B % 8 == 0) else B


def _choose_time_chunk(L, bb, H, vmem_budget_bytes):
    # ~6 live f32 copies of (bb, H*H) per resident timestep (a_flat, a_pow, inv_exp, t_flat,
    # the staged scratch, slack).  Chunk must divide L and be a multiple of 8 (or be L itself).
    per_step = 6 * bb * H * H * 4
    max_chunk = max(1, vmem_budget_bytes // max(per_step, 1))
    if L <= max_chunk:
        return L
    divisors = [c for c in range(8, L, 8) if L % c == 0]
    fitting = [c for c in divisors if c <= max_chunk]
    if fitting:
        return max(fitting)
    return min(divisors) if divisors else L


def sdssm_forward(x, params, *, Lp_norm=1.2):
    """x: (B, L, D) float32. Returns (B, output_size)."""
    B, L, D = x.shape
    wsel, bsel, wb, adict_khh, gamma, beta, wr, br = params
    K = wsel.shape[1]
    H = wb.shape[1]
    O = wr.shape[1]

    # Flatten A_dict so per-step mixing becomes one (N,K)x(K,H*H) MXU matmul.
    adict_flat = adict_khh.reshape(K, H * H)

    vmem_limit = _vmem_limit_bytes()
    bb = _choose_batch_block(B)
    chunk_l = _choose_time_chunk(L, bb, H, vmem_limit // 3)
    nb, nt = B // bb, L // chunk_l

    def full_spec(shape):
        nd = len(shape)
        return pl.BlockSpec(shape, lambda b, t, _nd=nd: (0,) * _nd)

    grid_spec = pltpu.PrefetchScalarGridSpec(
        num_scalar_prefetch=0,
        grid=(nb, nt),
        in_specs=[
            # x stays (B, L, D) in HBM; the index_map picks the (batch-block, time-chunk) tile.
            pl.BlockSpec((bb, chunk_l, D), lambda b, t: (b, t, 0)),
            full_spec(wsel.shape), full_spec(bsel.shape), full_spec(wb.shape),
            full_spec(adict_flat.shape),
            full_spec(gamma.shape), full_spec(beta.shape),
            full_spec(wr.shape), full_spec(br.shape),
        ],
        out_specs=pl.BlockSpec((bb, O), lambda b, t: (b, 0)),
        scratch_shapes=[
            pltpu.VMEM((bb, 1, H), jnp.float32),            # hidden-state carry
            pltpu.VMEM((bb, chunk_l, H, H), jnp.float32),   # staged transitions
            pltpu.VMEM((bb, chunk_l, H), jnp.float32),      # staged input drives
        ],
    )

    kernel = functools.partial(_sdssm_kernel, float(Lp_norm))
    return pl.pallas_call(
        kernel,
        out_shape=jax.ShapeDtypeStruct((B, O), jnp.float32),
        grid_spec=grid_spec,
        compiler_params=pltpu.CompilerParams(
            dimension_semantics=("parallel", "arbitrary"),
            vmem_limit_bytes=vmem_limit),
    )(x, wsel, bsel, wb, adict_flat, gamma, beta, wr, br)


def sdssm_reference(x, params, *, Lp_norm=1.2):
    """Pure-JAX reference mirroring the PyTorch module."""
    wsel, bsel, wb, adict_khh, gamma, beta, wr, br = params
    B, L, D = x.shape
    H = wb.shape[1]
    p = Lp_norm
    sel = jax.nn.softmax(x @ wsel + bsel[0], axis=-1)     # (B, L, K)
    inp = x @ wb                                          # (B, L, H)
    h = jnp.zeros((B, H), jnp.float32)
    for i in range(L):
        w = sel[:, i, :]
        A = jnp.einsum('knm,bk->bnm', adict_khh, w)       # (B, H, H)
        norm = jnp.sum(jnp.abs(A) ** p, axis=1, keepdims=True) ** (1.0 / p)
        T = A / norm
        h = jnp.einsum('bnm,bm->bn', T, h) + inp[:, i, :]
    mean = h.mean(-1, keepdims=True)
    var = ((h - mean) ** 2).mean(-1, keepdims=True)
    hn = (h - mean) / jnp.sqrt(var + 1e-5) * gamma[0] + beta[0]
    return hn @ wr + br[0]


def init_params(key, *, input_size, state_size, output_size, num_A):
    D, H, O, K = input_size, state_size, output_size, num_A
    ks = jax.random.split(key, 6)
    lim_sel = 1.0 / np.sqrt(D)
    wsel = jax.random.uniform(ks[0], (D, K), jnp.float32, -lim_sel, lim_sel)
    bsel = jax.random.uniform(ks[1], (1, K), jnp.float32, -lim_sel, lim_sel)
    wb = jax.random.uniform(ks[2], (D, H), jnp.float32, -lim_sel, lim_sel)
    a_lim = np.sqrt(6.0) / np.sqrt(2.0 * H)
    adict_khh = jax.random.uniform(ks[3], (K, H, H), jnp.float32, -a_lim, a_lim)
    gamma = jnp.ones((1, H), jnp.float32)
    beta = jnp.zeros((1, H), jnp.float32)
    lim_r = 1.0 / np.sqrt(H)
    wr = jax.random.uniform(ks[4], (H, O), jnp.float32, -lim_r, lim_r)
    br = jax.random.uniform(ks[5], (1, O), jnp.float32, -lim_r, lim_r)
    return (wsel, bsel, wb, adict_khh, gamma, beta, wr, br)


if __name__ == "__main__":
    B, L = 2, 8
    input_size, state_size, output_size, num_A = 32, 32, 8, 2

    key = jax.random.PRNGKey(0)
    k_x, k_p = jax.random.split(key)
    x = jax.random.normal(k_x, (B, L, input_size), jnp.float32)
    params = init_params(k_p, input_size=input_size, state_size=state_size,
                         output_size=output_size, num_A=num_A)

    out = sdssm_forward(x, params, Lp_norm=1.2)
    out = jax.block_until_ready(out)

    ref = sdssm_reference(x, params, Lp_norm=1.2)
    np.testing.assert_allclose(np.asarray(out), np.asarray(ref), rtol=1e-4, atol=1e-4)

    print("KERNEL_OK")
</pallas_src>

<mosaic_0001>
module attributes {stable_mosaic.version = 11 : i64} {
  func.func @_sdssm_kernel(%arg0: i32, %arg1: i32, %arg2: memref<2x8x32xf32, #tpu.memory_space<vmem>>, %arg3: memref<32x2xf32, #tpu.memory_space<vmem>>, %arg4: memref<1x2xf32, #tpu.memory_space<vmem>>, %arg5: memref<32x32xf32, #tpu.memory_space<vmem>>, %arg6: memref<2x1024xf32, #tpu.memory_space<vmem>>, %arg7: memref<1x32xf32, #tpu.memory_space<vmem>>, %arg8: memref<1x32xf32, #tpu.memory_space<vmem>>, %arg9: memref<32x8xf32, #tpu.memory_space<vmem>>, %arg10: memref<1x8xf32, #tpu.memory_space<vmem>>, %arg11: memref<2x8xf32, #tpu.memory_space<vmem>>, %arg12: memref<2x1x32xf32, #tpu.memory_space<vmem>>, %arg13: memref<2x8x32x32xf32, #tpu.memory_space<vmem>>, %arg14: memref<2x8x32xf32, #tpu.memory_space<vmem>>) attributes {dimension_semantics = [#tpu.dimension_semantics<parallel>, #tpu.dimension_semantics<arbitrary>], iteration_bounds = array<i64: 1, 1>, scalar_prefetch = 0 : i64, scratch_operands = 3 : i64, tpu.core_type = #tpu.core_type<tc>, window_params = [{transform_indices = @transform_0, window_bounds = array<i64: 2, 8, 32>}, {pipeline_mode = #tpu.pipeline_mode<synchronous>, transform_indices = @transform_1, window_bounds = array<i64: 32, 2>}, {pipeline_mode = #tpu.pipeline_mode<synchronous>, transform_indices = @transform_2, window_bounds = array<i64: 1, 2>}, {pipeline_mode = #tpu.pipeline_mode<synchronous>, transform_indices = @transform_3, window_bounds = array<i64: 32, 32>}, {pipeline_mode = #tpu.pipeline_mode<synchronous>, transform_indices = @transform_4, window_bounds = array<i64: 2, 1024>}, {pipeline_mode = #tpu.pipeline_mode<synchronous>, transform_indices = @transform_5, window_bounds = array<i64: 1, 32>}, {pipeline_mode = #tpu.pipeline_mode<synchronous>, transform_indices = @transform_6, window_bounds = array<i64: 1, 32>}, {pipeline_mode = #tpu.pipeline_mode<synchronous>, transform_indices = @transform_7, window_bounds = array<i64: 32, 8>}, {pipeline_mode = #tpu.pipeline_mode<synchronous>, transform_indices = @transform_8, window_bounds = array<i64: 1, 8>}, {transform_indices = @transform_9, window_bounds = array<i64: 2, 8>}]} {
    %c0_i32 = arith.constant 0 : i32
    %0 = arith.cmpi eq, %arg1, %c0_i32 : i32
    %1 = arith.extui %0 : i1 to i32
    %c0_i32_0 = arith.constant 0 : i32
    %2 = arith.cmpi ne, %1, %c0_i32_0 : i32
    scf.if %2 {
      %cst_93 = arith.constant 0.000000e+00 : f32
      %96 = vector.broadcast %cst_93 : f32 to vector<2x1x32xf32>
      %c0_94 = arith.constant 0 : index
      %c0_95 = arith.constant 0 : index
      %c0_96 = arith.constant 0 : index
      %97 = vector.load %arg12[%c0_94, %c0_95, %c0_96] : memref<2x1x32xf32, #tpu.memory_space<vmem>>, vector<2x1x32xf32>
      tpu.vector_store %arg12[%c0_94, %c0_95, %c0_96], %96 {strides = array<i32>} : memref<2x1x32xf32, #tpu.memory_space<vmem>>, vector<2x1x32xf32>,
    } else {
    }
    %c0 = arith.constant 0 : index
    %c0_1 = arith.constant 0 : index
    %c0_2 = arith.constant 0 : index
    %3 = vector.load %arg2[%c0, %c0_1, %c0_2] : memref<2x8x32xf32, #tpu.memory_space<vmem>>, vector<2x8x32xf32>
    %4 = vector.shape_cast %3 : vector<2x8x32xf32> to vector<16x32xf32>
    %c0_3 = arith.constant 0 : index
    %c0_4 = arith.constant 0 : index
    %5 = vector.load %arg5[%c0_3, %c0_4] : memref<32x32xf32, #tpu.memory_space<vmem>>, vector<32x32xf32>
    %cst = arith.constant dense<0.000000e+00> : vector<16x32xf32>
    %6 = tpu.matmul %4, %5, %cst {dimension_numbers = #tpu.dot_dimension_numbers<[1], [0], [0], [1], [0, 0, 1, 1], [], []>} : vector<16x32xf32>, vector<32x32xf32>, vector<16x32xf32> -> vector<16x32xf32>
    %c0_5 = arith.constant 0 : index
    %c0_6 = arith.constant 0 : index
    %7 = vector.load %arg3[%c0_5, %c0_6] : memref<32x2xf32, #tpu.memory_space<vmem>>, vector<32x2xf32>
    %cst_7 = arith.constant dense<0.000000e+00> : vector<16x2xf32>
    %8 = tpu.matmul %4, %7, %cst_7 {dimension_numbers = #tpu.dot_dimension_numbers<[1], [0], [0], [1], [0, 0, 1, 1], [], []>} : vector<16x32xf32>, vector<32x2xf32>, vector<16x2xf32> -> vector<16x2xf32>
    %c0_8 = arith.constant 0 : index
    %c0_9 = arith.constant 0 : index
    %9 = vector.load %arg4[%c0_8, %c0_9] : memref<1x2xf32, #tpu.memory_space<vmem>>, vector<1x2xf32>
    %10 = vector.broadcast %9 : vector<1x2xf32> to vector<16x2xf32>
    %11 = arith.addf %8, %10 : vector<16x2xf32>
    %cst_10 = arith.constant dense<0xFF800000> : vector<16xf32>
    %12 = vector.multi_reduction <maximumf>, %11, %cst_10 [1] : vector<16x2xf32> to vector<16xf32>
    %13 = vector.shape_cast %12 : vector<16xf32> to vector<16x1xf32>
    %14 = vector.broadcast %13 : vector<16x1xf32> to vector<16x2xf32>
    %15 = arith.subf %11, %14 : vector<16x2xf32>
    %16 = math.exp %15 : vector<16x2xf32>
    %cst_11 = arith.constant dense<0.000000e+00> : vector<16xf32>
    %17 = vector.multi_reduction <add>, %16, %cst_11 [1] : vector<16x2xf32> to vector<16xf32>
    %18 = vector.shape_cast %17 : vector<16xf32> to vector<16x1xf32>
    %19 = vector.broadcast %18 : vector<16x1xf32> to vector<16x2xf32>
    %20 = arith.divf %16, %19 : vector<16x2xf32>
    %c0_12 = arith.constant 0 : index
    %c0_13 = arith.constant 0 : index
    %21 = vector.load %arg6[%c0_12, %c0_13] : memref<2x1024xf32, #tpu.memory_space<vmem>>, vector<2x1024xf32>
    %cst_14 = arith.constant dense<0.000000e+00> : vector<16x1024xf32>
    %22 = tpu.matmul %20, %21, %cst_14 {dimension_numbers = #tpu.dot_dimension_numbers<[1], [0], [0], [1], [0, 0, 1, 1], [], []>} : vector<16x2xf32>, vector<2x1024xf32>, vector<16x1024xf32> -> vector<16x1024xf32>
    %23 = tpu.iota {dimensions = array<i32: 0>} : vector<1024x32xi32>
    %24 = tpu.iota {dimensions = array<i32: 1>} : vector<1024x32xi32>
    %25 = tpu.iota {dimensions = array<i32: 0>} : vector<32x1024xi32>
    %26 = tpu.iota {dimensions = array<i32: 1>} : vector<32x1024xi32>
    %c31_i32 = arith.constant 31 : i32
    %27 = vector.broadcast %c31_i32 : i32 to vector<1024x32xi32>
    %28 = arith.andi %23, %27 : vector<1024x32xi32>
    %c31_i32_15 = arith.constant 31 : i32
    %29 = vector.broadcast %c31_i32_15 : i32 to vector<32x1024xi32>
    %30 = arith.andi %26, %29 : vector<32x1024xi32>
    %31 = arith.cmpi eq, %28, %24 : vector<1024x32xi32>
    %32 = arith.extui %31 : vector<1024x32xi1> to vector<1024x32xi32>
    %33 = arith.sitofp %32 : vector<1024x32xi32> to vector<1024x32xf32>
    %34 = arith.cmpi eq, %30, %25 : vector<32x1024xi32>
    %35 = arith.extui %34 : vector<32x1024xi1> to vector<32x1024xi32>
    %36 = arith.sitofp %35 : vector<32x1024xi32> to vector<32x1024xf32>
    %37 = math.absf %22 : vector<16x1024xf32>
    %cst_16 = arith.constant 1.200000e+00 : f32
    %38 = vector.broadcast %cst_16 : f32 to vector<16x1024xf32>
    %39 = math.powf %37, %38 : vector<16x1024xf32>
    %cst_17 = arith.constant dense<0.000000e+00> : vector<16x32xf32>
    %40 = tpu.matmul %39, %33, %cst_17 {dimension_numbers = #tpu.dot_dimension_numbers<[1], [0], [0], [1], [0, 0, 1, 1], [], []>} : vector<16x1024xf32>, vector<1024x32xf32>, vector<16x32xf32> -> vector<16x32xf32>
    %cst_18 = arith.constant 0.833333313 : f32
    %41 = vector.broadcast %cst_18 : f32 to vector<16x32xf32>
    %42 = math.powf %40, %41 : vector<16x32xf32>
    %cst_19 = arith.constant 1.000000e+00 : f32
    %43 = vector.broadcast %cst_19 : f32 to vector<16x32xf32>
    %44 = arith.divf %43, %42 : vector<16x32xf32>
    %cst_20 = arith.constant dense<0.000000e+00> : vector<16x1024xf32>
    %45 = tpu.matmul %44, %36, %cst_20 {dimension_numbers = #tpu.dot_dimension_numbers<[1], [0], [0], [1], [0, 0, 1, 1], [], []>} : vector<16x32xf32>, vector<32x1024xf32>, vector<16x1024xf32> -> vector<16x1024xf32>
    %46 = arith.mulf %22, %45 : vector<16x1024xf32>
    %47 = vector.shape_cast %46 : vector<16x1024xf32> to vector<2x8x32x32xf32>
    %c0_21 = arith.constant 0 : index
    %c0_22 = arith.constant 0 : index
    %c0_23 = arith.constant 0 : index
    %c0_24 = arith.constant 0 : index
    %48 = vector.load %arg13[%c0_21, %c0_22, %c0_23, %c0_24] : memref<2x8x32x32xf32, #tpu.memory_space<vmem>>, vector<2x8x32x32xf32>
    tpu.vector_store %arg13[%c0_21, %c0_22, %c0_23, %c0_24], %47 {strides = array<i32>} : memref<2x8x32x32xf32, #tpu.memory_space<vmem>>, vector<2x8x32x32xf32>,
    %49 = vector.shape_cast %6 : vector<16x32xf32> to vector<2x8x32xf32>
    %c0_25 = arith.constant 0 : index
    %c0_26 = arith.constant 0 : index
    %c0_27 = arith.constant 0 : index
    %50 = vector.load %arg14[%c0_25, %c0_26, %c0_27] : memref<2x8x32xf32, #tpu.memory_space<vmem>>, vector<2x8x32xf32>
    tpu.vector_store %arg14[%c0_25, %c0_26, %c0_27], %49 {strides = array<i32>} : memref<2x8x32xf32, #tpu.memory_space<vmem>>, vector<2x8x32xf32>,
    %c0_28 = arith.constant 0 : index
    %c0_29 = arith.constant 0 : index
    %c0_30 = arith.constant 0 : index
    %51 = vector.load %arg12[%c0_28, %c0_29, %c0_30] : memref<2x1x32xf32, #tpu.memory_space<vmem>>, vector<2x1x32xf32>
    %c0_31 = arith.constant 0 : index
    %c0_32 = arith.constant 0 : index
    %c0_33 = arith.constant 0 : index
    %c0_34 = arith.constant 0 : index
    %52 = vector.load %arg13[%c0_31, %c0_32, %c0_33, %c0_34] : memref<2x8x32x32xf32, #tpu.memory_space<vmem>>, vector<2x1x32x32xf32>
    %53 = vector.shape_cast %52 : vector<2x1x32x32xf32> to vector<2x32x32xf32>
    %c0_35 = arith.constant 0 : index
    %c0_36 = arith.constant 0 : index
    %c0_37 = arith.constant 0 : index
    %54 = vector.load %arg14[%c0_35, %c0_36, %c0_37] : memref<2x8x32xf32, #tpu.memory_space<vmem>>, vector<2x1x32xf32>
    "tpu.trace_start"() <{level = 10 : i32, message = "bom,bnm->bon"}> : () -> ()
    %cst_38 = arith.constant dense<0.000000e+00> : vector<2x1x32xf32>
    %55 = tpu.matmul %51, %53, %cst_38 {dimension_numbers = #tpu.dot_dimension_numbers<[2], [2], [1], [1], [0, 0, 0, 1, 1, 1], [0], [0]>} : vector<2x1x32xf32>, vector<2x32x32xf32>, vector<2x1x32xf32> -> vector<2x1x32xf32>
    "tpu.trace_stop"() : () -> ()
    %56 = arith.addf %55, %54 : vector<2x1x32xf32>
    %c0_39 = arith.constant 0 : index
    %c1 = arith.constant 1 : index
    %c0_40 = arith.constant 0 : index
    %c0_41 = arith.constant 0 : index
    %57 = vector.load %arg13[%c0_39, %c1, %c0_40, %c0_41] : memref<2x8x32x32xf32, #tpu.memory_space<vmem>>, vector<2x1x32x32xf32>
    %58 = vector.shape_cast %57 : vector<2x1x32x32xf32> to vector<2x32x32xf32>
    %c0_42 = arith.constant 0 : index
    %c1_43 = arith.constant 1 : index
    %c0_44 = arith.constant 0 : index
    %59 = vector.load %arg14[%c0_42, %c1_43, %c0_44] : memref<2x8x32xf32, #tpu.memory_space<vmem>>, vector<2x1x32xf32>
    "tpu.trace_start"() <{level = 10 : i32, message = "bom,bnm->bon"}> : () -> ()
    %cst_45 = arith.constant dense<0.000000e+00> : vector<2x1x32xf32>
    %60 = tpu.matmul %56, %58, %cst_45 {dimension_numbers = #tpu.dot_dimension_numbers<[2], [2], [1], [1], [0, 0, 0, 1, 1, 1], [0], [0]>} : vector<2x1x32xf32>, vector<2x32x32xf32>, vector<2x1x32xf32> -> vector<2x1x32xf32>
    "tpu.trace_stop"() : () -> ()
    %61 = arith.addf %60, %59 : vector<2x1x32xf32>
    %c0_46 = arith.constant 0 : index
    %c2 = arith.constant 2 : index
    %c0_47 = arith.constant 0 : index
    %c0_48 = arith.constant 0 : index
    %62 = vector.load %arg13[%c0_46, %c2, %c0_47, %c0_48] : memref<2x8x32x32xf32, #tpu.memory_space<vmem>>, vector<2x1x32x32xf32>
    %63 = vector.shape_cast %62 : vector<2x1x32x32xf32> to vector<2x32x32xf32>
    %c0_49 = arith.constant 0 : index
    %c2_50 = arith.constant 2 : index
    %c0_51 = arith.constant 0 : index
    %64 = vector.load %arg14[%c0_49, %c2_50, %c0_51] : memref<2x8x32xf32, #tpu.memory_space<vmem>>, vector<2x1x32xf32>
    "tpu.trace_start"() <{level = 10 : i32, message = "bom,bnm->bon"}> : () -> ()
    %cst_52 = arith.constant dense<0.000000e+00> : vector<2x1x32xf32>
    %65 = tpu.matmul %61, %63, %cst_52 {dimension_numbers = #tpu.dot_dimension_numbers<[2], [2], [1], [1], [0, 0, 0, 1, 1, 1], [0], [0]>} : vector<2x1x32xf32>, vector<2x32x32xf32>, vector<2x1x32xf32> -> vector<2x1x32xf32>
    "tpu.trace_stop"() : () -> ()
    %66 = arith.addf %65, %64 : vector<2x1x32xf32>
    %c0_53 = arith.constant 0 : index
    %c3 = arith.constant 3 : index
    %c0_54 = arith.constant 0 : index
    %c0_55 = arith.constant 0 : index
    %67 = vector.load %arg13[%c0_53, %c3, %c0_54, %c0_55] : memref<2x8x32x32xf32, #tpu.memory_space<vmem>>, vector<2x1x32x32xf32>
    %68 = vector.shape_cast %67 : vector<2x1x32x32xf32> to vector<2x32x32xf32>
    %c0_56 = arith.constant 0 : index
    %c3_57 = arith.constant 3 : index
    %c0_58 = arith.constant 0 : index
    %69 = vector.load %arg14[%c0_56, %c3_57, %c0_58] : memref<2x8x32xf32, #tpu.memory_space<vmem>>, vector<2x1x32xf32>
    "tpu.trace_start"() <{level = 10 : i32, message = "bom,bnm->bon"}> : () -> ()
    %cst_59 = arith.constant dense<0.000000e+00> : vector<2x1x32xf32>
    %70 = tpu.matmul %66, %68, %cst_59 {dimension_numbers = #tpu.dot_dimension_numbers<[2], [2], [1], [1], [0, 0, 0, 1, 1, 1], [0], [0]>} : vector<2x1x32xf32>, vector<2x32x32xf32>, vector<2x1x32xf32> -> vector<2x1x32xf32>
    "tpu.trace_stop"() : () -> ()
    %71 = arith.addf %70, %69 : vector<2x1x32xf32>
    %c0_60 = arith.constant 0 : index
    %c4 = arith.constant 4 : index
    %c0_61 = arith.constant 0 : index
    %c0_62 = arith.constant 0 : index
    %72 = vector.load %arg13[%c0_60, %c4, %c0_61, %c0_62] : memref<2x8x32x32xf32, #tpu.memory_space<vmem>>, vector<2x1x32x32xf32>
    %73 = vector.shape_cast %72 : vector<2x1x32x32xf32> to vector<2x32x32xf32>
    %c0_63 = arith.constant 0 : index
    %c4_64 = arith.constant 4 : index
    %c0_65 = arith.constant 0 : index
    %74 = vector.load %arg14[%c0_63, %c4_64, %c0_65] : memref<2x8x32xf32, #tpu.memory_space<vmem>>, vector<2x1x32xf32>
    "tpu.trace_start"() <{level = 10 : i32, message = "bom,bnm->bon"}> : () -> ()
    %cst_66 = arith.constant dense<0.000000e+00> : vector<2x1x32xf32>
    %75 = tpu.matmul %71, %73, %cst_66 {dimension_numbers = #tpu.dot_dimension_numbers<[2], [2], [1], [1], [0, 0, 0, 1, 1, 1], [0], [0]>} : vector<2x1x32xf32>, vector<2x32x32xf32>, vector<2x1x32xf32> -> vector<2x1x32xf32>
    "tpu.trace_stop"() : () -> ()
    %76 = arith.addf %75, %74 : vector<2x1x32xf32>
    %c0_67 = arith.constant 0 : index
    %c5 = arith.constant 5 : index
    %c0_68 = arith.constant 0 : index
    %c0_69 = arith.constant 0 : index
    %77 = vector.load %arg13[%c0_67, %c5, %c0_68, %c0_69] : memref<2x8x32x32xf32, #tpu.memory_space<vmem>>, vector<2x1x32x32xf32>
    %78 = vector.shape_cast %77 : vector<2x1x32x32xf32> to vector<2x32x32xf32>
    %c0_70 = arith.constant 0 : index
    %c5_71 = arith.constant 5 : index
    %c0_72 = arith.constant 0 : index
    %79 = vector.load %arg14[%c0_70, %c5_71, %c0_72] : memref<2x8x32xf32, #tpu.memory_space<vmem>>, vector<2x1x32xf32>
    "tpu.trace_start"() <{level = 10 : i32, message = "bom,bnm->bon"}> : () -> ()
    %cst_73 = arith.constant dense<0.000000e+00> : vector<2x1x32xf32>
    %80 = tpu.matmul %76, %78, %cst_73 {dimension_numbers = #tpu.dot_dimension_numbers<[2], [2], [1], [1], [0, 0, 0, 1, 1, 1], [0], [0]>} : vector<2x1x32xf32>, vector<2x32x32xf32>, vector<2x1x32xf32> -> vector<2x1x32xf32>
    "tpu.trace_stop"() : () -> ()
    %81 = arith.addf %80, %79 : vector<2x1x32xf32>
    %c0_74 = arith.constant 0 : index
    %c6 = arith.constant 6 : index
    %c0_75 = arith.constant 0 : index
    %c0_76 = arith.constant 0 : index
    %82 = vector.load %arg13[%c0_74, %c6, %c0_75, %c0_76] : memref<2x8x32x32xf32, #tpu.memory_space<vmem>>, vector<2x1x32x32xf32>
    %83 = vector.shape_cast %82 : vector<2x1x32x32xf32> to vector<2x32x32xf32>
    %c0_77 = arith.constant 0 : index
    %c6_78 = arith.constant 6 : index
    %c0_79 = arith.constant 0 : index
    %84 = vector.load %arg14[%c0_77, %c6_78, %c0_79] : memref<2x8x32xf32, #tpu.memory_space<vmem>>, vector<2x1x32xf32>
    "tpu.trace_start"() <{level = 10 : i32, message = "bom,bnm->bon"}> : () -> ()
    %cst_80 = arith.constant dense<0.000000e+00> : vector<2x1x32xf32>
    %85 = tpu.matmul %81, %83, %cst_80 {dimension_numbers = #tpu.dot_dimension_numbers<[2], [2], [1], [1], [0, 0, 0, 1, 1, 1], [0], [0]>} : vector<2x1x32xf32>, vector<2x32x32xf32>, vector<2x1x32xf32> -> vector<2x1x32xf32>
    "tpu.trace_stop"() : () -> ()
    %86 = arith.addf %85, %84 : vector<2x1x32xf32>
    %c0_81 = arith.constant 0 : index
    %c7 = arith.constant 7 : index
    %c0_82 = arith.constant 0 : index
    %c0_83 = arith.constant 0 : index
    %87 = vector.load %arg13[%c0_81, %c7, %c0_82, %c0_83] : memref<2x8x32x32xf32, #tpu.memory_space<vmem>>, vector<2x1x32x32xf32>
    %88 = vector.shape_cast %87 : vector<2x1x32x32xf32> to vector<2x32x32xf32>
    %c0_84 = arith.constant 0 : index
    %c7_85 = arith.constant 7 : index
    %c0_86 = arith.constant 0 : index
    %89 = vector.load %arg14[%c0_84, %c7_85, %c0_86] : memref<2x8x32xf32, #tpu.memory_space<vmem>>, vector<2x1x32xf32>
    "tpu.trace_start"() <{level = 10 : i32, message = "bom,bnm->bon"}> : () -> ()
    %cst_87 = arith.constant dense<0.000000e+00> : vector<2x1x32xf32>
    %90 = tpu.matmul %86, %88, %cst_87 {dimension_numbers = #tpu.dot_dimension_numbers<[2], [2], [1], [1], [0, 0, 0, 1, 1, 1], [0], [0]>} : vector<2x1x32xf32>, vector<2x32x32xf32>, vector<2x1x32xf32> -> vector<2x1x32xf32>
    "tpu.trace_stop"() : () -> ()
    %91 = arith.addf %90, %89 : vector<2x1x32xf32>
    %c0_88 = arith.constant 0 : index
    %c0_89 = arith.constant 0 : index
    %c0_90 = arith.constant 0 : index
    %92 = vector.load %arg12[%c0_88, %c0_89, %c0_90] : memref<2x1x32xf32, #tpu.memory_space<vmem>>, vector<2x1x32xf32>
    tpu.vector_store %arg12[%c0_88, %c0_89, %c0_90], %91 {strides = array<i32>} : memref<2x1x32xf32, #tpu.memory_space<vmem>>, vector<2x1x32xf32>,
    %c0_i32_91 = arith.constant 0 : i32
    %93 = arith.cmpi eq, %arg1, %c0_i32_91 : i32
    %94 = arith.extui %93 : i1 to i32
    %c0_i32_92 = arith.constant 0 : i32
    %95 = arith.cmpi ne, %94, %c0_i32_92 : i32
    scf.if %95 {
      %96 = vector.shape_cast %91 : vector<2x1x32xf32> to vector<2x32xf32>
      %cst_93 = arith.constant dense<0.000000e+00> : vector<2xf32>
      %97 = vector.multi_reduction <add>, %96, %cst_93 [1] : vector<2x32xf32> to vector<2xf32>
      %98 = vector.shape_cast %97 : vector<2xf32> to vector<2x1xf32>
      %cst_94 = arith.constant 3.200000e+01 : f32
      %99 = vector.broadcast %cst_94 : f32 to vector<2x1xf32>
      %100 = arith.divf %98, %99 : vector<2x1xf32>
      %101 = vector.broadcast %100 : vector<2x1xf32> to vector<2x32xf32>
      %102 = arith.subf %96, %101 : vector<2x32xf32>
      %103 = arith.mulf %102, %102 : vector<2x32xf32>
      %cst_95 = arith.constant dense<0.000000e+00> : vector<2xf32>
      %104 = vector.multi_reduction <add>, %103, %cst_95 [1] : vector<2x32xf32> to vector<2xf32>
      %105 = vector.shape_cast %104 : vector<2xf32> to vector<2x1xf32>
      %cst_96 = arith.constant 3.200000e+01 : f32
      %106 = vector.broadcast %cst_96 : f32 to vector<2x1xf32>
      %107 = arith.divf %105, %106 : vector<2x1xf32>
      %108 = vector.broadcast %100 : vector<2x1xf32> to vector<2x32xf32>
      %109 = arith.subf %96, %108 : vector<2x32xf32>
      %cst_97 = arith.constant 9.99999974E-6 : f32
      %110 = vector.broadcast %cst_97 : f32 to vector<2x1xf32>
      %111 = arith.addf %107, %110 : vector<2x1xf32>
      %112 = math.rsqrt %111 : vector<2x1xf32>
      %113 = vector.broadcast %112 : vector<2x1xf32> to vector<2x32xf32>
      %114 = arith.mulf %109, %113 : vector<2x32xf32>
      %c0_98 = arith.constant 0 : index
      %c0_99 = arith.constant 0 : index
      %115 = vector.load %arg7[%c0_98, %c0_99] : memref<1x32xf32, #tpu.memory_space<vmem>>, vector<1x32xf32>
      %116 = vector.broadcast %115 : vector<1x32xf32> to vector<2x32xf32>
      %117 = arith.mulf %114, %116 : vector<2x32xf32>
      %c0_100 = arith.constant 0 : index
      %c0_101 = arith.constant 0 : index
      %118 = vector.load %arg8[%c0_100, %c0_101] : memref<1x32xf32, #tpu.memory_space<vmem>>, vector<1x32xf32>
      %119 = vector.broadcast %118 : vector<1x32xf32> to vector<2x32xf32>
      %120 = arith.addf %117, %119 : vector<2x32xf32>
      %c0_102 = arith.constant 0 : index
      %c0_103 = arith.constant 0 : index
      %121 = vector.load %arg9[%c0_102, %c0_103] : memref<32x8xf32, #tpu.memory_space<vmem>>, vector<32x8xf32>
      %cst_104 = arith.constant dense<0.000000e+00> : vector<2x8xf32>
      %122 = tpu.matmul %120, %121, %cst_104 {dimension_numbers = #tpu.dot_dimension_numbers<[1], [0], [0], [1], [0, 0, 1, 1], [], []>} : vector<2x32xf32>, vector<32x8xf32>, vector<2x8xf32> -> vector<2x8xf32>
      %c0_105 = arith.constant 0 : index
      %c0_106 = arith.constant 0 : index
      %123 = vector.load %arg10[%c0_105, %c0_106] : memref<1x8xf32, #tpu.memory_space<vmem>>, vector<1x8xf32>
      %124 = vector.broadcast %123 : vector<1x8xf32> to vector<2x8xf32>
      %125 = arith.addf %122, %124 : vector<2x8xf32>
      %c0_107 = arith.constant 0 : index
      %c0_108 = arith.constant 0 : index
      %126 = vector.load %arg11[%c0_107, %c0_108] : memref<2x8xf32, #tpu.memory_space<vmem>>, vector<2x8xf32>
      tpu.vector_store %arg11[%c0_107, %c0_108], %125 {strides = array<i32>} : memref<2x8xf32, #tpu.memory_space<vmem>>, vector<2x8xf32>,
    } else {
    }
    return
  }
  func.func @transform_0(%arg0: i32, %arg1: i32) -> (i32, i32, i32) {
    %c0_i32 = arith.constant 0 : i32
    %c0_i32_0 = arith.constant 0 : i32
    return %arg0, %arg1, %c0_i32 : i32, i32, i32
  }
  func.func @transform_1(%arg0: i32, %arg1: i32) -> (i32, i32) {
    %c0_i32 = arith.constant 0 : i32
    %c0_i32_0 = arith.constant 0 : i32
    %c0_i32_1 = arith.constant 0 : i32
    return %c0_i32, %c0_i32_0 : i32, i32
  }
  func.func @transform_2(%arg0: i32, %arg1: i32) -> (i32, i32) {
    %c0_i32 = arith.constant 0 : i32
    %c0_i32_0 = arith.constant 0 : i32
    %c0_i32_1 = arith.constant 0 : i32
    return %c0_i32, %c0_i32_0 : i32, i32
  }
  func.func @transform_3(%arg0: i32, %arg1: i32) -> (i32, i32) {
    %c0_i32 = arith.constant 0 : i32
    %c0_i32_0 = arith.constant 0 : i32
    %c0_i32_1 = arith.constant 0 : i32
    return %c0_i32, %c0_i32_0 : i32, i32
  }
  func.func @transform_4(%arg0: i32, %arg1: i32) -> (i32, i32) {
    %c0_i32 = arith.constant 0 : i32
    %c0_i32_0 = arith.constant 0 : i32
    %c0_i32_1 = arith.constant 0 : i32
    return %c0_i32, %c0_i32_0 : i32, i32
  }
  func.func @transform_5(%arg0: i32, %arg1: i32) -> (i32, i32) {
    %c0_i32 = arith.constant 0 : i32
    %c0_i32_0 = arith.constant 0 : i32
    %c0_i32_1 = arith.constant 0 : i32
    return %c0_i32, %c0_i32_0 : i32, i32
  }
  func.func @transform_6(%arg0: i32, %arg1: i32) -> (i32, i32) {
    %c0_i32 = arith.constant 0 : i32
    %c0_i32_0 = arith.constant 0 : i32
    %c0_i32_1 = arith.constant 0 : i32
    return %c0_i32, %c0_i32_0 : i32, i32
  }
  func.func @transform_7(%arg0: i32, %arg1: i32) -> (i32, i32) {
    %c0_i32 = arith.constant 0 : i32
    %c0_i32_0 = arith.constant 0 : i32
    %c0_i32_1 = arith.constant 0 : i32
    return %c0_i32, %c0_i32_0 : i32, i32
  }
  func.func @transform_8(%arg0: i32, %arg1: i32) -> (i32, i32) {
    %c0_i32 = arith.constant 0 : i32
    %c0_i32_0 = arith.constant 0 : i32
    %c0_i32_1 = arith.constant 0 : i32
    return %c0_i32, %c0_i32_0 : i32, i32
  }
  func.func @transform_9(%arg0: i32, %arg1: i32) -> (i32, i32) {
    %c0_i32 = arith.constant 0 : i32
    %c0_i32_0 = arith.constant 0 : i32
    return %arg0, %c0_i32 : i32, i32
  }
}

</mosaic_0001>

<llo_original>
// kernel: tpu_custom_call.1
$region0: #{tpu_custom_call.1}
  #allocation0 [shape = 'u32[]', space=smem, size = 0x4, offset = 0x4, fixed_abs, tag = 'smem constant byte address 0x4 - core index']
  #allocation1 [shape = 'u32[144,128]{1,0:T(1,128)}', space=vmem, size = 0x12000, scoped, tag = 'internal scratch']
  #allocation2 [shape = 'f32[2,1,32]{2,1,0:T(1,128)}', space=vmem, size = 0x400, scoped, tag = 'scratch operand']
  #allocation3 [shape = 'f32[2,8,32,32]{3,2,1,0:T(8,128)}', space=vmem, size = 0x40000, scoped, tag = 'scratch operand']
  #allocation4 [shape = 'f32[2,8,32]{2,1,0:T(8,128)}', space=vmem, size = 0x2000, scoped, tag = 'scratch operand']
  %s0 = inlined_call_operand.vmem [shape: f32[2,8,32], index: 0, kind: input, shape index: {}]
  %s1 = inlined_call_operand.vmem [shape: f32[32,2], index: 1, kind: input, shape index: {}]
  %s2 = inlined_call_operand.vmem [shape: f32[1,2], index: 2, kind: input, shape index: {}]
  %s3 = inlined_call_operand.vmem [shape: f32[32,32], index: 3, kind: input, shape index: {}]
  %s4 = inlined_call_operand.vmem [shape: f32[2,1024], index: 4, kind: input, shape index: {}]
  %s5 = inlined_call_operand.vmem [shape: f32[1,32], index: 5, kind: input, shape index: {}]
  %s6 = inlined_call_operand.vmem [shape: f32[1,32], index: 6, kind: input, shape index: {}]
  %s7 = inlined_call_operand.vmem [shape: f32[32,8], index: 7, kind: input, shape index: {}]
  %s8 = inlined_call_operand.vmem [shape: f32[1,8], index: 8, kind: input, shape index: {}]
  %s9 = inlined_call_operand.hbm [shape: f32[2,8], index: 9, kind: output, shape index: {}]
  %s10 = sld [smem:[#allocation0]]
  $region54: #{tpu_custom_call.1} parent=0
    _
  %s12 = ssub.s32 1, %s10
  %s13 = scalar_select 0, %s12, %s10
  $region1: #{tpu_custom_call.1} parent=0
    #allocation5 [shape = 'u8[1024]{0}', space=vmem, size = 0x400, scoped, tag = 'output window, operand 0, single buffered']
    #allocation6 [shape = 's32[1]{0}', space=sflag, size = 0x4, scoped, tag = 'scoped memory for tpu_custom_call.1']
    %14 = vsyncpa [#allocation6], 0
    // Predicated region
    $region2: #{tpu_custom_call.1} parent=1 // pred_check
      _
    $region3: #{tpu_custom_call.1} parent=1 // pred_check_branch
      %16 = sbr.rel (0) target = $region5
    $region4: #{tpu_custom_call.1} parent=1 // pred_region
      _
    $region5: #{tpu_custom_call.1} parent=1 // pred_fallthru
      _
    // Predicated region
    $region6: #{tpu_custom_call.1} parent=1 // pred_check
      _
    $region7: #{tpu_custom_call.1} parent=1 // pred_check_branch
      %18 = sbr.rel (0) target = $region9
    $region8: #{tpu_custom_call.1} parent=1 // pred_region
      _
    $region9: #{tpu_custom_call.1} parent=1 // pred_fallthru
      _
    // Predicated region
    $region10: #{tpu_custom_call.1} parent=1 // pred_check
      _
    $region11: #{tpu_custom_call.1} parent=1 // pred_check_branch
      %20 = sbr.rel (0) target = $region13
    $region12: #{tpu_custom_call.1} parent=1 // pred_region
      _
    $region13: #{tpu_custom_call.1} parent=1 // pred_fallthru
      _
    // Predicated region
    $region14: #{tpu_custom_call.1} parent=1 // pred_check
      _
    $region15: #{tpu_custom_call.1} parent=1 // pred_check_branch
      %22 = sbr.rel (0) target = $region17
    $region16: #{tpu_custom_call.1} parent=1 // pred_region
      _
    $region17: #{tpu_custom_call.1} parent=1 // pred_fallthru
      _
    // Predicated region
    $region18: #{tpu_custom_call.1} parent=1 // pred_check
      _
    $region19: #{tpu_custom_call.1} parent=1 // pred_check_branch
      %24 = sbr.rel (0) target = $region21
    $region20: #{tpu_custom_call.1} parent=1 // pred_region
      _
    $region21: #{tpu_custom_call.1} parent=1 // pred_fallthru
      _
    // Predicated region
    $region22: #{tpu_custom_call.1} parent=1 // pred_check
      _
    $region23: #{tpu_custom_call.1} parent=1 // pred_check_branch
      %26 = sbr.rel (0) target = $region25
    $region24: #{tpu_custom_call.1} parent=1 // pred_region
      _
    $region25: #{tpu_custom_call.1} parent=1 // pred_fallthru
      _
    // Predicated region
    $region26: #{tpu_custom_call.1} parent=1 // pred_check
      _
    $region27: #{tpu_custom_call.1} parent=1 // pred_check_branch
      %28 = sbr.rel (0) target = $region29
    $region28: #{tpu_custom_call.1} parent=1 // pred_region
      _
    $region29: #{tpu_custom_call.1} parent=1 // pred_fallthru
      _
    // Predicated region
    $region30: #{tpu_custom_call.1} parent=1 // pred_check
      _
    $region31: #{tpu_custom_call.1} parent=1 // pred_check_branch
      %30 = sbr.rel (0) target = $region33
    $region32: #{tpu_custom_call.1} parent=1 // pred_region
      _
    $region33: #{tpu_custom_call.1} parent=1 // pred_fallthru
      _
    // Predicated region
    $region34: #{tpu_custom_call.1} parent=1 // pred_check
      _
    $region35: #{tpu_custom_call.1} parent=1 // pred_check_branch
      %32 = sbr.rel (0) target = $region37
    $region36: #{tpu_custom_call.1} parent=1 // pred_region
      _
    $region37: #{tpu_custom_call.1} parent=1 // pred_fallthru
      _
    %p33 = scmp.eq.s32.totalorder 0, 0
    // Predicated region
    $region38: #{tpu_custom_call.1} parent=1 // pred_check
      %p34 = pneg %p33
    $region39: #{tpu_custom_call.1} parent=1 // pred_check_branch
      %36 = sbr.rel (%p34) target = $region41
    $region40: #{tpu_custom_call.1} parent=1 // pred_region
      %vm37 = vcmask 253952
      %38 = vst.msk [vmem:[#allocation2] sm:$0x1] %vm37, 0.0
      %39 = vst.msk [vmem:[#allocation2 + $0x1] sm:$0x1] %vm37, 0.0
    $region41: #{tpu_custom_call.1} parent=1 // pred_fallthru
      _
    %v40 = vld [vmem:[%s0] sm:$0xff]
    %v41 = vld [vmem:[%s0 + $0x8] sm:$0xff]
    %v42 = vld [vmem:[%s3] sm:$0xff]
    %v43 = vld [vmem:[%s3 + $0x8] sm:$0xff]
    %v44 = vld [vmem:[%s3 + $0x10] sm:$0xff]
    %v45 = vld [vmem:[%s3 + $0x18] sm:$0xff]
    %vm46 = vcmask 261120
    %v48 = vsel %vm46, %v40, 0
    %v51 = vsel %vm46, %v41, 0
    %53 = vmatprep.subr.mxu0 0.0
    %54 = vmatpush1.msra.mxu0 %v42
    %55 = vmatprep.subr.mxu0 0.0
    %56 = vmatpush1.msra.mxu0 %v43
    %57 = vmatprep.subr.mxu0 0.0
    %58 = vmatpush1.msra.mxu0 %v44
    %59 = vmatprep.subr.mxu0 0.0
    %60 = vmatpush1.msra.mxu0 %v45
    %61 = vmatprep.subr.mxu0 0.0
    %62 = vmatpush1.msra.mxu0 0.0
    %63 = vmatprep.subr.mxu0 0.0
    %64 = vmatpush1.msra.mxu0 0.0
    %65 = vmatprep.subr.mxu0 0.0
    %66 = vmatpush1.msra.mxu0 0.0
    %67 = vmatprep.subr.mxu0 0.0
    %68 = vmatpush1.msra.mxu0 0.0
    %69 = vmatprep.subr.mxu0 0.0
    %70 = vmatpush1.msra.mxu0 0.0
    %71 = vmatprep.subr.mxu0 0.0
    %72 = vmatpush1.msra.mxu0 0.0
    %73 = vmatprep.subr.mxu0 0.0
    %74 = vmatpush1.msra.mxu0 0.0
    %75 = vmatprep.subr.mxu0 0.0
    %76 = vmatpush1.msra.mxu0 0.0
    %77 = vmatprep.subr.mxu0 0.0
    %78 = vmatpush1.msra.mxu0 0.0
    %79 = vmatprep.subr.mxu0 0.0
    %80 = vmatpush1.msra.mxu0 0.0
    %81 = vmatprep.subr.mxu0 0.0
    %82 = vmatpush1.msra.mxu0 0.0
    %83 = vmatprep.subr.mxu0 0.0
    %84 = vmatpush1.msra.mxu0 0.0
    %85 = vmatprep.subr.mxu0 0.0
    %86 = vmatpush1.msra.mxu0 0.0
    %87 = vmatprep.subr.mxu0 0.0
    %88 = vmatpush1.msra.mxu0 0.0
    %89 = vmatprep.subr.mxu0 0.0
    %90 = vmatpush1.msra.mxu0 0.0
    %91 = vmatprep.subr.mxu0 0.0
    %92 = vmatpush1.msra.mxu0 0.0
    %93 = vmatprep.subr.mxu0 0.0
    %94 = vmatpush1.msra.mxu0 0.0
    %95 = vmatprep.subr.mxu0 0.0
    %96 = vmatpush1.msra.mxu0 0.0
    %97 = vmatprep.subr.mxu0 0.0
    %98 = vmatpush1.msra.mxu0 0.0
    %99 = vmatprep.subr.mxu0 0.0
    %100 = vmatpush1.msra.mxu0 0.0
    %101 = vmatprep.subr.mxu0 0.0
    %102 = vmatpush1.msra.mxu0 0.0
    %103 = vmatprep.subr.mxu0 0.0
    %104 = vmatpush1.msra.mxu0 0.0
    %105 = vmatprep.subr.mxu0 0.0
    %106 = vmatpush1.msra.mxu0 0.0
    %107 = vmatprep.subr.mxu0 0.0
    %108 = vmatpush1.msra.mxu0 0.0
    %109 = vmatprep.subr.mxu0 0.0
    %110 = vmatpush1.msra.mxu0 0.0
    %111 = vmatprep.subr.mxu0 0.0
    %112 = vmatpush1.msra.mxu0 0.0
    %113 = vmatprep.subr.mxu0 0.0
    %114 = vmatpush1.msra.mxu0 0.0
    %115 = vmatprep.subr.mxu0 0.0
    %116 = vmatpush1.msra.mxu0 0.0
    %117 = vmatprep.mubr.f32.mxu0 0.0
    %118 = vmatmul.mubr.f32.gmra.mrb[0].mxu0 %v48
    %v119 = vpop.f32.mrb[0].mxu0
    %v120 = vadd.f32 0.0, %v119
    %v121 = vpop.f32.mrb[0].mxu0
    %122 = vmatprep.mubr.f32.mxu0 0.0
    %123 = vmatmul.mubr.f32.gmra.mrb[0].mxu0 %v51
    %v124 = vpop.f32.mrb[0].mxu0
    %v125 = vadd.f32 0.0, %v124
    %v126 = vpop.f32.mrb[0].mxu0
    %127 = vdwg.mxu0
    %v128 = vld [vmem:[%s1] sm:$0xff]
    %v129 = vld [vmem:[%s1 + $0x8] sm:$0xff]
    %v130 = vld [vmem:[%s1 + $0x10] sm:$0xff]
    %v131 = vld [vmem:[%s1 + $0x18] sm:$0xff]
    %v132 = vld [vmem:[%s2] sm:$0x1]
    %v134 = vlaneseq
    %v135 = vshrl.u32 %v134, 7
    %v136 = vsub.s32 0, %v135
    %v137 = vrot.slane %v132, %v136
    %139 = vmatprep.subr.mxu0 0.0
    %140 = vmatpush1.msra.mxu0 %v128
    %141 = vmatprep.subr.mxu0 0.0
    %142 = vmatpush1.msra.mxu0 %v129
    %143 = vmatprep.subr.mxu0 0.0
    %144 = vmatpush1.msra.mxu0 %v130
    %145 = vmatprep.subr.mxu0 0.0
    %146 = vmatpush1.msra.mxu0 %v131
    %147 = vmatprep.subr.mxu0 0.0
    %148 = vmatpush1.msra.mxu0 0.0
    %149 = vmatprep.subr.mxu0 0.0
    %150 = vmatpush1.msra.mxu0 0.0
    %151 = vmatprep.subr.mxu0 0.0
    %152 = vmatpush1.msra.mxu0 0.0
    %153 = vmatprep.subr.mxu0 0.0
    %154 = vmatpush1.msra.mxu0 0.0
    %155 = vmatprep.subr.mxu0 0.0
    %156 = vmatpush1.msra.mxu0 0.0
    %157 = vmatprep.subr.mxu0 0.0
    %158 = vmatpush1.msra.mxu0 0.0
    %159 = vmatprep.subr.mxu0 0.0
    %160 = vmatpush1.msra.mxu0 0.0
    %161 = vmatprep.subr.mxu0 0.0
    %162 = vmatpush1.msra.mxu0 0.0
    %163 = vmatprep.subr.mxu0 0.0
    %164 = vmatpush1.msra.mxu0 0.0
    %165 = vmatprep.subr.mxu0 0.0
    %166 = vmatpush1.msra.mxu0 0.0
    %167 = vmatprep.subr.mxu0 0.0
    %168 = vmatpush1.msra.mxu0 0.0
    %169 = vmatprep.subr.mxu0 0.0
    %170 = vmatpush1.msra.mxu0 0.0
    %171 = vmatprep.subr.mxu0 0.0
    %172 = vmatpush1.msra.mxu0 0.0
    %173 = vmatprep.subr.mxu0 0.0
    %174 = vmatpush1.msra.mxu0 0.0
    %175 = vmatprep.subr.mxu0 0.0
    %176 = vmatpush1.msra.mxu0 0.0
    %177 = vmatprep.subr.mxu0 0.0
    %178 = vmatpush1.msra.mxu0 0.0
    %179 = vmatprep.subr.mxu0 0.0
    %180 = vmatpush1.msra.mxu0 0.0
    %181 = vmatprep.subr.mxu0 0.0
    %182 = vmatpush1.msra.mxu0 0.0
    %183 = vmatprep.subr.mxu0 0.0
    %184 = vmatpush1.msra.mxu0 0.0
    %185 = vmatprep.subr.mxu0 0.0
    %186 = vmatpush1.msra.mxu0 0.0
    %187 = vmatprep.subr.mxu0 0.0
    %188 = vmatpush1.msra.mxu0 0.0
    %189 = vmatprep.subr.mxu0 0.0
    %190 = vmatpush1.msra.mxu0 0.0
    %191 = vmatprep.subr.mxu0 0.0
    %192 = vmatpush1.msra.mxu0 0.0
    %193 = vmatprep.subr.mxu0 0.0
    %194 = vmatpush1.msra.mxu0 0.0
    %195 = vmatprep.subr.mxu0 0.0
    %196 = vmatpush1.msra.mxu0 0.0
    %197 = vmatprep.subr.mxu0 0.0
    %198 = vmatpush1.msra.mxu0 0.0
    %199 = vmatprep.subr.mxu0 0.0
    %200 = vmatpush1.msra.mxu0 0.0
    %201 = vmatprep.subr.mxu0 0.0
    %202 = vmatpush1.msra.mxu0 0.0
    %203 = vmatprep.mubr.f32.mxu0 0.0
    %204 = vmatmul.mubr.f32.gmra.mrb[0].mxu0 %v48
    %v205 = vpop.f32.mrb[0].mxu0
    %v206 = vadd.f32 %v137, %v205
    %v207 = vpop.f32.mrb[0].mxu0
    %208 = vmatprep.mubr.f32.mxu0 0.0
    %209 = vmatmul.mubr.f32.gmra.mrb[0].mxu0 %v51
    %v210 = vpop.f32.mrb[0].mxu0
    %v211 = vadd.f32 %v137, %v210
    %v212 = vpop.f32.mrb[0].mxu0
    %213 = vdwg.mxu0
    %vm214 = vcmask 15360
    %v215 = vsel %vm214, %v206, -inf
    %216 = vmax.xlane.f32.xlu0 %v215
    %v217 = vpop.xlane.xlu0 %216
    %v218 = vsel %vm214, %v211, -inf
    %219 = vmax.xlane.f32.xlu0 %v218
    %v220 = vpop.xlane.xlu0 %219
    %v221 = vsub.f32 %v206, %v217
    %v222 = vsub.f32 %v211, %v220
    %v223 = vmul.f32 %v221, 1.442695
    %v224 = vpow.pop %v223
    %v225 = vmul.f32 %v222, 1.442695
    %v226 = vpow.pop %v225
    %v227 = vsel %vm214, %v224, 0.0
    %228 = vadd.xlane.f32.xlu0 %v227
    %v229 = vpop.xlane.xlu0 %228
    %v230 = vsel %vm214, %v226, 0.0
    %231 = vadd.xlane.f32.xlu0 %v230
    %v232 = vpop.xlane.xlu0 %231
    %v233 = vrcp.pop %v229
    %v234 = vmul.f32 %v224, %v233
    %v235 = vrcp.pop %v232
    %v236 = vmul.f32 %v226, %v235
    %v237 = vld [vmem:[%s4] sm:$0xff]
    %v238 = vld [vmem:[%s4 + $0x8] sm:$0xff]
    %v241 = vcombine.high %v237, %v237
    %v243 = vunpack.c.l.s4 1983009808
    %v244 = vunpack.c.0.s8 %v243
    %v245 = vlaneseq
    %v246 = vshrl.u32 %v245, 7
    %v247 = vsub.s32 %v244, %v246
    %v248 = vrot.slane %v237, %v247
    %v250 = vunpack.c.l.s4 1983009808
    %v251 = vunpack.c.0.s8 %v250
    %v252 = vlaneseq
    %v253 = vshrl.u32 %v252, 7
    %v254 = vsub.s32 %v251, %v253
    %v255 = vrot.slane %v241, %v254
    %v256 = vcombine.high %v248, %v248
    %v257 = vcombine.high %v255, %v255
    %v258 = vcombine.high %v238, %v238
    %v260 = vunpack.c.l.s4 1983009808
    %v261 = vunpack.c.0.s8 %v260
    %v262 = vlaneseq
    %v263 = vshrl.u32 %v262, 7
    %v264 = vsub.s32 %v261, %v263
    %v265 = vrot.slane %v238, %v264
    %v267 = vunpack.c.l.s4 1983009808
    %v268 = vunpack.c.0.s8 %v267
    %v269 = vlaneseq
    %v270 = vshrl.u32 %v269, 7
    %v271 = vsub.s32 %v268, %v270
    %v272 = vrot.slane %v258, %v271
    %v273 = vcombine.high %v265, %v265
    %v274 = vcombine.high %v272, %v272
    %v276 = vsel %vm214, %v234, 0
    %v279 = vsel %vm214, %v236, 0
    %vm281 = vcmask 1041408
    %v282 = vsel %vm281, %v248, 0
    %v284 = vsel %vm281, %v256, 0
    %v286 = vsel %vm281, %v255, 0
    %v288 = vsel %vm281, %v257, 0
    %v290 = vsel %vm281, %v265, 0
    %v292 = vsel %vm281, %v273, 0
    %v294 = vsel %vm281, %v272, 0
    %v296 = vsel %vm281, %v274, 0
    %298 = vmatprep.subr.mxu0 %v284
    %299 = vmatpush1.msra.mxu0 %v282
    %300 = vmatprep.subr.mxu0 0.0
    %301 = vmatpush1.msra.mxu0 0.0
    %302 = vmatprep.subr.mxu0 0.0
    %303 = vmatpush1.msra.mxu0 0.0
    %304 = vmatprep.subr.mxu0 0.0
    %305 = vmatpush1.msra.mxu0 0.0
    %306 = vmatprep.subr.mxu0 0.0
    %307 = vmatpush1.msra.mxu0 0.0
    %308 = vmatprep.subr.mxu0 0.0
    %309 = vmatpush1.msra.mxu0 0.0
    %310 = vmatprep.subr.mxu0 0.0
    %311 = vmatpush1.msra.mxu0 0.0
    %312 = vmatprep.subr.mxu0 0.0
    %313 = vmatpush1.msra.mxu0 0.0
    %314 = vmatprep.subr.mxu0 0.0
    %315 = vmatpush1.msra.mxu0 0.0
    %316 = vmatprep.subr.mxu0 0.0
    %317 = vmatpush1.msra.mxu0 0.0
    %318 = vmatprep.subr.mxu0 0.0
    %319 = vmatpush1.msra.mxu0 0.0
    %320 = vmatprep.subr.mxu0 0.0
    %321 = vmatpush1.msra.mxu0 0.0
    %322 = vmatprep.subr.mxu0 0.0
    %323 = vmatpush1.msra.mxu0 0.0
    %324 = vmatprep.subr.mxu0 0.0
    %325 = vmatpush1.msra.mxu0 0.0
    %326 = vmatprep.subr.mxu0 0.0
    %327 = vmatpush1.msra.mxu0 0.0
    %328 = vmatprep.subr.mxu0 0.0
    %329 = vmatpush1.msra.mxu0 0.0
    %330 = vmatprep.subr.mxu0 0.0
    %331 = vmatpush1.msra.mxu0 0.0
    %332 = vmatprep.subr.mxu0 0.0
    %333 = vmatpush1.msra.mxu0 0.0
    %334 = vmatprep.subr.mxu0 0.0
    %335 = vmatpush1.msra.mxu0 0.0
    %336 = vmatprep.subr.mxu0 0.0
    %337 = vmatpush1.msra.mxu0 0.0
    %338 = vmatprep.subr.mxu0 0.0
    %339 = vmatpush1.msra.mxu0 0.0
    %340 = vmatprep.subr.mxu0 0.0
    %341 = vmatpush1.msra.mxu0 0.0
    %342 = vmatprep.subr.mxu0 0.0
    %343 = vmatpush1.msra.mxu0 0.0
    %344 = vmatprep.subr.mxu0 0.0
    %345 = vmatpush1.msra.mxu0 0.0
    %346 = vmatprep.subr.mxu0 0.0
    %347 = vmatpush1.msra.mxu0 0.0
    %348 = vmatprep.subr.mxu0 0.0
    %349 = vmatpush1.msra.mxu0 0.0
    %350 = vmatprep.subr.mxu0 0.0
    %351 = vmatpush1.msra.mxu0 0.0
    %352 = vmatprep.subr.mxu0 0.0
    %353 = vmatpush1.msra.mxu0 0.0
    %354 = vmatprep.subr.mxu0 0.0
    %355 = vmatpush1.msra.mxu0 0.0
    %356 = vmatprep.subr.mxu0 0.0
    %357 = vmatpush1.msra.mxu0 0.0
    %358 = vmatprep.subr.mxu0 0.0
    %359 = vmatpush1.msra.mxu0 0.0
    %360 = vmatprep.subr.mxu0 0.0
    %361 = vmatpush1.msra.mxu0 0.0
    %362 = vmatprep.mubr.f32.mxu0 0.0
    %363 = vmatmul.mubr.f32.gmra.mrb[0].mxu0 %v276
    %v364 = vpop.f32.mrb[0].mxu0
    %v365 = vadd.f32 0.0, %v364
    %v366 = vpop.f32.mrb[0].mxu0
    %v367 = vadd.f32 0.0, %v366
    %368 = vmatprep.mubr.f32.mxu0 0.0
    %369 = vmatmul.mubr.f32.gmra.mrb[0].mxu0 %v279
    %v370 = vpop.f32.mrb[0].mxu0
    %v371 = vadd.f32 0.0, %v370
    %v372 = vpop.f32.mrb[0].mxu0
    %v373 = vadd.f32 0.0, %v372
    %374 = vdwg.mxu0
    %375 = vmatprep.subr.mxu0 %v288
    %376 = vmatpush1.msra.mxu0 %v286
    %377 = vmatprep.subr.mxu0 0.0
    %378 = vmatpush1.msra.mxu0 0.0
    %379 = vmatprep.subr.mxu0 0.0
    %380 = vmatpush1.msra.mxu0 0.0
    %381 = vmatprep.subr.mxu0 0.0
    %382 = vmatpush1.msra.mxu0 0.0
    %383 = vmatprep.subr.mxu0 0.0
    %384 = vmatpush1.msra.mxu0 0.0
    %385 = vmatprep.subr.mxu0 0.0
    %386 = vmatpush1.msra.mxu0 0.0
    %387 = vmatprep.subr.mxu0 0.0
    %388 = vmatpush1.msra.mxu0 0.0
    %389 = vmatprep.subr.mxu0 0.0
    %390 = vmatpush1.msra.mxu0 0.0
    %391 = vmatprep.subr.mxu0 0.0
    %392 = vmatpush1.msra.mxu0 0.0
    %393 = vmatprep.subr.mxu0 0.0
    %394 = vmatpush1.msra.mxu0 0.0
    %395 = vmatprep.subr.mxu0 0.0
    %396 = vmatpush1.msra.mxu0 0.0
    %397 = vmatprep.subr.mxu0 0.0
    %398 = vmatpush1.msra.mxu0 0.0
    %399 = vmatprep.subr.mxu0 0.0
    %400 = vmatpush1.msra.mxu0 0.0
    %401 = vmatprep.subr.mxu0 0.0
    %402 = vmatpush1.msra.mxu0 0.0
    %403 = vmatprep.subr.mxu0 0.0
    %404 = vmatpush1.msra.mxu0 0.0
    %405 = vmatprep.subr.mxu0 0.0
    %406 = vmatpush1.msra.mxu0 0.0
    %407 = vmatprep.subr.mxu0 0.0
    %408 = vmatpush1.msra.mxu0 0.0
    %409 = vmatprep.subr.mxu0 0.0
    %410 = vmatpush1.msra.mxu0 0.0
    %411 = vmatprep.subr.mxu0 0.0
    %412 = vmatpush1.msra.mxu0 0.0
    %413 = vmatprep.subr.mxu0 0.0
    %414 = vmatpush1.msra.mxu0 0.0
    %415 = vmatprep.subr.mxu0 0.0
    %416 = vmatpush1.msra.mxu0 0.0
    %417 = vmatprep.subr.mxu0 0.0
    %418 = vmatpush1.msra.mxu0 0.0
    %419 = vmatprep.subr.mxu0 0.0
    %420 = vmatpush1.msra.mxu0 0.0
    %421 = vmatprep.subr.mxu0 0.0
    %422 = vmatpush1.msra.mxu0 0.0
    %423 = vmatprep.subr.mxu0 0.0
    %424 = vmatpush1.msra.mxu0 0.0
    %425 = vmatprep.subr.mxu0 0.0
    %426 = vmatpush1.msra.mxu0 0.0
    %427 = vmatprep.subr.mxu0 0.0
    %428 = vmatpush1.msra.mxu0 0.0
    %429 = vmatprep.subr.mxu0 0.0
    %430 = vmatpush1.msra.mxu0 0.0
    %431 = vmatprep.subr.mxu0 0.0
    %432 = vmatpush1.msra.mxu0 0.0
    %433 = vmatprep.subr.mxu0 0.0
    %434 = vmatpush1.msra.mxu0 0.0
    %435 = vmatprep.subr.mxu0 0.0
    %436 = vmatpush1.msra.mxu0 0.0
    %437 = vmatprep.subr.mxu0 0.0
    %438 = vmatpush1.msra.mxu0 0.0
    %439 = vmatprep.mubr.f32.mxu0 0.0
    %440 = vmatmul.mubr.f32.gmra.mrb[0].mxu0 %v276
    %v441 = vpop.f32.mrb[0].mxu0
    %v442 = vadd.f32 0.0, %v441
    %v443 = vpop.f32.mrb[0].mxu0
    %v444 = vadd.f32 0.0, %v443
    %445 = vmatprep.mubr.f32.mxu0 0.0
    %446 = vmatmul.mubr.f32.gmra.mrb[0].mxu0 %v279
    %v447 = vpop.f32.mrb[0].mxu0
    %v448 = vadd.f32 0.0, %v447
    %v449 = vpop.f32.mrb[0].mxu0
    %v450 = vadd.f32 0.0, %v449
    %451 = vdwg.mxu0
    %452 = vmatprep.subr.mxu0 %v292
    %453 = vmatpush1.msra.mxu0 %v290
    %454 = vmatprep.subr.mxu0 0.0
    %455 = vmatpush1.msra.mxu0 0.0
    %456 = vmatprep.subr.mxu0 0.0
    %457 = vmatpush1.msra.mxu0 0.0
    %458 = vmatprep.subr.mxu0 0.0
    %459 = vmatpush1.msra.mxu0 0.0
    %460 = vmatprep.subr.mxu0 0.0
    %461 = vmatpush1.msra.mxu0 0.0
    %462 = vmatprep.subr.mxu0 0.0
    %463 = vmatpush1.msra.mxu0 0.0
    %464 = vmatprep.subr.mxu0 0.0
    %465 = vmatpush1.msra.mxu0 0.0
    %466 = vmatprep.subr.mxu0 0.0
    %467 = vmatpush1.msra.mxu0 0.0
    %468 = vmatprep.subr.mxu0 0.0
    %469 = vmatpush1.msra.mxu0 0.0
    %470 = vmatprep.subr.mxu0 0.0
    %471 = vmatpush1.msra.mxu0 0.0
    %472 = vmatprep.subr.mxu0 0.0
    %473 = vmatpush1.msra.mxu0 0.0
    %474 = vmatprep.subr.mxu0 0.0
    %475 = vmatpush1.msra.mxu0 0.0
    %476 = vmatprep.subr.mxu0 0.0
    %477 = vmatpush1.msra.mxu0 0.0
    %478 = vmatprep.subr.mxu0 0.0
    %479 = vmatpush1.msra.mxu0 0.0
    %480 = vmatprep.subr.mxu0 0.0
    %481 = vmatpush1.msra.mxu0 0.0
    %482 = vmatprep.subr.mxu0 0.0
    %483 = vmatpush1.msra.mxu0 0.0
    %484 = vmatprep.subr.mxu0 0.0
    %485 = vmatpush1.msra.mxu0 0.0
    %486 = vmatprep.subr.mxu0 0.0
    %487 = vmatpush1.msra.mxu0 0.0
    %488 = vmatprep.subr.mxu0 0.0
    %489 = vmatpush1.msra.mxu0 0.0
    %490 = vmatprep.subr.mxu0 0.0
    %491 = vmatpush1.msra.mxu0 0.0
    %492 = vmatprep.subr.mxu0 0.0
    %493 = vmatpush1.msra.mxu0 0.0
    %494 = vmatprep.subr.mxu0 0.0
    %495 = vmatpush1.msra.mxu0 0.0
    %496 = vmatprep.subr.mxu0 0.0
    %497 = vmatpush1.msra.mxu0 0.0
    %498 = vmatprep.subr.mxu0 0.0
    %499 = vmatpush1.msra.mxu0 0.0
    %500 = vmatprep.subr.mxu0 0.0
    %501 = vmatpush1.msra.mxu0 0.0
    %502 = vmatprep.subr.mxu0 0.0
    %503 = vmatpush1.msra.mxu0 0.0
    %504 = vmatprep.subr.mxu0 0.0
    %505 = vmatpush1.msra.mxu0 0.0
    %506 = vmatprep.subr.mxu0 0.0
    %507 = vmatpush1.msra.mxu0 0.0
    %508 = vmatprep.subr.mxu0 0.0
    %509 = vmatpush1.msra.mxu0 0.0
    %510 = vmatprep.subr.mxu0 0.0
    %511 = vmatpush1.msra.mxu0 0.0
    %512 = vmatprep.subr.mxu0 0.0
    %513 = vmatpush1.msra.mxu0 0.0
    %514 = vmatprep.subr.mxu0 0.0
    %515 = vmatpush1.msra.mxu0 0.0
    %516 = vmatprep.mubr.f32.mxu0 0.0
    %517 = vmatmul.mubr.f32.gmra.mrb[0].mxu0 %v276
    %v518 = vpop.f32.mrb[0].mxu0
    %v519 = vadd.f32 0.0, %v518
    %v520 = vpop.f32.mrb[0].mxu0
    %v521 = vadd.f32 0.0, %v520
    %522 = vmatprep.mubr.f32.mxu0 0.0
    %523 = vmatmul.mubr.f32.gmra.mrb[0].mxu0 %v279
    %v524 = vpop.f32.mrb[0].mxu0
    %v525 = vadd.f32 0.0, %v524
    %v526 = vpop.f32.mrb[0].mxu0
    %v527 = vadd.f32 0.0, %v526
    %528 = vdwg.mxu0
    %529 = vmatprep.subr.mxu0 %v296
    %530 = vmatpush1.msra.mxu0 %v294
    %531 = vmatprep.subr.mxu0 0.0
    %532 = vmatpush1.msra.mxu0 0.0
    %533 = vmatprep.subr.mxu0 0.0
    %534 = vmatpush1.msra.mxu0 0.0
    %535 = vmatprep.subr.mxu0 0.0
    %536 = vmatpush1.msra.mxu0 0.0
    %537 = vmatprep.subr.mxu0 0.0
    %538 = vmatpush1.msra.mxu0 0.0
    %539 = vmatprep.subr.mxu0 0.0
    %540 = vmatpush1.msra.mxu0 0.0
    %541 = vmatprep.subr.mxu0 0.0
    %542 = vmatpush1.msra.mxu0 0.0
    %543 = vmatprep.subr.mxu0 0.0
    %544 = vmatpush1.msra.mxu0 0.0
    %545 = vmatprep.subr.mxu0 0.0
    %546 = vmatpush1.msra.mxu0 0.0
    %547 = vmatprep.subr.mxu0 0.0
    %548 = vmatpush1.msra.mxu0 0.0
    %549 = vmatprep.subr.mxu0 0.0
    %550 = vmatpush1.msra.mxu0 0.0
    %551 = vmatprep.subr.mxu0 0.0
    %552 = vmatpush1.msra.mxu0 0.0
    %553 = vmatprep.subr.mxu0 0.0
    %554 = vmatpush1.msra.mxu0 0.0
    %555 = vmatprep.subr.mxu0 0.0
    %556 = vmatpush1.msra.mxu0 0.0
    %557 = vmatprep.subr.mxu0 0.0
    %558 = vmatpush1.msra.mxu0 0.0
    %559 = vmatprep.subr.mxu0 0.0
    %560 = vmatpush1.msra.mxu0 0.0
    %561 = vmatprep.subr.mxu0 0.0
    %562 = vmatpush1.msra.mxu0 0.0
    %563 = vmatprep.subr.mxu0 0.0
    %564 = vmatpush1.msra.mxu0 0.0
    %565 = vmatprep.subr.mxu0 0.0
    %566 = vmatpush1.msra.mxu0 0.0
    %567 = vmatprep.subr.mxu0 0.0
    %568 = vmatpush1.msra.mxu0 0.0
    %569 = vmatprep.subr.mxu0 0.0
    %570 = vmatpush1.msra.mxu0 0.0
    %571 = vmatprep.subr.mxu0 0.0
    %572 = vmatpush1.msra.mxu0 0.0
    %573 = vmatprep.subr.mxu0 0.0
    %574 = vmatpush1.msra.mxu0 0.0
    %575 = vmatprep.subr.mxu0 0.0
    %576 = vmatpush1.msra.mxu0 0.0
    %577 = vmatprep.subr.mxu0 0.0
    %578 = vmatpush1.msra.mxu0 0.0
    %579 = vmatprep.subr.mxu0 0.0
    %580 = vmatpush1.msra.mxu0 0.0
    %581 = vmatprep.subr.mxu0 0.0
    %582 = vmatpush1.msra.mxu0 0.0
    %583 = vmatprep.subr.mxu0 0.0
    %584 = vmatpush1.msra.mxu0 0.0
    %585 = vmatprep.subr.mxu0 0.0
    %586 = vmatpush1.msra.mxu0 0.0
    %587 = vmatprep.subr.mxu0 0.0
    %588 = vmatpush1.msra.mxu0 0.0
    %589 = vmatprep.subr.mxu0 0.0
    %590 = vmatpush1.msra.mxu0 0.0
    %591 = vmatprep.subr.mxu0 0.0
    %592 = vmatpush1.msra.mxu0 0.0
    %593 = vmatprep.mubr.f32.mxu0 0.0
    %594 = vmatmul.mubr.f32.gmra.mrb[0].mxu0 %v276
    %v595 = vpop.f32.mrb[0].mxu0
    %v596 = vadd.f32 0.0, %v595
    %v597 = vpop.f32.mrb[0].mxu0
    %v598 = vadd.f32 0.0, %v597
    %599 = vmatprep.mubr.f32.mxu0 0.0
    %600 = vmatmul.mubr.f32.gmra.mrb[0].mxu0 %v279
    %v601 = vpop.f32.mrb[0].mxu0
    %v602 = vadd.f32 0.0, %v601
    %v603 = vpop.f32.mrb[0].mxu0
    %v604 = vadd.f32 0.0, %v603
    %605 = vdwg.mxu0
    %v606 = vlaneseq
    %v607 = vshrl.u32 %v606, 7
    %v608 = vadd.s32 %v607, 8
    %v609 = vadd.s32 %v607, 16
    %v610 = vadd.s32 %v607, 24
    %v611 = vadd.s32 %v607, 32
    %v612 = vadd.s32 %v607, 40
    %v613 = vadd.s32 %v607, 48
    %v614 = vadd.s32 %v607, 56
    %v615 = vadd.s32 %v607, 64
    %v616 = vadd.s32 %v607, 72
    %v617 = vadd.s32 %v607, 80
    %v618 = vadd.s32 %v607, 88
    %v619 = vadd.s32 %v607, 96
    %v620 = vadd.s32 %v607, 104
    %v621 = vadd.s32 %v607, 112
    %v622 = vadd.s32 %v607, 120
    %v623 = vadd.s32 %v607, 128
    %v624 = vadd.s32 %v607, 136
    %v625 = vadd.s32 %v607, 144
    %v626 = vadd.s32 %v607, 152
    %v627 = vadd.s32 %v607, 160
    %v628 = vadd.s32 %v607, 168
    %v629 = vadd.s32 %v607, 176
    %v630 = vadd.s32 %v607, 184
    %v631 = vadd.s32 %v607, 192
    %v632 = vadd.s32 %v607, 200
    %v633 = vadd.s32 %v607, 208
    %v634 = vadd.s32 %v607, 216
    %v635 = vadd.s32 %v607, 224
    %v636 = vadd.s32 %v607, 232
    %v637 = vadd.s32 %v607, 240
    %v638 = vadd.s32 %v607, 248
    %v639 = vadd.s32 %v607, 256
    %v640 = vadd.s32 %v607, 264
    %v641 = vadd.s32 %v607, 272
    %v642 = vadd.s32 %v607, 280
    %v643 = vadd.s32 %v607, 288
    %v644 = vadd.s32 %v607, 296
    %v645 = vadd.s32 %v607, 304
    %v646 = vadd.s32 %v607, 312
    %v647 = vadd.s32 %v607, 320
    %v648 = vadd.s32 %v607, 328
    %v649 = vadd.s32 %v607, 336
    %v650 = vadd.s32 %v607, 344
    %v651 = vadd.s32 %v607, 352
    %v652 = vadd.s32 %v607, 360
    %v653 = vadd.s32 %v607, 368
    %v654 = vadd.s32 %v607, 376
    %v655 = vadd.s32 %v607, 384
    %v656 = vadd.s32 %v607, 392
    %v657 = vadd.s32 %v607, 400
    %v658 = vadd.s32 %v607, 408
    %v659 = vadd.s32 %v607, 416
    %v660 = vadd.s32 %v607, 424
    %v661 = vadd.s32 %v607, 432
    %v662 = vadd.s32 %v607, 440
    %v663 = vadd.s32 %v607, 448
    %v664 = vadd.s32 %v607, 456
    %v665 = vadd.s32 %v607, 464
    %v666 = vadd.s32 %v607, 472
    %v667 = vadd.s32 %v607, 480
    %v668 = vadd.s32 %v607, 488
    %v669 = vadd.s32 %v607, 496
    %v670 = vadd.s32 %v607, 504
    %v671 = vadd.s32 %v607, 512
    %v672 = vadd.s32 %v607, 520
    %v673 = vadd.s32 %v607, 528
    %v674 = vadd.s32 %v607, 536
    %v675 = vadd.s32 %v607, 544
    %v676 = vadd.s32 %v607, 552
    %v677 = vadd.s32 %v607, 560
    %v678 = vadd.s32 %v607, 568
    %v679 = vadd.s32 %v607, 576
    %v680 = vadd.s32 %v607, 584
    %v681 = vadd.s32 %v607, 592
    %v682 = vadd.s32 %v607, 600
    %v683 = vadd.s32 %v607, 608
    %v684 = vadd.s32 %v607, 616
    %v685 = vadd.s32 %v607, 624
    %v686 = vadd.s32 %v607, 632
    %v687 = vadd.s32 %v607, 640
    %v688 = vadd.s32 %v607, 648
    %v689 = vadd.s32 %v607, 656
    %v690 = vadd.s32 %v607, 664
    %v691 = vadd.s32 %v607, 672
    %v692 = vadd.s32 %v607, 680
    %v693 = vadd.s32 %v607, 688
    %v694 = vadd.s32 %v607, 696
    %v695 = vadd.s32 %v607, 704
    %v696 = vadd.s32 %v607, 712
    %v697 = vadd.s32 %v607, 720
    %v698 = vadd.s32 %v607, 728
    %v699 = vadd.s32 %v607, 736
    %v700 = vadd.s32 %v607, 744
    %v701 = vadd.s32 %v607, 752
    %v702 = vadd.s32 %v607, 760
    %v703 = vadd.s32 %v607, 768
    %v704 = vadd.s32 %v607, 776
    %v705 = vadd.s32 %v607, 784
    %v706 = vadd.s32 %v607, 792
    %v707 = vadd.s32 %v607, 800
    %v708 = vadd.s32 %v607, 808
    %v709 = vadd.s32 %v607, 816
    %v710 = vadd.s32 %v607, 824
    %v711 = vadd.s32 %v607, 832
    %v712 = vadd.s32 %v607, 840
    %v713 = vadd.s32 %v607, 848
    %v714 = vadd.s32 %v607, 856
    %v715 = vadd.s32 %v607, 864
    %v716 = vadd.s32 %v607, 872
    %v717 = vadd.s32 %v607, 880
    %v718 = vadd.s32 %v607, 888
    %v719 = vadd.s32 %v607, 896
    %v720 = vadd.s32 %v607, 904
    %v721 = vadd.s32 %v607, 912
    %v722 = vadd.s32 %v607, 920
    %v723 = vadd.s32 %v607, 928
    %v724 = vadd.s32 %v607, 936
    %v725 = vadd.s32 %v607, 944
    %v726 = vadd.s32 %v607, 952
    %v727 = vadd.s32 %v607, 960
    %v728 = vadd.s32 %v607, 968
    %v729 = vadd.s32 %v607, 976
    %v730 = vadd.s32 %v607, 984
    %v731 = vadd.s32 %v607, 992
    %v732 = vadd.s32 %v607, 1000
    %v733 = vadd.s32 %v607, 1008
    %v734 = vadd.s32 %v607, 1016
    %v735 = vlaneseq
    %v736 = vand.u32 %v735, 127
    %v737 = vadd.s32 %v736, 128
    %v738 = vadd.s32 %v736, 256
    %v739 = vadd.s32 %v736, 384
    %v740 = vadd.s32 %v736, 512
    %v741 = vadd.s32 %v736, 640
    %v742 = vadd.s32 %v736, 768
    %v743 = vadd.s32 %v736, 896
    %v744 = vand.u32 %v607, 31
    %v745 = vand.u32 %v608, 31
    %v746 = vand.u32 %v609, 31
    %v747 = vand.u32 %v610, 31
    %v748 = vand.u32 %v611, 31
    %v749 = vand.u32 %v612, 31
    %v750 = vand.u32 %v613, 31
    %v751 = vand.u32 %v614, 31
    %v752 = vand.u32 %v615, 31
    %v753 = vand.u32 %v616, 31
    %v754 = vand.u32 %v617, 31
    %v755 = vand.u32 %v618, 31
    %v756 = vand.u32 %v619, 31
    %v757 = vand.u32 %v620, 31
    %v758 = vand.u32 %v621, 31
    %v759 = vand.u32 %v622, 31
    %v760 = vand.u32 %v623, 31
    %v761 = vand.u32 %v624, 31
    %v762 = vand.u32 %v625, 31
    %v763 = vand.u32 %v626, 31
    %v764 = vand.u32 %v627, 31
    %v765 = vand.u32 %v628, 31
    %v766 = vand.u32 %v629, 31
    %v767 = vand.u32 %v630, 31
    %v768 = vand.u32 %v631, 31
    %v769 = vand.u32 %v632, 31
    %v770 = vand.u32 %v633, 31
    %v771 = vand.u32 %v634, 31
    %v772 = vand.u32 %v635, 31
    %v773 = vand.u32 %v636, 31
    %v774 = vand.u32 %v637, 31
    %v775 = vand.u32 %v638, 31
    %v776 = vand.u32 %v639, 31
    %v777 = vand.u32 %v640, 31
    %v778 = vand.u32 %v641, 31
    %v779 = vand.u32 %v642, 31
    %v780 = vand.u32 %v643, 31
    %v781 = vand.u32 %v644, 31
    %v782 = vand.u32 %v645, 31
    %v783 = vand.u32 %v646, 31
    %v784 = vand.u32 %v647, 31
    %v785 = vand.u32 %v648, 31
    %v786 = vand.u32 %v649, 31
    %v787 = vand.u32 %v650, 31
    %v788 = vand.u32 %v651, 31
    %v789 = vand.u32 %v652, 31
    %v790 = vand.u32 %v653, 31
    %v791 = vand.u32 %v654, 31
    %v792 = vand.u32 %v655, 31
    %v793 = vand.u32 %v656, 31
    %v794 = vand.u32 %v657, 31
    %v795 = vand.u32 %v658, 31
    %v796 = vand.u32 %v659, 31
    %v797 = vand.u32 %v660, 31
    %v798 = vand.u32 %v661, 31
    %v799 = vand.u32 %v662, 31
    %v800 = vand.u32 %v663, 31
    %v801 = vand.u32 %v664, 31
    %v802 = vand.u32 %v665, 31
    %v803 = vand.u32 %v666, 31
    %v804 = vand.u32 %v667, 31
    %v805 = vand.u32 %v668, 31
    %v806 = vand.u32 %v669, 31
    %v807 = vand.u32 %v670, 31
    %v808 = vand.u32 %v671, 31
    %v809 = vand.u32 %v672, 31
    %v810 = vand.u32 %v673, 31
    %v811 = vand.u32 %v674, 31
    %v812 = vand.u32 %v675, 31
    %v813 = vand.u32 %v676, 31
    %v814 = vand.u32 %v677, 31
    %v815 = vand.u32 %v678, 31
    %v816 = vand.u32 %v679, 31
    %v817 = vand.u32 %v680, 31
    %v818 = vand.u32 %v681, 31
    %v819 = vand.u32 %v682, 31
    %v820 = vand.u32 %v683, 31
    %v821 = vand.u32 %v684, 31
    %v822 = vand.u32 %v685, 31
    %v823 = vand.u32 %v686, 31
    %v824 = vand.u32 %v687, 31
    %v825 = vand.u32 %v688, 31
    %v826 = vand.u32 %v689, 31
    %v827 = vand.u32 %v690, 31
    %v828 = vand.u32 %v691, 31
    %v829 = vand.u32 %v692, 31
    %v830 = vand.u32 %v693, 31
    %v831 = vand.u32 %v694, 31
    %v832 = vand.u32 %v695, 31
    %v833 = vand.u32 %v696, 31
    %v834 = vand.u32 %v697, 31
    %v835 = vand.u32 %v698, 31
    %v836 = vand.u32 %v699, 31
    %v837 = vand.u32 %v700, 31
    %v838 = vand.u32 %v701, 31
    %v839 = vand.u32 %v702, 31
    %v840 = vand.u32 %v703, 31
    %v841 = vand.u32 %v704, 31
    %v842 = vand.u32 %v705, 31
    %v843 = vand.u32 %v706, 31
    %v844 = vand.u32 %v707, 31
    %v845 = vand.u32 %v708, 31
    %v846 = vand.u32 %v709, 31
    %v847 = vand.u32 %v710, 31
    %v848 = vand.u32 %v711, 31
    %v849 = vand.u32 %v712, 31
    %v850 = vand.u32 %v713, 31
    %v851 = vand.u32 %v714, 31
    %v852 = vand.u32 %v715, 31
    %v853 = vand.u32 %v716, 31
    %v854 = vand.u32 %v717, 31
    %v855 = vand.u32 %v718, 31
    %v856 = vand.u32 %v719, 31
    %v857 = vand.u32 %v720, 31
    %v858 = vand.u32 %v721, 31
    %v859 = vand.u32 %v722, 31
    %v860 = vand.u32 %v723, 31
    %v861 = vand.u32 %v724, 31
    %v862 = vand.u32 %v725, 31
    %v863 = vand.u32 %v726, 31
    %v864 = vand.u32 %v727, 31
    %v865 = vand.u32 %v728, 31
    %v866 = vand.u32 %v729, 31
    %v867 = vand.u32 %v730, 31
    %v868 = vand.u32 %v731, 31
    %v869 = vand.u32 %v732, 31
    %v870 = vand.u32 %v733, 31
    %v871 = vand.u32 %v734, 31
    %v872 = vand.u32 %v736, 31
    %v873 = vand.u32 %v737, 31
    %v874 = vand.u32 %v738, 31
    %v875 = vand.u32 %v739, 31
    %v876 = vand.u32 %v740, 31
    %v877 = vand.u32 %v741, 31
    %v878 = vand.u32 %v742, 31
    %v879 = vand.u32 %v743, 31
    %vm880 = vcmp.eq.s32.totalorder %v744, %v736
    %vm881 = vcmp.eq.s32.totalorder %v745, %v736
    %vm882 = vcmp.eq.s32.totalorder %v746, %v736
    %vm883 = vcmp.eq.s32.totalorder %v747, %v736
    %vm884 = vcmp.eq.s32.totalorder %v748, %v736
    %vm885 = vcmp.eq.s32.totalorder %v749, %v736
    %vm886 = vcmp.eq.s32.totalorder %v750, %v736
    %vm887 = vcmp.eq.s32.totalorder %v751, %v736
    %vm888 = vcmp.eq.s32.totalorder %v752, %v736
    %vm889 = vcmp.eq.s32.totalorder %v753, %v736
    %vm890 = vcmp.eq.s32.totalorder %v754, %v736
    %vm891 = vcmp.eq.s32.totalorder %v755, %v736
    %vm892 = vcmp.eq.s32.totalorder %v756, %v736
    %vm893 = vcmp.eq.s32.totalorder %v757, %v736
    %vm894 = vcmp.eq.s32.totalorder %v758, %v736
    %vm895 = vcmp.eq.s32.totalorder %v759, %v736
    %vm896 = vcmp.eq.s32.totalorder %v760, %v736
    %vm897 = vcmp.eq.s32.totalorder %v761, %v736
    %vm898 = vcmp.eq.s32.totalorder %v762, %v736
    %vm899 = vcmp.eq.s32.totalorder %v763, %v736
    %vm900 = vcmp.eq.s32.totalorder %v764, %v736
    %vm901 = vcmp.eq.s32.totalorder %v765, %v736
    %vm902 = vcmp.eq.s32.totalorder %v766, %v736
    %vm903 = vcmp.eq.s32.totalorder %v767, %v736
    %vm904 = vcmp.eq.s32.totalorder %v768, %v736
    %vm905 = vcmp.eq.s32.totalorder %v769, %v736
    %vm906 = vcmp.eq.s32.totalorder %v770, %v736
    %vm907 = vcmp.eq.s32.totalorder %v771, %v736
    %vm908 = vcmp.eq.s32.totalorder %v772, %v736
    %vm909 = vcmp.eq.s32.totalorder %v773, %v736
    %vm910 = vcmp.eq.s32.totalorder %v774, %v736
    %vm911 = vcmp.eq.s32.totalorder %v775, %v736
    %vm912 = vcmp.eq.s32.totalorder %v776, %v736
    %vm913 = vcmp.eq.s32.totalorder %v777, %v736
    %vm914 = vcmp.eq.s32.totalorder %v778, %v736
    %vm915 = vcmp.eq.s32.totalorder %v779, %v736
    %vm916 = vcmp.eq.s32.totalorder %v780, %v736
    %vm917 = vcmp.eq.s32.totalorder %v781, %v736
    %vm918 = vcmp.eq.s32.totalorder %v782, %v736
    %vm919 = vcmp.eq.s32.totalorder %v783, %v736
    %vm920 = vcmp.eq.s32.totalorder %v784, %v736
    %vm921 = vcmp.eq.s32.totalorder %v785, %v736
    %vm922 = vcmp.eq.s32.totalorder %v786, %v736
    %vm923 = vcmp.eq.s32.totalorder %v787, %v736
    %vm924 = vcmp.eq.s32.totalorder %v788, %v736
    %vm925 = vcmp.eq.s32.totalorder %v789, %v736
    %vm926 = vcmp.eq.s32.totalorder %v790, %v736
    %vm927 = vcmp.eq.s32.totalorder %v791, %v736
    %vm928 = vcmp.eq.s32.totalorder %v792, %v736
    %vm929 = vcmp.eq.s32.totalorder %v793, %v736
    %vm930 = vcmp.eq.s32.totalorder %v794, %v736
    %vm931 = vcmp.eq.s32.totalorder %v795, %v736
    %vm932 = vcmp.eq.s32.totalorder %v796, %v736
    %vm933 = vcmp.eq.s32.totalorder %v797, %v736
    %vm934 = vcmp.eq.s32.totalorder %v798, %v736
    %vm935 = vcmp.eq.s32.totalorder %v799, %v736
    %vm936 = vcmp.eq.s32.totalorder %v800, %v736
    %vm937 = vcmp.eq.s32.totalorder %v801, %v736
    %vm938 = vcmp.eq.s32.totalorder %v802, %v736
    %vm939 = vcmp.eq.s32.totalorder %v803, %v736
    %vm940 = vcmp.eq.s32.totalorder %v804, %v736
    %vm941 = vcmp.eq.s32.totalorder %v805, %v736
    %vm942 = vcmp.eq.s32.totalorder %v806, %v736
    %vm943 = vcmp.eq.s32.totalorder %v807, %v736
    %vm944 = vcmp.eq.s32.totalorder %v808, %v736
    %vm945 = vcmp.eq.s32.totalorder %v809, %v736
    %vm946 = vcmp.eq.s32.totalorder %v810, %v736
    %vm947 = vcmp.eq.s32.totalorder %v811, %v736
    %vm948 = vcmp.eq.s32.totalorder %v812, %v736
    %vm949 = vcmp.eq.s32.totalorder %v813, %v736
    %vm950 = vcmp.eq.s32.totalorder %v814, %v736
    %vm951 = vcmp.eq.s32.totalorder %v815, %v736
    %vm952 = vcmp.eq.s32.totalorder %v816, %v736
    %vm953 = vcmp.eq.s32.totalorder %v817, %v736
    %vm954 = vcmp.eq.s32.totalorder %v818, %v736
    %vm955 = vcmp.eq.s32.totalorder %v819, %v736
    %vm956 = vcmp.eq.s32.totalorder %v820, %v736
    %vm957 = vcmp.eq.s32.totalorder %v821, %v736
    %vm958 = vcmp.eq.s32.totalorder %v822, %v736
    %vm959 = vcmp.eq.s32.totalorder %v823, %v736
    %vm960 = vcmp.eq.s32.totalorder %v824, %v736
    %vm961 = vcmp.eq.s32.totalorder %v825, %v736
    %vm962 = vcmp.eq.s32.totalorder %v826, %v736
    %vm963 = vcmp.eq.s32.totalorder %v827, %v736
    %vm964 = vcmp.eq.s32.totalorder %v828, %v736
    %vm965 = vcmp.eq.s32.totalorder %v829, %v736
    %vm966 = vcmp.eq.s32.totalorder %v830, %v736
    %vm967 = vcmp.eq.s32.totalorder %v831, %v736
    %vm968 = vcmp.eq.s32.totalorder %v832, %v736
    %vm969 = vcmp.eq.s32.totalorder %v833, %v736
    %vm970 = vcmp.eq.s32.totalorder %v834, %v736
    %vm971 = vcmp.eq.s32.totalorder %v835, %v736
    %vm972 = vcmp.eq.s32.totalorder %v836, %v736
    %vm973 = vcmp.eq.s32.totalorder %v837, %v736
    %vm974 = vcmp.eq.s32.totalorder %v838, %v736
    %vm975 = vcmp.eq.s32.totalorder %v839, %v736
    %vm976 = vcmp.eq.s32.totalorder %v840, %v736
    %vm977 = vcmp.eq.s32.totalorder %v841, %v736
    %vm978 = vcmp.eq.s32.totalorder %v842, %v736
    %vm979 = vcmp.eq.s32.totalorder %v843, %v736
    %vm980 = vcmp.eq.s32.totalorder %v844, %v736
    %vm981 = vcmp.eq.s32.totalorder %v845, %v736
    %vm982 = vcmp.eq.s32.totalorder %v846, %v736
    %vm983 = vcmp.eq.s32.totalorder %v847, %v736
    %vm984 = vcmp.eq.s32.totalorder %v848, %v736
    %vm985 = vcmp.eq.s32.totalorder %v849, %v736
    %vm986 = vcmp.eq.s32.totalorder %v850, %v736
    %vm987 = vcmp.eq.s32.totalorder %v851, %v736
    %vm988 = vcmp.eq.s32.totalorder %v852, %v736
    %vm989 = vcmp.eq.s32.totalorder %v853, %v736
    %vm990 = vcmp.eq.s32.totalorder %v854, %v736
    %vm991 = vcmp.eq.s32.totalorder %v855, %v736
    %vm992 = vcmp.eq.s32.totalorder %v856, %v736
    %vm993 = vcmp.eq.s32.totalorder %v857, %v736
    %vm994 = vcmp.eq.s32.totalorder %v858, %v736
    %vm995 = vcmp.eq.s32.totalorder %v859, %v736
    %vm996 = vcmp.eq.s32.totalorder %v860, %v736
    %vm997 = vcmp.eq.s32.totalorder %v861, %v736
    %vm998 = vcmp.eq.s32.totalorder %v862, %v736
    %vm999 = vcmp.eq.s32.totalorder %v863, %v736
    %vm1000 = vcmp.eq.s32.totalorder %v864, %v736
    %vm1001 = vcmp.eq.s32.totalorder %v865, %v736
    %vm1002 = vcmp.eq.s32.totalorder %v866, %v736
    %vm1003 = vcmp.eq.s32.totalorder %v867, %v736
    %vm1004 = vcmp.eq.s32.totalorder %v868, %v736
    %vm1005 = vcmp.eq.s32.totalorder %v869, %v736
    %vm1006 = vcmp.eq.s32.totalorder %v870, %v736
    %vm1007 = vcmp.eq.s32.totalorder %v871, %v736
    %v1008 = vsel %vm880, 1, 0
    %v1009 = vsel %vm881, 1, 0
    %v1010 = vsel %vm882, 1, 0
    %v1011 = vsel %vm883, 1, 0
    %v1012 = vsel %vm884, 1, 0
    %v1013 = vsel %vm885, 1, 0
    %v1014 = vsel %vm886, 1, 0
    %v1015 = vsel %vm887, 1, 0
    %v1016 = vsel %vm888, 1, 0
    %v1017 = vsel %vm889, 1, 0
    %v1018 = vsel %vm890, 1, 0
    %v1019 = vsel %vm891, 1, 0
    %v1020 = vsel %vm892, 1, 0
    %v1021 = vsel %vm893, 1, 0
    %v1022 = vsel %vm894, 1, 0
    %v1023 = vsel %vm895, 1, 0
    %v1024 = vsel %vm896, 1, 0
    %v1025 = vsel %vm897, 1, 0
    %v1026 = vsel %vm898, 1, 0
    %v1027 = vsel %vm899, 1, 0
    %v1028 = vsel %vm900, 1, 0
    %v1029 = vsel %vm901, 1, 0
    %v1030 = vsel %vm902, 1, 0
    %v1031 = vsel %vm903, 1, 0
    %v1032 = vsel %vm904, 1, 0
    %v1033 = vsel %vm905, 1, 0
    %v1034 = vsel %vm906, 1, 0
    %v1035 = vsel %vm907, 1, 0
    %v1036 = vsel %vm908, 1, 0
    %v1037 = vsel %vm909, 1, 0
    %v1038 = vsel %vm910, 1, 0
    %v1039 = vsel %vm911, 1, 0
    %v1040 = vsel %vm912, 1, 0
    %v1041 = vsel %vm913, 1, 0
    %v1042 = vsel %vm914, 1, 0
    %v1043 = vsel %vm915, 1, 0
    %v1044 = vsel %vm916, 1, 0
    %v1045 = vsel %vm917, 1, 0
    %v1046 = vsel %vm918, 1, 0
    %v1047 = vsel %vm919, 1, 0
    %v1048 = vsel %vm920, 1, 0
    %v1049 = vsel %vm921, 1, 0
    %v1050 = vsel %vm922, 1, 0
    %v1051 = vsel %vm923, 1, 0
    %v1052 = vsel %vm924, 1, 0
    %v1053 = vsel %vm925, 1, 0
    %v1054 = vsel %vm926, 1, 0
    %v1055 = vsel %vm927, 1, 0
    %v1056 = vsel %vm928, 1, 0
    %v1057 = vsel %vm929, 1, 0
    %v1058 = vsel %vm930, 1, 0
    %v1059 = vsel %vm931, 1, 0
    %v1060 = vsel %vm932, 1, 0
    %v1061 = vsel %vm933, 1, 0
    %v1062 = vsel %vm934, 1, 0
    %v1063 = vsel %vm935, 1, 0
    %v1064 = vsel %vm936, 1, 0
    %v1065 = vsel %vm937, 1, 0
    %v1066 = vsel %vm938, 1, 0
    %v1067 = vsel %vm939, 1, 0
    %v1068 = vsel %vm940, 1, 0
    %v1069 = vsel %vm941, 1, 0
    %v1070 = vsel %vm942, 1, 0
    %v1071 = vsel %vm943, 1, 0
    %v1072 = vsel %vm944, 1, 0
    %v1073 = vsel %vm945, 1, 0
    %v1074 = vsel %vm946, 1, 0
    %v1075 = vsel %vm947, 1, 0
    %v1076 = vsel %vm948, 1, 0
    %v1077 = vsel %vm949, 1, 0
    %v1078 = vsel %vm950, 1, 0
    %v1079 = vsel %vm951, 1, 0
    %v1080 = vsel %vm952, 1, 0
    %v1081 = vsel %vm953, 1, 0
    %v1082 = vsel %vm954, 1, 0
    %v1083 = vsel %vm955, 1, 0
    %v1084 = vsel %vm956, 1, 0
    %v1085 = vsel %vm957, 1, 0
    %v1086 = vsel %vm958, 1, 0
    %v1087 = vsel %vm959, 1, 0
    %v1088 = vsel %vm960, 1, 0
    %v1089 = vsel %vm961, 1, 0
    %v1090 = vsel %vm962, 1, 0
    %v1091 = vsel %vm963, 1, 0
    %v1092 = vsel %vm964, 1, 0
    %v1093 = vsel %vm965, 1, 0
    %v1094 = vsel %vm966, 1, 0
    %v1095 = vsel %vm967, 1, 0
    %v1096 = vsel %vm968, 1, 0
    %v1097 = vsel %vm969, 1, 0
    %v1098 = vsel %vm970, 1, 0
    %v1099 = vsel %vm971, 1, 0
    %v1100 = vsel %vm972, 1, 0
    %v1101 = vsel %vm973, 1, 0
    %v1102 = vsel %vm974, 1, 0
    %v1103 = vsel %vm975, 1, 0
    %v1104 = vsel %vm976, 1, 0
    %v1105 = vsel %vm977, 1, 0
    %v1106 = vsel %vm978, 1, 0
    %v1107 = vsel %vm979, 1, 0
    %v1108 = vsel %vm980, 1, 0
    %v1109 = vsel %vm981, 1, 0
    %v1110 = vsel %vm982, 1, 0
    %v1111 = vsel %vm983, 1, 0
    %v1112 = vsel %vm984, 1, 0
    %v1113 = vsel %vm985, 1, 0
    %v1114 = vsel %vm986, 1, 0
    %v1115 = vsel %vm987, 1, 0
    %v1116 = vsel %vm988, 1, 0
    %v1117 = vsel %vm989, 1, 0
    %v1118 = vsel %vm990, 1, 0
    %v1119 = vsel %vm991, 1, 0
    %v1120 = vsel %vm992, 1, 0
    %v1121 = vsel %vm993, 1, 0
    %v1122 = vsel %vm994, 1, 0
    %v1123 = vsel %vm995, 1, 0
    %v1124 = vsel %vm996, 1, 0
    %v1125 = vsel %vm997, 1, 0
    %v1126 = vsel %vm998, 1, 0
    %v1127 = vsel %vm999, 1, 0
    %v1128 = vsel %vm1000, 1, 0
    %v1129 = vsel %vm1001, 1, 0
    %v1130 = vsel %vm1002, 1, 0
    %v1131 = vsel %vm1003, 1, 0
    %v1132 = vsel %vm1004, 1, 0
    %v1133 = vsel %vm1005, 1, 0
    %v1134 = vsel %vm1006, 1, 0
    %v1135 = vsel %vm1007, 1, 0
    %v1136 = vcvt.s32.f32 %v1008
    %v1137 = vcvt.s32.f32 %v1009
    %v1138 = vcvt.s32.f32 %v1010
    %v1139 = vcvt.s32.f32 %v1011
    %v1140 = vcvt.s32.f32 %v1012
    %v1141 = vcvt.s32.f32 %v1013
    %v1142 = vcvt.s32.f32 %v1014
    %v1143 = vcvt.s32.f32 %v1015
    %v1144 = vcvt.s32.f32 %v1016
    %v1145 = vcvt.s32.f32 %v1017
    %v1146 = vcvt.s32.f32 %v1018
    %v1147 = vcvt.s32.f32 %v1019
    %v1148 = vcvt.s32.f32 %v1020
    %v1149 = vcvt.s32.f32 %v1021
    %v1150 = vcvt.s32.f32 %v1022
    %v1151 = vcvt.s32.f32 %v1023
    %v1152 = vcvt.s32.f32 %v1024
    %v1153 = vcvt.s32.f32 %v1025
    %v1154 = vcvt.s32.f32 %v1026
    %v1155 = vcvt.s32.f32 %v1027
    %v1156 = vcvt.s32.f32 %v1028
    %v1157 = vcvt.s32.f32 %v1029
    %v1158 = vcvt.s32.f32 %v1030
    %v1159 = vcvt.s32.f32 %v1031
    %v1160 = vcvt.s32.f32 %v1032
    %v1161 = vcvt.s32.f32 %v1033
    %v1162 = vcvt.s32.f32 %v1034
    %v1163 = vcvt.s32.f32 %v1035
    %v1164 = vcvt.s32.f32 %v1036
    %v1165 = vcvt.s32.f32 %v1037
    %v1166 = vcvt.s32.f32 %v1038
    %v1167 = vcvt.s32.f32 %v1039
    %v1168 = vcvt.s32.f32 %v1040
    %v1169 = vcvt.s32.f32 %v1041
    %v1170 = vcvt.s32.f32 %v1042
    %v1171 = vcvt.s32.f32 %v1043
    %v1172 = vcvt.s32.f32 %v1044
    %v1173 = vcvt.s32.f32 %v1045
    %v1174 = vcvt.s32.f32 %v1046
    %v1175 = vcvt.s32.f32 %v1047
    %v1176 = vcvt.s32.f32 %v1048
    %v1177 = vcvt.s32.f32 %v1049
    %v1178 = vcvt.s32.f32 %v1050
    %v1179 = vcvt.s32.f32 %v1051
    %v1180 = vcvt.s32.f32 %v1052
    %v1181 = vcvt.s32.f32 %v1053
    %v1182 = vcvt.s32.f32 %v1054
    %v1183 = vcvt.s32.f32 %v1055
    %v1184 = vcvt.s32.f32 %v1056
    %v1185 = vcvt.s32.f32 %v1057
    %v1186 = vcvt.s32.f32 %v1058
    %v1187 = vcvt.s32.f32 %v1059
    %v1188 = vcvt.s32.f32 %v1060
    %v1189 = vcvt.s32.f32 %v1061
    %v1190 = vcvt.s32.f32 %v1062
    %v1191 = vcvt.s32.f32 %v1063
    %v1192 = vcvt.s32.f32 %v1064
    %v1193 = vcvt.s32.f32 %v1065
    %v1194 = vcvt.s32.f32 %v1066
    %v1195 = vcvt.s32.f32 %v1067
    %v1196 = vcvt.s32.f32 %v1068
    %v1197 = vcvt.s32.f32 %v1069
    %v1198 = vcvt.s32.f32 %v1070
    %v1199 = vcvt.s32.f32 %v1071
    %v1200 = vcvt.s32.f32 %v1072
    %v1201 = vcvt.s32.f32 %v1073
    %v1202 = vcvt.s32.f32 %v1074
    %v1203 = vcvt.s32.f32 %v1075
    %v1204 = vcvt.s32.f32 %v1076
    %v1205 = vcvt.s32.f32 %v1077
    %v1206 = vcvt.s32.f32 %v1078
    %v1207 = vcvt.s32.f32 %v1079
    %v1208 = vcvt.s32.f32 %v1080
    %v1209 = vcvt.s32.f32 %v1081
    %v1210 = vcvt.s32.f32 %v1082
    %v1211 = vcvt.s32.f32 %v1083
    %v1212 = vcvt.s32.f32 %v1084
    %v1213 = vcvt.s32.f32 %v1085
    %v1214 = vcvt.s32.f32 %v1086
    %v1215 = vcvt.s32.f32 %v1087
    %v1216 = vcvt.s32.f32 %v1088
    %v1217 = vcvt.s32.f32 %v1089
    %v1218 = vcvt.s32.f32 %v1090
    %v1219 = vcvt.s32.f32 %v1091
    %v1220 = vcvt.s32.f32 %v1092
    %v1221 = vcvt.s32.f32 %v1093
    %v1222 = vcvt.s32.f32 %v1094
    %v1223 = vcvt.s32.f32 %v1095
    %v1224 = vcvt.s32.f32 %v1096
    %v1225 = vcvt.s32.f32 %v1097
    %v1226 = vcvt.s32.f32 %v1098
    %v1227 = vcvt.s32.f32 %v1099
    %v1228 = vcvt.s32.f32 %v1100
    %v1229 = vcvt.s32.f32 %v1101
    %v1230 = vcvt.s32.f32 %v1102
    %v1231 = vcvt.s32.f32 %v1103
    %v1232 = vcvt.s32.f32 %v1104
    %v1233 = vcvt.s32.f32 %v1105
    %v1234 = vcvt.s32.f32 %v1106
    %v1235 = vcvt.s32.f32 %v1107
    %v1236 = vcvt.s32.f32 %v1108
    %v1237 = vcvt.s32.f32 %v1109
    %v1238 = vcvt.s32.f32 %v1110
    %v1239 = vcvt.s32.f32 %v1111
    %v1240 = vcvt.s32.f32 %v1112
    %v1241 = vcvt.s32.f32 %v1113
    %v1242 = vcvt.s32.f32 %v1114
    %v1243 = vcvt.s32.f32 %v1115
    %v1244 = vcvt.s32.f32 %v1116
    %v1245 = vcvt.s32.f32 %v1117
    %v1246 = vcvt.s32.f32 %v1118
    %v1247 = vcvt.s32.f32 %v1119
    %v1248 = vcvt.s32.f32 %v1120
    %v1249 = vcvt.s32.f32 %v1121
    %v1250 = vcvt.s32.f32 %v1122
    %v1251 = vcvt.s32.f32 %v1123
    %v1252 = vcvt.s32.f32 %v1124
    %v1253 = vcvt.s32.f32 %v1125
    %v1254 = vcvt.s32.f32 %v1126
    %v1255 = vcvt.s32.f32 %v1127
    %v1256 = vcvt.s32.f32 %v1128
    %v1257 = vcvt.s32.f32 %v1129
    %v1258 = vcvt.s32.f32 %v1130
    %v1259 = vcvt.s32.f32 %v1131
    %v1260 = vcvt.s32.f32 %v1132
    %v1261 = vcvt.s32.f32 %v1133
    %v1262 = vcvt.s32.f32 %v1134
    %v1263 = vcvt.s32.f32 %v1135
    %vm1264 = vcmp.eq.s32.totalorder %v872, %v607
    %vm1265 = vcmp.eq.s32.totalorder %v873, %v607
    %vm1266 = vcmp.eq.s32.totalorder %v874, %v607
    %vm1267 = vcmp.eq.s32.totalorder %v875, %v607
    %vm1268 = vcmp.eq.s32.totalorder %v876, %v607
    %vm1269 = vcmp.eq.s32.totalorder %v877, %v607
    %vm1270 = vcmp.eq.s32.totalorder %v878, %v607
    %vm1271 = vcmp.eq.s32.totalorder %v879, %v607
    %vm1272 = vcmp.eq.s32.totalorder %v872, %v608
    %vm1273 = vcmp.eq.s32.totalorder %v873, %v608
    %vm1274 = vcmp.eq.s32.totalorder %v874, %v608
    %vm1275 = vcmp.eq.s32.totalorder %v875, %v608
    %vm1276 = vcmp.eq.s32.totalorder %v876, %v608
    %vm1277 = vcmp.eq.s32.totalorder %v877, %v608
    %vm1278 = vcmp.eq.s32.totalorder %v878, %v608
    %vm1279 = vcmp.eq.s32.totalorder %v879, %v608
    %vm1280 = vcmp.eq.s32.totalorder %v872, %v609
    %vm1281 = vcmp.eq.s32.totalorder %v873, %v609
    %vm1282 = vcmp.eq.s32.totalorder %v874, %v609
    %vm1283 = vcmp.eq.s32.totalorder %v875, %v609
    %vm1284 = vcmp.eq.s32.totalorder %v876, %v609
    %vm1285 = vcmp.eq.s32.totalorder %v877, %v609
    %vm1286 = vcmp.eq.s32.totalorder %v878, %v609
    %vm1287 = vcmp.eq.s32.totalorder %v879, %v609
    %vm1288 = vcmp.eq.s32.totalorder %v872, %v610
    %vm1289 = vcmp.eq.s32.totalorder %v873, %v610
    %vm1290 = vcmp.eq.s32.totalorder %v874, %v610
    %vm1291 = vcmp.eq.s32.totalorder %v875, %v610
    %vm1292 = vcmp.eq.s32.totalorder %v876, %v610
    %vm1293 = vcmp.eq.s32.totalorder %v877, %v610
    %vm1294 = vcmp.eq.s32.totalorder %v878, %v610
    %vm1295 = vcmp.eq.s32.totalorder %v879, %v610
    %v1296 = vsel %vm1264, 1, 0
    %v1297 = vsel %vm1265, 1, 0
    %v1298 = vsel %vm1266, 1, 0
    %v1299 = vsel %vm1267, 1, 0
    %v1300 = vsel %vm1268, 1, 0
    %v1301 = vsel %vm1269, 1, 0
    %v1302 = vsel %vm1270, 1, 0
    %v1303 = vsel %vm1271, 1, 0
    %v1304 = vsel %vm1272, 1, 0
    %v1305 = vsel %vm1273, 1, 0
    %v1306 = vsel %vm1274, 1, 0
    %v1307 = vsel %vm1275, 1, 0
    %v1308 = vsel %vm1276, 1, 0
    %v1309 = vsel %vm1277, 1, 0
    %v1310 = vsel %vm1278, 1, 0
    %v1311 = vsel %vm1279, 1, 0
    %v1312 = vsel %vm1280, 1, 0
    %v1313 = vsel %vm1281, 1, 0
    %v1314 = vsel %vm1282, 1, 0
    %v1315 = vsel %vm1283, 1, 0
    %v1316 = vsel %vm1284, 1, 0
    %v1317 = vsel %vm1285, 1, 0
    %v1318 = vsel %vm1286, 1, 0
    %v1319 = vsel %vm1287, 1, 0
    %v1320 = vsel %vm1288, 1, 0
    %v1321 = vsel %vm1289, 1, 0
    %v1322 = vsel %vm1290, 1, 0
    %v1323 = vsel %vm1291, 1, 0
    %v1324 = vsel %vm1292, 1, 0
    %v1325 = vsel %vm1293, 1, 0
    %v1326 = vsel %vm1294, 1, 0
    %v1327 = vsel %vm1295, 1, 0
    %v1328 = vcvt.s32.f32 %v1296
    %v1329 = vcvt.s32.f32 %v1297
    %v1330 = vcvt.s32.f32 %v1298
    %v1331 = vcvt.s32.f32 %v1299
    %v1332 = vcvt.s32.f32 %v1300
    %v1333 = vcvt.s32.f32 %v1301
    %v1334 = vcvt.s32.f32 %v1302
    %v1335 = vcvt.s32.f32 %v1303
    %v1336 = vcvt.s32.f32 %v1304
    %v1337 = vcvt.s32.f32 %v1305
    %v1338 = vcvt.s32.f32 %v1306
    %v1339 = vcvt.s32.f32 %v1307
    %v1340 = vcvt.s32.f32 %v1308
    %v1341 = vcvt.s32.f32 %v1309
    %v1342 = vcvt.s32.f32 %v1310
    %v1343 = vcvt.s32.f32 %v1311
    %v1344 = vcvt.s32.f32 %v1312
    %v1345 = vcvt.s32.f32 %v1313
    %v1346 = vcvt.s32.f32 %v1314
    %v1347 = vcvt.s32.f32 %v1315
    %v1348 = vcvt.s32.f32 %v1316
    %v1349 = vcvt.s32.f32 %v1317
    %v1350 = vcvt.s32.f32 %v1318
    %v1351 = vcvt.s32.f32 %v1319
    %v1352 = vcvt.s32.f32 %v1320
    %v1353 = vcvt.s32.f32 %v1321
    %v1354 = vcvt.s32.f32 %v1322
    %v1355 = vcvt.s32.f32 %v1323
    %v1356 = vcvt.s32.f32 %v1324
    %v1357 = vcvt.s32.f32 %v1325
    %v1358 = vcvt.s32.f32 %v1326
    %v1359 = vcvt.s32.f32 %v1327
    %v1360 = vand.u32 2147483647, %v365
    %v1361 = vand.u32 2147483647, %v367
    %v1362 = vand.u32 2147483647, %v442
    %v1363 = vand.u32 2147483647, %v444
    %v1364 = vand.u32 2147483647, %v519
    %v1365 = vand.u32 2147483647, %v521
    %v1366 = vand.u32 2147483647, %v596
    %v1367 = vand.u32 2147483647, %v598
    %v1368 = vand.u32 2147483647, %v371
    %v1369 = vand.u32 2147483647, %v373
    %v1370 = vand.u32 2147483647, %v448
    %v1371 = vand.u32 2147483647, %v450
    %v1372 = vand.u32 2147483647, %v525
    %v1373 = vand.u32 2147483647, %v527
    %v1374 = vand.u32 2147483647, %v602
    %v1375 = vand.u32 2147483647, %v604
    %v1376 = vpow.f32 %v1360, 1.2
    %v1377 = vpow.f32 %v1361, 1.2
    %v1378 = vpow.f32 %v1362, 1.2
    %v1379 = vpow.f32 %v1363, 1.2
    %v1380 = vpow.f32 %v1364, 1.2
    %v1381 = vpow.f32 %v1365, 1.2
    %v1382 = vpow.f32 %v1366, 1.2
    %v1383 = vpow.f32 %v1367, 1.2
    %v1384 = vpow.f32 %v1368, 1.2
    %v1385 = vpow.f32 %v1369, 1.2
    %v1386 = vpow.f32 %v1370, 1.2
    %v1387 = vpow.f32 %v1371, 1.2
    %v1388 = vpow.f32 %v1372, 1.2
    %v1389 = vpow.f32 %v1373, 1.2
    %v1390 = vpow.f32 %v1374, 1.2
    %v1391 = vpow.f32 %v1375, 1.2
    %1392 = vmatprep.subr.mxu0 0.0
    %1393 = vmatpush1.msra.mxu0 %v1136
    %1394 = vmatprep.subr.mxu0 0.0
    %1395 = vmatpush1.msra.mxu0 %v1137
    %1396 = vmatprep.subr.mxu0 0.0
    %1397 = vmatpush1.msra.mxu0 %v1138
    %1398 = vmatprep.subr.mxu0 0.0
    %1399 = vmatpush1.msra.mxu0 %v1139
    %1400 = vmatprep.subr.mxu0 0.0
    %1401 = vmatpush1.msra.mxu0 %v1140
    %1402 = vmatprep.subr.mxu0 0.0
    %1403 = vmatpush1.msra.mxu0 %v1141
    %1404 = vmatprep.subr.mxu0 0.0
    %1405 = vmatpush1.msra.mxu0 %v1142
    %1406 = vmatprep.subr.mxu0 0.0
    %1407 = vmatpush1.msra.mxu0 %v1143
    %1408 = vmatprep.subr.mxu0 0.0
    %1409 = vmatpush1.msra.mxu0 %v1144
    %1410 = vmatprep.subr.mxu0 0.0
    %1411 = vmatpush1.msra.mxu0 %v1145
    %1412 = vmatprep.subr.mxu0 0.0
    %1413 = vmatpush1.msra.mxu0 %v1146
    %1414 = vmatprep.subr.mxu0 0.0
    %1415 = vmatpush1.msra.mxu0 %v1147
    %1416 = vmatprep.subr.mxu0 0.0
    %1417 = vmatpush1.msra.mxu0 %v1148
    %1418 = vmatprep.subr.mxu0 0.0
    %1419 = vmatpush1.msra.mxu0 %v1149
    %1420 = vmatprep.subr.mxu0 0.0
    %1421 = vmatpush1.msra.mxu0 %v1150
    %1422 = vmatprep.subr.mxu0 0.0
    %1423 = vmatpush1.msra.mxu0 %v1151
    %1424 = vmatprep.subr.mxu0 0.0
    %1425 = vmatpush1.msra.mxu0 %v1152
    %1426 = vmatprep.subr.mxu0 0.0
    %1427 = vmatpush1.msra.mxu0 %v1153
    %1428 = vmatprep.subr.mxu0 0.0
    %1429 = vmatpush1.msra.mxu0 %v1154
    %1430 = vmatprep.subr.mxu0 0.0
    %1431 = vmatpush1.msra.mxu0 %v1155
    %1432 = vmatprep.subr.mxu0 0.0
    %1433 = vmatpush1.msra.mxu0 %v1156
    %1434 = vmatprep.subr.mxu0 0.0
    %1435 = vmatpush1.msra.mxu0 %v1157
    %1436 = vmatprep.subr.mxu0 0.0
    %1437 = vmatpush1.msra.mxu0 %v1158
    %1438 = vmatprep.subr.mxu0 0.0
    %1439 = vmatpush1.msra.mxu0 %v1159
    %1440 = vmatprep.subr.mxu0 0.0
    %1441 = vmatpush1.msra.mxu0 %v1160
    %1442 = vmatprep.subr.mxu0 0.0
    %1443 = vmatpush1.msra.mxu0 %v1161
    %1444 = vmatprep.subr.mxu0 0.0
    %1445 = vmatpush1.msra.mxu0 %v1162
    %1446 = vmatprep.subr.mxu0 0.0
    %1447 = vmatpush1.msra.mxu0 %v1163
    %1448 = vmatprep.subr.mxu0 0.0
    %1449 = vmatpush1.msra.mxu0 %v1164
    %1450 = vmatprep.subr.mxu0 0.0
    %1451 = vmatpush1.msra.mxu0 %v1165
    %1452 = vmatprep.subr.mxu0 0.0
    %1453 = vmatpush1.msra.mxu0 %v1166
    %1454 = vmatprep.subr.mxu0 0.0
    %1455 = vmatpush1.msra.mxu0 %v1167
    %1456 = vmatprep.mubr.f32.mxu0 %v1377
    %1457 = vmatmul.mubr.f32.gmra.mrb[0].mxu0 %v1376
    %v1458 = vpop.f32.mrb[0].mxu0
    %v1459 = vadd.f32 0.0, %v1458
    %v1460 = vpop.f32.mrb[0].mxu0
    %1461 = vmatprep.mubr.f32.mxu0 %v1385
    %1462 = vmatmul.mubr.f32.gmra.mrb[0].mxu0 %v1384
    %v1463 = vpop.f32.mrb[0].mxu0
    %v1464 = vadd.f32 0.0, %v1463
    %v1465 = vpop.f32.mrb[0].mxu0
    %1466 = vdwg.mxu0
    %1467 = vmatprep.subr.mxu0 0.0
    %1468 = vmatpush1.msra.mxu0 %v1168
    %1469 = vmatprep.subr.mxu0 0.0
    %1470 = vmatpush1.msra.mxu0 %v1169
    %1471 = vmatprep.subr.mxu0 0.0
    %1472 = vmatpush1.msra.mxu0 %v1170
    %1473 = vmatprep.subr.mxu0 0.0
    %1474 = vmatpush1.msra.mxu0 %v1171
    %1475 = vmatprep.subr.mxu0 0.0
    %1476 = vmatpush1.msra.mxu0 %v1172
    %1477 = vmatprep.subr.mxu0 0.0
    %1478 = vmatpush1.msra.mxu0 %v1173
    %1479 = vmatprep.subr.mxu0 0.0
    %1480 = vmatpush1.msra.mxu0 %v1174
    %1481 = vmatprep.subr.mxu0 0.0
    %1482 = vmatpush1.msra.mxu0 %v1175
    %1483 = vmatprep.subr.mxu0 0.0
    %1484 = vmatpush1.msra.mxu0 %v1176
    %1485 = vmatprep.subr.mxu0 0.0
    %1486 = vmatpush1.msra.mxu0 %v1177
    %1487 = vmatprep.subr.mxu0 0.0
    %1488 = vmatpush1.msra.mxu0 %v1178
    %1489 = vmatprep.subr.mxu0 0.0
    %1490 = vmatpush1.msra.mxu0 %v1179
    %1491 = vmatprep.subr.mxu0 0.0
    %1492 = vmatpush1.msra.mxu0 %v1180
    %1493 = vmatprep.subr.mxu0 0.0
    %1494 = vmatpush1.msra.mxu0 %v1181
    %1495 = vmatprep.subr.mxu0 0.0
    %1496 = vmatpush1.msra.mxu0 %v1182
    %1497 = vmatprep.subr.mxu0 0.0
    %1498 = vmatpush1.msra.mxu0 %v1183
    %1499 = vmatprep.subr.mxu0 0.0
    %1500 = vmatpush1.msra.mxu0 %v1184
    %1501 = vmatprep.subr.mxu0 0.0
    %1502 = vmatpush1.msra.mxu0 %v1185
    %1503 = vmatprep.subr.mxu0 0.0
    %1504 = vmatpush1.msra.mxu0 %v1186
    %1505 = vmatprep.subr.mxu0 0.0
    %1506 = vmatpush1.msra.mxu0 %v1187
    %1507 = vmatprep.subr.mxu0 0.0
    %1508 = vmatpush1.msra.mxu0 %v1188
    %1509 = vmatprep.subr.mxu0 0.0
    %1510 = vmatpush1.msra.mxu0 %v1189
    %1511 = vmatprep.subr.mxu0 0.0
    %1512 = vmatpush1.msra.mxu0 %v1190
    %1513 = vmatprep.subr.mxu0 0.0
    %1514 = vmatpush1.msra.mxu0 %v1191
    %1515 = vmatprep.subr.mxu0 0.0
    %1516 = vmatpush1.msra.mxu0 %v1192
    %1517 = vmatprep.subr.mxu0 0.0
    %1518 = vmatpush1.msra.mxu0 %v1193
    %1519 = vmatprep.subr.mxu0 0.0
    %1520 = vmatpush1.msra.mxu0 %v1194
    %1521 = vmatprep.subr.mxu0 0.0
    %1522 = vmatpush1.msra.mxu0 %v1195
    %1523 = vmatprep.subr.mxu0 0.0
    %1524 = vmatpush1.msra.mxu0 %v1196
    %1525 = vmatprep.subr.mxu0 0.0
    %1526 = vmatpush1.msra.mxu0 %v1197
    %1527 = vmatprep.subr.mxu0 0.0
    %1528 = vmatpush1.msra.mxu0 %v1198
    %1529 = vmatprep.subr.mxu0 0.0
    %1530 = vmatpush1.msra.mxu0 %v1199
    %1531 = vmatprep.mubr.f32.mxu0 %v1379
    %1532 = vmatmul.mubr.f32.gmra.mrb[0].mxu0 %v1378
    %v1533 = vpop.f32.mrb[0].mxu0
    %v1534 = vadd.f32 %v1459, %v1533
    %v1535 = vpop.f32.mrb[0].mxu0
    %1536 = vmatprep.mubr.f32.mxu0 %v1387
    %1537 = vmatmul.mubr.f32.gmra.mrb[0].mxu0 %v1386
    %v1538 = vpop.f32.mrb[0].mxu0
    %v1539 = vadd.f32 %v1464, %v1538
    %v1540 = vpop.f32.mrb[0].mxu0
    %1541 = vdwg.mxu0
    %1542 = vmatprep.subr.mxu0 0.0
    %1543 = vmatpush1.msra.mxu0 %v1200
    %1544 = vmatprep.subr.mxu0 0.0
    %1545 = vmatpush1.msra.mxu0 %v1201
    %1546 = vmatprep.subr.mxu0 0.0
    %1547 = vmatpush1.msra.mxu0 %v1202
    %1548 = vmatprep.subr.mxu0 0.0
    %1549 = vmatpush1.msra.mxu0 %v1203
    %1550 = vmatprep.subr.mxu0 0.0
    %1551 = vmatpush1.msra.mxu0 %v1204
    %1552 = vmatprep.subr.mxu0 0.0
    %1553 = vmatpush1.msra.mxu0 %v1205
    %1554 = vmatprep.subr.mxu0 0.0
    %1555 = vmatpush1.msra.mxu0 %v1206
    %1556 = vmatprep.subr.mxu0 0.0
    %1557 = vmatpush1.msra.mxu0 %v1207
    %1558 = vmatprep.subr.mxu0 0.0
    %1559 = vmatpush1.msra.mxu0 %v1208
    %1560 = vmatprep.subr.mxu0 0.0
    %1561 = vmatpush1.msra.mxu0 %v1209
    %1562 = vmatprep.subr.mxu0 0.0
    %1563 = vmatpush1.msra.mxu0 %v1210
    %1564 = vmatprep.subr.mxu0 0.0
    %1565 = vmatpush1.msra.mxu0 %v1211
    %1566 = vmatprep.subr.mxu0 0.0
    %1567 = vmatpush1.msra.mxu0 %v1212
    %1568 = vmatprep.subr.mxu0 0.0
    %1569 = vmatpush1.msra.mxu0 %v1213
    %1570 = vmatprep.subr.mxu0 0.0
    %1571 = vmatpush1.msra.mxu0 %v1214
    %1572 = vmatprep.subr.mxu0 0.0
    %1573 = vmatpush1.msra.mxu0 %v1215
    %1574 = vmatprep.subr.mxu0 0.0
    %1575 = vmatpush1.msra.mxu0 %v1216
    %1576 = vmatprep.subr.mxu0 0.0
    %1577 = vmatpush1.msra.mxu0 %v1217
    %1578 = vmatprep.subr.mxu0 0.0
    %1579 = vmatpush1.msra.mxu0 %v1218
    %1580 = vmatprep.subr.mxu0 0.0
    %1581 = vmatpush1.msra.mxu0 %v1219
    %1582 = vmatprep.subr.mxu0 0.0
    %1583 = vmatpush1.msra.mxu0 %v1220
    %1584 = vmatprep.subr.mxu0 0.0
    %1585 = vmatpush1.msra.mxu0 %v1221
    %1586 = vmatprep.subr.mxu0 0.0
    %1587 = vmatpush1.msra.mxu0 %v1222
    %1588 = vmatprep.subr.mxu0 0.0
    %1589 = vmatpush1.msra.mxu0 %v1223
    %1590 = vmatprep.subr.mxu0 0.0
    %1591 = vmatpush1.msra.mxu0 %v1224
    %1592 = vmatprep.subr.mxu0 0.0
    %1593 = vmatpush1.msra.mxu0 %v1225
    %1594 = vmatprep.subr.mxu0 0.0
    %1595 = vmatpush1.msra.mxu0 %v1226
    %1596 = vmatprep.subr.mxu0 0.0
    %1597 = vmatpush1.msra.mxu0 %v1227
    %1598 = vmatprep.subr.mxu0 0.0
    %1599 = vmatpush1.msra.mxu0 %v1228
    %1600 = vmatprep.subr.mxu0 0.0
    %1601 = vmatpush1.msra.mxu0 %v1229
    %1602 = vmatprep.subr.mxu0 0.0
    %1603 = vmatpush1.msra.mxu0 %v1230
    %1604 = vmatprep.subr.mxu0 0.0
    %1605 = vmatpush1.msra.mxu0 %v1231
    %1606 = vmatprep.mubr.f32.mxu0 %v1381
    %1607 = vmatmul.mubr.f32.gmra.mrb[0].mxu0 %v1380
    %v1608 = vpop.f32.mrb[0].mxu0
    %v1609 = vadd.f32 %v1534, %v1608
    %v1610 = vpop.f32.mrb[0].mxu0
    %1611 = vmatprep.mubr.f32.mxu0 %v1389
    %1612 = vmatmul.mubr.f32.gmra.mrb[0].mxu0 %v1388
    %v1613 = vpop.f32.mrb[0].mxu0
    %v1614 = vadd.f32 %v1539, %v1613
    %v1615 = vpop.f32.mrb[0].mxu0
    %1616 = vdwg.mxu0
    %1617 = vmatprep.subr.mxu0 0.0
    %1618 = vmatpush1.msra.mxu0 %v1232
    %1619 = vmatprep.subr.mxu0 0.0
    %1620 = vmatpush1.msra.mxu0 %v1233
    %1621 = vmatprep.subr.mxu0 0.0
    %1622 = vmatpush1.msra.mxu0 %v1234
    %1623 = vmatprep.subr.mxu0 0.0
    %1624 = vmatpush1.msra.mxu0 %v1235
    %1625 = vmatprep.subr.mxu0 0.0
    %1626 = vmatpush1.msra.mxu0 %v1236
    %1627 = vmatprep.subr.mxu0 0.0
    %1628 = vmatpush1.msra.mxu0 %v1237
    %1629 = vmatprep.subr.mxu0 0.0
    %1630 = vmatpush1.msra.mxu0 %v1238
    %1631 = vmatprep.subr.mxu0 0.0
    %1632 = vmatpush1.msra.mxu0 %v1239
    %1633 = vmatprep.subr.mxu0 0.0
    %1634 = vmatpush1.msra.mxu0 %v1240
    %1635 = vmatprep.subr.mxu0 0.0
    %1636 = vmatpush1.msra.mxu0 %v1241
    %1637 = vmatprep.subr.mxu0 0.0
    %1638 = vmatpush1.msra.mxu0 %v1242
    %1639 = vmatprep.subr.mxu0 0.0
    %1640 = vmatpush1.msra.mxu0 %v1243
    %1641 = vmatprep.subr.mxu0 0.0
    %1642 = vmatpush1.msra.mxu0 %v1244
    %1643 = vmatprep.subr.mxu0 0.0
    %1644 = vmatpush1.msra.mxu0 %v1245
    %1645 = vmatprep.subr.mxu0 0.0
    %1646 = vmatpush1.msra.mxu0 %v1246
    %1647 = vmatprep.subr.mxu0 0.0
    %1648 = vmatpush1.msra.mxu0 %v1247
    %1649 = vmatprep.subr.mxu0 0.0
    %1650 = vmatpush1.msra.mxu0 %v1248
    %1651 = vmatprep.subr.mxu0 0.0
    %1652 = vmatpush1.msra.mxu0 %v1249
    %1653 = vmatprep.subr.mxu0 0.0
    %1654 = vmatpush1.msra.mxu0 %v1250
    %1655 = vmatprep.subr.mxu0 0.0
    %1656 = vmatpush1.msra.mxu0 %v1251
    %1657 = vmatprep.subr.mxu0 0.0
    %1658 = vmatpush1.msra.mxu0 %v1252
    %1659 = vmatprep.subr.mxu0 0.0
    %1660 = vmatpush1.msra.mxu0 %v1253
    %1661 = vmatprep.subr.mxu0 0.0
    %1662 = vmatpush1.msra.mxu0 %v1254
    %1663 = vmatprep.subr.mxu0 0.0
    %1664 = vmatpush1.msra.mxu0 %v1255
    %1665 = vmatprep.subr.mxu0 0.0
    %1666 = vmatpush1.msra.mxu0 %v1256
    %1667 = vmatprep.subr.mxu0 0.0
    %1668 = vmatpush1.msra.mxu0 %v1257
    %1669 = vmatprep.subr.mxu0 0.0
    %1670 = vmatpush1.msra.mxu0 %v1258
    %1671 = vmatprep.subr.mxu0 0.0
    %1672 = vmatpush1.msra.mxu0 %v1259
    %1673 = vmatprep.subr.mxu0 0.0
    %1674 = vmatpush1.msra.mxu0 %v1260
    %1675 = vmatprep.subr.mxu0 0.0
    %1676 = vmatpush1.msra.mxu0 %v1261
    %1677 = vmatprep.subr.mxu0 0.0
    %1678 = vmatpush1.msra.mxu0 %v1262
    %1679 = vmatprep.subr.mxu0 0.0
    %1680 = vmatpush1.msra.mxu0 %v1263
    %1681 = vmatprep.mubr.f32.mxu0 %v1383
    %1682 = vmatmul.mubr.f32.gmra.mrb[0].mxu0 %v1382
    %v1683 = vpop.f32.mrb[0].mxu0
    %v1684 = vadd.f32 %v1609, %v1683
    %v1685 = vpop.f32.mrb[0].mxu0
    %1686 = vmatprep.mubr.f32.mxu0 %v1391
    %1687 = vmatmul.mubr.f32.gmra.mrb[0].mxu0 %v1390
    %v1688 = vpop.f32.mrb[0].mxu0
    %v1689 = vadd.f32 %v1614, %v1688
    %v1690 = vpop.f32.mrb[0].mxu0
    %1691 = vdwg.mxu0
    %v1692 = vpow.f32 %v1684, 0.8333333
    %v1693 = vpow.f32 %v1689, 0.8333333
    %v1694 = vrcp.pop %v1692
    %v1695 = vmul.f32 1.0, %v1694
    %v1696 = vrcp.pop %v1693
    %v1697 = vmul.f32 1.0, %v1696
    %v1699 = vsel %vm46, %v1695, 0
    %v1702 = vsel %vm46, %v1697, 0
    %1704 = vmatprep.subr.mxu0 %v1329
    %1705 = vmatpush1.msra.mxu0 %v1328
    %1706 = vmatprep.subr.mxu0 %v1337
    %1707 = vmatpush1.msra.mxu0 %v1336
    %1708 = vmatprep.subr.mxu0 %v1345
    %1709 = vmatpush1.msra.mxu0 %v1344
    %1710 = vmatprep.subr.mxu0 %v1353
    %1711 = vmatpush1.msra.mxu0 %v1352
    %1712 = vmatprep.subr.mxu0 0.0
    %1713 = vmatpush1.msra.mxu0 0.0
    %1714 = vmatprep.subr.mxu0 0.0
    %1715 = vmatpush1.msra.mxu0 0.0
    %1716 = vmatprep.subr.mxu0 0.0
    %1717 = vmatpush1.msra.mxu0 0.0
    %1718 = vmatprep.subr.mxu0 0.0
    %1719 = vmatpush1.msra.mxu0 0.0
    %1720 = vmatprep.subr.mxu0 0.0
    %1721 = vmatpush1.msra.mxu0 0.0
    %1722 = vmatprep.subr.mxu0 0.0
    %1723 = vmatpush1.msra.mxu0 0.0
    %1724 = vmatprep.subr.mxu0 0.0
    %1725 = vmatpush1.msra.mxu0 0.0
    %1726 = vmatprep.subr.mxu0 0.0
    %1727 = vmatpush1.msra.mxu0 0.0
    %1728 = vmatprep.subr.mxu0 0.0
    %1729 = vmatpush1.msra.mxu0 0.0
    %1730 = vmatprep.subr.mxu0 0.0
    %1731 = vmatpush1.msra.mxu0 0.0
    %1732 = vmatprep.subr.mxu0 0.0
    %1733 = vmatpush1.msra.mxu0 0.0
    %1734 = vmatprep.subr.mxu0 0.0
    %1735 = vmatpush1.msra.mxu0 0.0
    %1736 = vmatprep.subr.mxu0 0.0
    %1737 = vmatpush1.msra.mxu0 0.0
    %1738 = vmatprep.subr.mxu0 0.0
    %1739 = vmatpush1.msra.mxu0 0.0
    %1740 = vmatprep.subr.mxu0 0.0
    %1741 = vmatpush1.msra.mxu0 0.0
    %1742 = vmatprep.subr.mxu0 0.0
    %1743 = vmatpush1.msra.mxu0 0.0
    %1744 = vmatprep.subr.mxu0 0.0
    %1745 = vmatpush1.msra.mxu0 0.0
    %1746 = vmatprep.subr.mxu0 0.0
    %1747 = vmatpush1.msra.mxu0 0.0
    %1748 = vmatprep.subr.mxu0 0.0
    %1749 = vmatpush1.msra.mxu0 0.0
    %1750 = vmatprep.subr.mxu0 0.0
    %1751 = vmatpush1.msra.mxu0 0.0
    %1752 = vmatprep.subr.mxu0 0.0
    %1753 = vmatpush1.msra.mxu0 0.0
    %1754 = vmatprep.subr.mxu0 0.0
    %1755 = vmatpush1.msra.mxu0 0.0
    %1756 = vmatprep.subr.mxu0 0.0
    %1757 = vmatpush1.msra.mxu0 0.0
    %1758 = vmatprep.subr.mxu0 0.0
    %1759 = vmatpush1.msra.mxu0 0.0
    %1760 = vmatprep.subr.mxu0 0.0
    %1761 = vmatpush1.msra.mxu0 0.0
    %1762 = vmatprep.subr.mxu0 0.0
    %1763 = vmatpush1.msra.mxu0 0.0
    %1764 = vmatprep.subr.mxu0 0.0
    %1765 = vmatpush1.msra.mxu0 0.0
    %1766 = vmatprep.subr.mxu0 0.0
    %1767 = vmatpush1.msra.mxu0 0.0
    %1768 = vmatprep.mubr.f32.mxu0 0.0
    %1769 = vmatmul.mubr.f32.gmra.mrb[0].mxu0 %v1699
    %v1770 = vpop.f32.mrb[0].mxu0
    %v1771 = vadd.f32 0.0, %v1770
    %v1772 = vpop.f32.mrb[0].mxu0
    %v1773 = vadd.f32 0.0, %v1772
    %1774 = vmatprep.mubr.f32.mxu0 0.0
    %1775 = vmatmul.mubr.f32.gmra.mrb[0].mxu0 %v1702
    %v1776 = vpop.f32.mrb[0].mxu0
    %v1777 = vadd.f32 0.0, %v1776
    %v1778 = vpop.f32.mrb[0].mxu0
    %v1779 = vadd.f32 0.0, %v1778
    %1780 = vdwg.mxu0
    %1781 = vmatprep.subr.mxu0 %v1331
    %1782 = vmatpush1.msra.mxu0 %v1330
    %1783 = vmatprep.subr.mxu0 %v1339
    %1784 = vmatpush1.msra.mxu0 %v1338
    %1785 = vmatprep.subr.mxu0 %v1347
    %1786 = vmatpush1.msra.mxu0 %v1346
    %1787 = vmatprep.subr.mxu0 %v1355
    %1788 = vmatpush1.msra.mxu0 %v1354
    %1789 = vmatprep.subr.mxu0 0.0
    %1790 = vmatpush1.msra.mxu0 0.0
    %1791 = vmatprep.subr.mxu0 0.0
    %1792 = vmatpush1.msra.mxu0 0.0
    %1793 = vmatprep.subr.mxu0 0.0
    %1794 = vmatpush1.msra.mxu0 0.0
    %1795 = vmatprep.subr.mxu0 0.0
    %1796 = vmatpush1.msra.mxu0 0.0
    %1797 = vmatprep.subr.mxu0 0.0
    %1798 = vmatpush1.msra.mxu0 0.0
    %1799 = vmatprep.subr.mxu0 0.0
    %1800 = vmatpush1.msra.mxu0 0.0
    %1801 = vmatprep.subr.mxu0 0.0
    %1802 = vmatpush1.msra.mxu0 0.0
    %1803 = vmatprep.subr.mxu0 0.0
    %1804 = vmatpush1.msra.mxu0 0.0
    %1805 = vmatprep.subr.mxu0 0.0
    %1806 = vmatpush1.msra.mxu0 0.0
    %1807 = vmatprep.subr.mxu0 0.0
    %1808 = vmatpush1.msra.mxu0 0.0
    %1809 = vmatprep.subr.mxu0 0.0
    %1810 = vmatpush1.msra.mxu0 0.0
    %1811 = vmatprep.subr.mxu0 0.0
    %1812 = vmatpush1.msra.mxu0 0.0
    %1813 = vmatprep.subr.mxu0 0.0
    %1814 = vmatpush1.msra.mxu0 0.0
    %1815 = vmatprep.subr.mxu0 0.0
    %1816 = vmatpush1.msra.mxu0 0.0
    %1817 = vmatprep.subr.mxu0 0.0
    %1818 = vmatpush1.msra.mxu0 0.0
    %1819 = vmatprep.subr.mxu0 0.0
    %1820 = vmatpush1.msra.mxu0 0.0
    %1821 = vmatprep.subr.mxu0 0.0
    %1822 = vmatpush1.msra.mxu0 0.0
    %1823 = vmatprep.subr.mxu0 0.0
    %1824 = vmatpush1.msra.mxu0 0.0
    %1825 = vmatprep.subr.mxu0 0.0
    %1826 = vmatpush1.msra.mxu0 0.0
    %1827 = vmatprep.subr.mxu0 0.0
    %1828 = vmatpush1.msra.mxu0 0.0
    %1829 = vmatprep.subr.mxu0 0.0
    %1830 = vmatpush1.msra.mxu0 0.0
    %1831 = vmatprep.subr.mxu0 0.0
    %1832 = vmatpush1.msra.mxu0 0.0
    %1833 = vmatprep.subr.mxu0 0.0
    %1834 = vmatpush1.msra.mxu0 0.0
    %1835 = vmatprep.subr.mxu0 0.0
    %1836 = vmatpush1.msra.mxu0 0.0
    %1837 = vmatprep.subr.mxu0 0.0
    %1838 = vmatpush1.msra.mxu0 0.0
    %1839 = vmatprep.subr.mxu0 0.0
    %1840 = vmatpush1.msra.mxu0 0.0
    %1841 = vmatprep.subr.mxu0 0.0
    %1842 = vmatpush1.msra.mxu0 0.0
    %1843 = vmatprep.subr.mxu0 0.0
    %1844 = vmatpush1.msra.mxu0 0.0
    %1845 = vmatprep.mubr.f32.mxu0 0.0
    %1846 = vmatmul.mubr.f32.gmra.mrb[0].mxu0 %v1699
    %v1847 = vpop.f32.mrb[0].mxu0
    %v1848 = vadd.f32 0.0, %v1847
    %v1849 = vpop.f32.mrb[0].mxu0
    %v1850 = vadd.f32 0.0, %v1849
    %1851 = vmatprep.mubr.f32.mxu0 0.0
    %1852 = vmatmul.mubr.f32.gmra.mrb[0].mxu0 %v1702
    %v1853 = vpop.f32.mrb[0].mxu0
    %v1854 = vadd.f32 0.0, %v1853
    %v1855 = vpop.f32.mrb[0].mxu0
    %v1856 = vadd.f32 0.0, %v1855
    %1857 = vdwg.mxu0
    %1858 = vmatprep.subr.mxu0 %v1333
    %1859 = vmatpush1.msra.mxu0 %v1332
    %1860 = vmatprep.subr.mxu0 %v1341
    %1861 = vmatpush1.msra.mxu0 %v1340
    %1862 = vmatprep.subr.mxu0 %v1349
    %1863 = vmatpush1.msra.mxu0 %v1348
    %1864 = vmatprep.subr.mxu0 %v1357
    %1865 = vmatpush1.msra.mxu0 %v1356
    %1866 = vmatprep.subr.mxu0 0.0
    %1867 = vmatpush1.msra.mxu0 0.0
    %1868 = vmatprep.subr.mxu0 0.0
    %1869 = vmatpush1.msra.mxu0 0.0
    %1870 = vmatprep.subr.mxu0 0.0
    %1871 = vmatpush1.msra.mxu0 0.0
    %1872 = vmatprep.subr.mxu0 0.0
    %1873 = vmatpush1.msra.mxu0 0.0
    %1874 = vmatprep.subr.mxu0 0.0
    %1875 = vmatpush1.msra.mxu0 0.0
    %1876 = vmatprep.subr.mxu0 0.0
    %1877 = vmatpush1.msra.mxu0 0.0
    %1878 = vmatprep.subr.mxu0 0.0
    %1879 = vmatpush1.msra.mxu0 0.0
    %1880 = vmatprep.subr.mxu0 0.0
    %1881 = vmatpush1.msra.mxu0 0.0
    %1882 = vmatprep.subr.mxu0 0.0
    %1883 = vmatpush1.msra.mxu0 0.0
    %1884 = vmatprep.subr.mxu0 0.0
    %1885 = vmatpush1.msra.mxu0 0.0
    %1886 = vmatprep.subr.mxu0 0.0
    %1887 = vmatpush1.msra.mxu0 0.0
    %1888 = vmatprep.subr.mxu0 0.0
    %1889 = vmatpush1.msra.mxu0 0.0
    %1890 = vmatprep.subr.mxu0 0.0
    %1891 = vmatpush1.msra.mxu0 0.0
    %1892 = vmatprep.subr.mxu0 0.0
    %1893 = vmatpush1.msra.mxu0 0.0
    %1894 = vmatprep.subr.mxu0 0.0
    %1895 = vmatpush1.msra.mxu0 0.0
    %1896 = vmatprep.subr.mxu0 0.0
    %1897 = vmatpush1.msra.mxu0 0.0
    %1898 = vmatprep.subr.mxu0 0.0
    %1899 = vmatpush1.msra.mxu0 0.0
    %1900 = vmatprep.subr.mxu0 0.0
    %1901 = vmatpush1.msra.mxu0 0.0
    %1902 = vmatprep.subr.mxu0 0.0
    %1903 = vmatpush1.msra.mxu0 0.0
    %1904 = vmatprep.subr.mxu0 0.0
    %1905 = vmatpush1.msra.mxu0 0.0
    %1906 = vmatprep.subr.mxu0 0.0
    %1907 = vmatpush1.msra.mxu0 0.0
    %1908 = vmatprep.subr.mxu0 0.0
    %1909 = vmatpush1.msra.mxu0 0.0
    %1910 = vmatprep.subr.mxu0 0.0
    %1911 = vmatpush1.msra.mxu0 0.0
    %1912 = vmatprep.subr.mxu0 0.0
    %1913 = vmatpush1.msra.mxu0 0.0
    %1914 = vmatprep.subr.mxu0 0.0
    %1915 = vmatpush1.msra.mxu0 0.0
    %1916 = vmatprep.subr.mxu0 0.0
    %1917 = vmatpush1.msra.mxu0 0.0
    %1918 = vmatprep.subr.mxu0 0.0
    %1919 = vmatpush1.msra.mxu0 0.0
    %1920 = vmatprep.subr.mxu0 0.0
    %1921 = vmatpush1.msra.mxu0 0.0
    %1922 = vmatprep.mubr.f32.mxu0 0.0
    %1923 = vmatmul.mubr.f32.gmra.mrb[0].mxu0 %v1699
    %v1924 = vpop.f32.mrb[0].mxu0
    %v1925 = vadd.f32 0.0, %v1924
    %v1926 = vpop.f32.mrb[0].mxu0
    %v1927 = vadd.f32 0.0, %v1926
    %1928 = vmatprep.mubr.f32.mxu0 0.0
    %1929 = vmatmul.mubr.f32.gmra.mrb[0].mxu0 %v1702
    %v1930 = vpop.f32.mrb[0].mxu0
    %v1931 = vadd.f32 0.0, %v1930
    %v1932 = vpop.f32.mrb[0].mxu0
    %v1933 = vadd.f32 0.0, %v1932
    %1934 = vdwg.mxu0
    %1935 = vmatprep.subr.mxu0 %v1335
    %1936 = vmatpush1.msra.mxu0 %v1334
    %1937 = vmatprep.subr.mxu0 %v1343
    %1938 = vmatpush1.msra.mxu0 %v1342
    %1939 = vmatprep.subr.mxu0 %v1351
    %1940 = vmatpush1.msra.mxu0 %v1350
    %1941 = vmatprep.subr.mxu0 %v1359
    %1942 = vmatpush1.msra.mxu0 %v1358
    %1943 = vmatprep.subr.mxu0 0.0
    %1944 = vmatpush1.msra.mxu0 0.0
    %1945 = vmatprep.subr.mxu0 0.0
    %1946 = vmatpush1.msra.mxu0 0.0
    %1947 = vmatprep.subr.mxu0 0.0
    %1948 = vmatpush1.msra.mxu0 0.0
    %1949 = vmatprep.subr.mxu0 0.0
    %1950 = vmatpush1.msra.mxu0 0.0
    %1951 = vmatprep.subr.mxu0 0.0
    %1952 = vmatpush1.msra.mxu0 0.0
    %1953 = vmatprep.subr.mxu0 0.0
    %1954 = vmatpush1.msra.mxu0 0.0
    %1955 = vmatprep.subr.mxu0 0.0
    %1956 = vmatpush1.msra.mxu0 0.0
    %1957 = vmatprep.subr.mxu0 0.0
    %1958 = vmatpush1.msra.mxu0 0.0
    %1959 = vmatprep.subr.mxu0 0.0
    %1960 = vmatpush1.msra.mxu0 0.0
    %1961 = vmatprep.subr.mxu0 0.0
    %1962 = vmatpush1.msra.mxu0 0.0
    %1963 = vmatprep.subr.mxu0 0.0
    %1964 = vmatpush1.msra.mxu0 0.0
    %1965 = vmatprep.subr.mxu0 0.0
    %1966 = vmatpush1.msra.mxu0 0.0
    %1967 = vmatprep.subr.mxu0 0.0
    %1968 = vmatpush1.msra.mxu0 0.0
    %1969 = vmatprep.subr.mxu0 0.0
    %1970 = vmatpush1.msra.mxu0 0.0
    %1971 = vmatprep.subr.mxu0 0.0
    %1972 = vmatpush1.msra.mxu0 0.0
    %1973 = vmatprep.subr.mxu0 0.0
    %1974 = vmatpush1.msra.mxu0 0.0
    %1975 = vmatprep.subr.mxu0 0.0
    %1976 = vmatpush1.msra.mxu0 0.0
    %1977 = vmatprep.subr.mxu0 0.0
    %1978 = vmatpush1.msra.mxu0 0.0
    %1979 = vmatprep.subr.mxu0 0.0
    %1980 = vmatpush1.msra.mxu0 0.0
    %1981 = vmatprep.subr.mxu0 0.0
    %1982 = vmatpush1.msra.mxu0 0.0
    %1983 = vmatprep.subr.mxu0 0.0
    %1984 = vmatpush1.msra.mxu0 0.0
    %1985 = vmatprep.subr.mxu0 0.0
    %1986 = vmatpush1.msra.mxu0 0.0
    %1987 = vmatprep.subr.mxu0 0.0
    %1988 = vmatpush1.msra.mxu0 0.0
    %1989 = vmatprep.subr.mxu0 0.0
    %1990 = vmatpush1.msra.mxu0 0.0
    %1991 = vmatprep.subr.mxu0 0.0
    %1992 = vmatpush1.msra.mxu0 0.0
    %1993 = vmatprep.subr.mxu0 0.0
    %1994 = vmatpush1.msra.mxu0 0.0
    %1995 = vmatprep.subr.mxu0 0.0
    %1996 = vmatpush1.msra.mxu0 0.0
    %1997 = vmatprep.subr.mxu0 0.0
    %1998 = vmatpush1.msra.mxu0 0.0
    %1999 = vmatprep.mubr.f32.mxu0 0.0
    %2000 = vmatmul.mubr.f32.gmra.mrb[0].mxu0 %v1699
    %v2001 = vpop.f32.mrb[0].mxu0
    %v2002 = vadd.f32 0.0, %v2001
    %v2003 = vpop.f32.mrb[0].mxu0
    %v2004 = vadd.f32 0.0, %v2003
    %2005 = vmatprep.mubr.f32.mxu0 0.0
    %2006 = vmatmul.mubr.f32.gmra.mrb[0].mxu0 %v1702
    %v2007 = vpop.f32.mrb[0].mxu0
    %v2008 = vadd.f32 0.0, %v2007
    %v2009 = vpop.f32.mrb[0].mxu0
    %v2010 = vadd.f32 0.0, %v2009
    %2011 = vdwg.mxu0
    %v2012 = vmul.f32 %v365, %v1771
    %v2013 = vmul.f32 %v367, %v1773
    %v2014 = vmul.f32 %v442, %v1848
    %v2015 = vmul.f32 %v444, %v1850
    %v2016 = vmul.f32 %v519, %v1925
    %v2017 = vmul.f32 %v521, %v1927
    %v2018 = vmul.f32 %v596, %v2002
    %v2019 = vmul.f32 %v598, %v2004
    %v2020 = vmul.f32 %v371, %v1777
    %v2021 = vmul.f32 %v373, %v1779
    %v2022 = vmul.f32 %v448, %v1854
    %v2023 = vmul.f32 %v450, %v1856
    %v2024 = vmul.f32 %v525, %v1931
    %v2025 = vmul.f32 %v527, %v1933
    %v2026 = vmul.f32 %v602, %v2008
    %v2027 = vmul.f32 %v604, %v2010
    %2030 = vrot.lane.b32.xlu0 %v2012, 96
    %v2031 = vpop.permute.xlu0 %2030
    %2032 = vrot.lane.b32.xlu0 %v2020, 96
    %v2033 = vpop.permute.xlu0 %2032
    %2036 = vrot.lane.b32.xlu0 %v2012, 64
    %v2037 = vpop.permute.xlu0 %2036
    %2038 = vrot.lane.b32.xlu0 %v2020, 64
    %v2039 = vpop.permute.xlu0 %2038
    %2042 = vrot.lane.b32.xlu0 %v2012, 32
    %v2043 = vpop.permute.xlu0 %2042
    %2044 = vrot.lane.b32.xlu0 %v2020, 32
    %v2045 = vpop.permute.xlu0 %2044
    %2050 = vrot.lane.b32.xlu0 %v2013, 96
    %v2051 = vpop.permute.xlu0 %2050
    %2052 = vrot.lane.b32.xlu0 %v2021, 96
    %v2053 = vpop.permute.xlu0 %2052
    %2056 = vrot.lane.b32.xlu0 %v2013, 64
    %v2057 = vpop.permute.xlu0 %2056
    %2058 = vrot.lane.b32.xlu0 %v2021, 64
    %v2059 = vpop.permute.xlu0 %2058
    %2062 = vrot.lane.b32.xlu0 %v2013, 32
    %v2063 = vpop.permute.xlu0 %2062
    %2064 = vrot.lane.b32.xlu0 %v2021, 32
    %v2065 = vpop.permute.xlu0 %2064
    %2070 = vrot.lane.b32.xlu0 %v2014, 96
    %v2071 = vpop.permute.xlu0 %2070
    %2072 = vrot.lane.b32.xlu0 %v2022, 96
    %v2073 = vpop.permute.xlu0 %2072
    %2076 = vrot.lane.b32.xlu0 %v2014, 64
    %v2077 = vpop.permute.xlu0 %2076
    %2078 = vrot.lane.b32.xlu0 %v2022, 64
    %v2079 = vpop.permute.xlu0 %2078
    %2082 = vrot.lane.b32.xlu0 %v2014, 32
    %v2083 = vpop.permute.xlu0 %2082
    %2084 = vrot.lane.b32.xlu0 %v2022, 32
    %v2085 = vpop.permute.xlu0 %2084
    %2090 = vrot.lane.b32.xlu0 %v2015, 96
    %v2091 = vpop.permute.xlu0 %2090
    %2092 = vrot.lane.b32.xlu0 %v2023, 96
    %v2093 = vpop.permute.xlu0 %2092
    %2096 = vrot.lane.b32.xlu0 %v2015, 64
    %v2097 = vpop.permute.xlu0 %2096
    %2098 = vrot.lane.b32.xlu0 %v2023, 64
    %v2099 = vpop.permute.xlu0 %2098
    %2102 = vrot.lane.b32.xlu0 %v2015, 32
    %v2103 = vpop.permute.xlu0 %2102
    %2104 = vrot.lane.b32.xlu0 %v2023, 32
    %v2105 = vpop.permute.xlu0 %2104
    %2110 = vrot.lane.b32.xlu0 %v2016, 96
    %v2111 = vpop.permute.xlu0 %2110
    %2112 = vrot.lane.b32.xlu0 %v2024, 96
    %v2113 = vpop.permute.xlu0 %2112
    %2116 = vrot.lane.b32.xlu0 %v2016, 64
    %v2117 = vpop.permute.xlu0 %2116
    %2118 = vrot.lane.b32.xlu0 %v2024, 64
    %v2119 = vpop.permute.xlu0 %2118
    %2122 = vrot.lane.b32.xlu0 %v2016, 32
    %v2123 = vpop.permute.xlu0 %2122
    %2124 = vrot.lane.b32.xlu0 %v2024, 32
    %v2125 = vpop.permute.xlu0 %2124
    %2130 = vrot.lane.b32.xlu0 %v2017, 96
    %v2131 = vpop.permute.xlu0 %2130
    %2132 = vrot.lane.b32.xlu0 %v2025, 96
    %v2133 = vpop.permute.xlu0 %2132
    %2136 = vrot.lane.b32.xlu0 %v2017, 64
    %v2137 = vpop.permute.xlu0 %2136
    %2138 = vrot.lane.b32.xlu0 %v2025, 64
    %v2139 = vpop.permute.xlu0 %2138
    %2142 = vrot.lane.b32.xlu0 %v2017, 32
    %v2143 = vpop.permute.xlu0 %2142
    %2144 = vrot.lane.b32.xlu0 %v2025, 32
    %v2145 = vpop.permute.xlu0 %2144
    %2150 = vrot.lane.b32.xlu0 %v2018, 96
    %v2151 = vpop.permute.xlu0 %2150
    %2152 = vrot.lane.b32.xlu0 %v2026, 96
    %v2153 = vpop.permute.xlu0 %2152
    %2156 = vrot.lane.b32.xlu0 %v2018, 64
    %v2157 = vpop.permute.xlu0 %2156
    %2158 = vrot.lane.b32.xlu0 %v2026, 64
    %v2159 = vpop.permute.xlu0 %2158
    %2162 = vrot.lane.b32.xlu0 %v2018, 32
    %v2163 = vpop.permute.xlu0 %2162
    %2164 = vrot.lane.b32.xlu0 %v2026, 32
    %v2165 = vpop.permute.xlu0 %2164
    %2170 = vrot.lane.b32.xlu0 %v2019, 96
    %v2171 = vpop.permute.xlu0 %2170
    %2172 = vrot.lane.b32.xlu0 %v2027, 96
    %v2173 = vpop.permute.xlu0 %2172
    %2176 = vrot.lane.b32.xlu0 %v2019, 64
    %v2177 = vpop.permute.xlu0 %2176
    %2178 = vrot.lane.b32.xlu0 %v2027, 64
    %v2179 = vpop.permute.xlu0 %2178
    %2182 = vrot.lane.b32.xlu0 %v2019, 32
    %v2183 = vpop.permute.xlu0 %2182
    %2184 = vrot.lane.b32.xlu0 %v2027, 32
    %v2185 = vpop.permute.xlu0 %2184
    %v2188 = vcombine.low %v2012, %v2037
    %v2189 = vcombine.high %v2012, %v2037
    %v2191 = vunpack.c.l.s4 1983009808
    %v2192 = vunpack.c.0.s8 %v2191
    %v2193 = vlaneseq
    %v2194 = vshrl.u32 %v2193, 7
    %v2195 = vsub.s32 %v2192, %v2194
    %v2196 = vrot.slane %v2188, %v2195
    %v2198 = vunpack.c.l.s4 1983009808
    %v2199 = vunpack.c.0.s8 %v2198
    %v2200 = vlaneseq
    %v2201 = vshrl.u32 %v2200, 7
    %v2202 = vsub.s32 %v2199, %v2201
    %v2203 = vrot.slane %v2189, %v2202
    %v2204 = vcombine.low %v2031, %v2043
    %v2205 = vcombine.high %v2031, %v2043
    %v2207 = vunpack.c.l.s4 1983009808
    %v2208 = vunpack.c.0.s8 %v2207
    %v2209 = vlaneseq
    %v2210 = vshrl.u32 %v2209, 7
    %v2211 = vsub.s32 %v2208, %v2210
    %v2212 = vrot.slane %v2204, %v2211
    %v2214 = vunpack.c.l.s4 1983009808
    %v2215 = vunpack.c.0.s8 %v2214
    %v2216 = vlaneseq
    %v2217 = vshrl.u32 %v2216, 7
    %v2218 = vsub.s32 %v2215, %v2217
    %v2219 = vrot.slane %v2205, %v2218
    %v2220 = vcombine.low %v2013, %v2057
    %v2221 = vcombine.high %v2013, %v2057
    %v2223 = vunpack.c.l.s4 1983009808
    %v2224 = vunpack.c.0.s8 %v2223
    %v2225 = vlaneseq
    %v2226 = vshrl.u32 %v2225, 7
    %v2227 = vsub.s32 %v2224, %v2226
    %v2228 = vrot.slane %v2220, %v2227
    %v2230 = vunpack.c.l.s4 1983009808
    %v2231 = vunpack.c.0.s8 %v2230
    %v2232 = vlaneseq
    %v2233 = vshrl.u32 %v2232, 7
    %v2234 = vsub.s32 %v2231, %v2233
    %v2235 = vrot.slane %v2221, %v2234
    %v2236 = vcombine.low %v2051, %v2063
    %v2237 = vcombine.high %v2051, %v2063
    %v2239 = vunpack.c.l.s4 1983009808
    %v2240 = vunpack.c.0.s8 %v2239
    %v2241 = vlaneseq
    %v2242 = vshrl.u32 %v2241, 7
    %v2243 = vsub.s32 %v2240, %v2242
    %v2244 = vrot.slane %v2236, %v2243
    %v2246 = vunpack.c.l.s4 1983009808
    %v2247 = vunpack.c.0.s8 %v2246
    %v2248 = vlaneseq
    %v2249 = vshrl.u32 %v2248, 7
    %v2250 = vsub.s32 %v2247, %v2249
    %v2251 = vrot.slane %v2237, %v2250
    %v2252 = vcombine.low %v2196, %v2212
    %v2253 = vcombine.high %v2196, %v2212
    %v2255 = vunpack.c.l.s4 1934713408
    %v2256 = vunpack.c.0.s8 %v2255
    %v2257 = vlaneseq
    %v2258 = vshrl.u32 %v2257, 7
    %v2259 = vsub.s32 %v2256, %v2258
    %v2260 = vrot.slane %v2252, %v2259
    %v2262 = vunpack.c.l.s4 1934713408
    %v2263 = vunpack.c.0.s8 %v2262
    %v2264 = vlaneseq
    %v2265 = vshrl.u32 %v2264, 7
    %v2266 = vsub.s32 %v2263, %v2265
    %v2267 = vrot.slane %v2253, %v2266
    %v2268 = vcombine.low %v2203, %v2219
    %v2269 = vcombine.high %v2203, %v2219
    %v2271 = vunpack.c.l.s4 1934713408
    %v2272 = vunpack.c.0.s8 %v2271
    %v2273 = vlaneseq
    %v2274 = vshrl.u32 %v2273, 7
    %v2275 = vsub.s32 %v2272, %v2274
    %v2276 = vrot.slane %v2268, %v2275
    %v2278 = vunpack.c.l.s4 1934713408
    %v2279 = vunpack.c.0.s8 %v2278
    %v2280 = vlaneseq
    %v2281 = vshrl.u32 %v2280, 7
    %v2282 = vsub.s32 %v2279, %v2281
    %v2283 = vrot.slane %v2269, %v2282
    %v2284 = vcombine.low %v2228, %v2244
    %v2285 = vcombine.high %v2228, %v2244
    %v2287 = vunpack.c.l.s4 1934713408
    %v2288 = vunpack.c.0.s8 %v2287
    %v2289 = vlaneseq
    %v2290 = vshrl.u32 %v2289, 7
    %v2291 = vsub.s32 %v2288, %v2290
    %v2292 = vrot.slane %v2284, %v2291
    %v2294 = vunpack.c.l.s4 1934713408
    %v2295 = vunpack.c.0.s8 %v2294
    %v2296 = vlaneseq
    %v2297 = vshrl.u32 %v2296, 7
    %v2298 = vsub.s32 %v2295, %v2297
    %v2299 = vrot.slane %v2285, %v2298
    %v2300 = vcombine.low %v2235, %v2251
    %v2301 = vcombine.high %v2235, %v2251
    %v2303 = vunpack.c.l.s4 1934713408
    %v2304 = vunpack.c.0.s8 %v2303
    %v2305 = vlaneseq
    %v2306 = vshrl.u32 %v2305, 7
    %v2307 = vsub.s32 %v2304, %v2306
    %v2308 = vrot.slane %v2300, %v2307
    %v2310 = vunpack.c.l.s4 1934713408
    %v2311 = vunpack.c.0.s8 %v2310
    %v2312 = vlaneseq
    %v2313 = vshrl.u32 %v2312, 7
    %v2314 = vsub.s32 %v2311, %v2313
    %v2315 = vrot.slane %v2301, %v2314
    %v2316 = vcombine.low %v2260, %v2292
    %v2317 = vcombine.high %v2260, %v2292
    %v2318 = vcombine.low %v2267, %v2299
    %v2319 = vcombine.high %v2267, %v2299
    %v2320 = vcombine.low %v2276, %v2308
    %v2321 = vcombine.high %v2276, %v2308
    %v2322 = vcombine.low %v2283, %v2315
    %v2323 = vcombine.high %v2283, %v2315
    %v2324 = vcombine.low %v2014, %v2077
    %v2325 = vcombine.high %v2014, %v2077
    %v2327 = vunpack.c.l.s4 1983009808
    %v2328 = vunpack.c.0.s8 %v2327
    %v2329 = vlaneseq
    %v2330 = vshrl.u32 %v2329, 7
    %v2331 = vsub.s32 %v2328, %v2330
    %v2332 = vrot.slane %v2324, %v2331
    %v2334 = vunpack.c.l.s4 1983009808
    %v2335 = vunpack.c.0.s8 %v2334
    %v2336 = vlaneseq
    %v2337 = vshrl.u32 %v2336, 7
    %v2338 = vsub.s32 %v2335, %v2337
    %v2339 = vrot.slane %v2325, %v2338
    %v2340 = vcombine.low %v2071, %v2083
    %v2341 = vcombine.high %v2071, %v2083
    %v2343 = vunpack.c.l.s4 1983009808
    %v2344 = vunpack.c.0.s8 %v2343
    %v2345 = vlaneseq
    %v2346 = vshrl.u32 %v2345, 7
    %v2347 = vsub.s32 %v2344, %v2346
    %v2348 = vrot.slane %v2340, %v2347
    %v2350 = vunpack.c.l.s4 1983009808
    %v2351 = vunpack.c.0.s8 %v2350
    %v2352 = vlaneseq
    %v2353 = vshrl.u32 %v2352, 7
    %v2354 = vsub.s32 %v2351, %v2353
    %v2355 = vrot.slane %v2341, %v2354
    %v2356 = vcombine.low %v2015, %v2097
    %v2357 = vcombine.high %v2015, %v2097
    %v2359 = vunpack.c.l.s4 1983009808
    %v2360 = vunpack.c.0.s8 %v2359
    %v2361 = vlaneseq
    %v2362 = vshrl.u32 %v2361, 7
    %v2363 = vsub.s32 %v2360, %v2362
    %v2364 = vrot.slane %v2356, %v2363
    %v2366 = vunpack.c.l.s4 1983009808
    %v2367 = vunpack.c.0.s8 %v2366
    %v2368 = vlaneseq
    %v2369 = vshrl.u32 %v2368, 7
    %v2370 = vsub.s32 %v2367, %v2369
    %v2371 = vrot.slane %v2357, %v2370
    %v2372 = vcombine.low %v2091, %v2103
    %v2373 = vcombine.high %v2091, %v2103
    %v2375 = vunpack.c.l.s4 1983009808
    %v2376 = vunpack.c.0.s8 %v2375
    %v2377 = vlaneseq
    %v2378 = vshrl.u32 %v2377, 7
    %v2379 = vsub.s32 %v2376, %v2378
    %v2380 = vrot.slane %v2372, %v2379
    %v2382 = vunpack.c.l.s4 1983009808
    %v2383 = vunpack.c.0.s8 %v2382
    %v2384 = vlaneseq
    %v2385 = vshrl.u32 %v2384, 7
    %v2386 = vsub.s32 %v2383, %v2385
    %v2387 = vrot.slane %v2373, %v2386
    %v2388 = vcombine.low %v2332, %v2348
    %v2389 = vcombine.high %v2332, %v2348
    %v2391 = vunpack.c.l.s4 1934713408
    %v2392 = vunpack.c.0.s8 %v2391
    %v2393 = vlaneseq
    %v2394 = vshrl.u32 %v2393, 7
    %v2395 = vsub.s32 %v2392, %v2394
    %v2396 = vrot.slane %v2388, %v2395
    %v2398 = vunpack.c.l.s4 1934713408
    %v2399 = vunpack.c.0.s8 %v2398
    %v2400 = vlaneseq
    %v2401 = vshrl.u32 %v2400, 7
    %v2402 = vsub.s32 %v2399, %v2401
    %v2403 = vrot.slane %v2389, %v2402
    %v2404 = vcombine.low %v2339, %v2355
    %v2405 = vcombine.high %v2339, %v2355
    %v2407 = vunpack.c.l.s4 1934713408
    %v2408 = vunpack.c.0.s8 %v2407
    %v2409 = vlaneseq
    %v2410 = vshrl.u32 %v2409, 7
    %v2411 = vsub.s32 %v2408, %v2410
    %v2412 = vrot.slane %v2404, %v2411
    %v2414 = vunpack.c.l.s4 1934713408
    %v2415 = vunpack.c.0.s8 %v2414
    %v2416 = vlaneseq
    %v2417 = vshrl.u32 %v2416, 7
    %v2418 = vsub.s32 %v2415, %v2417
    %v2419 = vrot.slane %v2405, %v2418
    %v2420 = vcombine.low %v2364, %v2380
    %v2421 = vcombine.high %v2364, %v2380
    %v2423 = vunpack.c.l.s4 1934713408
    %v2424 = vunpack.c.0.s8 %v2423
    %v2425 = vlaneseq
    %v2426 = vshrl.u32 %v2425, 7
    %v2427 = vsub.s32 %v2424, %v2426
    %v2428 = vrot.slane %v2420, %v2427
    %v2430 = vunpack.c.l.s4 1934713408
    %v2431 = vunpack.c.0.s8 %v2430
    %v2432 = vlaneseq
    %v2433 = vshrl.u32 %v2432, 7
    %v2434 = vsub.s32 %v2431, %v2433
    %v2435 = vrot.slane %v2421, %v2434
    %v2436 = vcombine.low %v2371, %v2387
    %v2437 = vcombine.high %v2371, %v2387
    %v2439 = vunpack.c.l.s4 1934713408
    %v2440 = vunpack.c.0.s8 %v2439
    %v2441 = vlaneseq
    %v2442 = vshrl.u32 %v2441, 7
    %v2443 = vsub.s32 %v2440, %v2442
    %v2444 = vrot.slane %v2436, %v2443
    %v2446 = vunpack.c.l.s4 1934713408
    %v2447 = vunpack.c.0.s8 %v2446
    %v2448 = vlaneseq
    %v2449 = vshrl.u32 %v2448, 7
    %v2450 = vsub.s32 %v2447, %v2449
    %v2451 = vrot.slane %v2437, %v2450
    %v2452 = vcombine.low %v2396, %v2428
    %v2453 = vcombine.high %v2396, %v2428
    %v2454 = vcombine.low %v2403, %v2435
    %v2455 = vcombine.high %v2403, %v2435
    %v2456 = vcombine.low %v2412, %v2444
    %v2457 = vcombine.high %v2412, %v2444
    %v2458 = vcombine.low %v2419, %v2451
    %v2459 = vcombine.high %v2419, %v2451
    %v2460 = vcombine.low %v2016, %v2117
    %v2461 = vcombine.high %v2016, %v2117
    %v2463 = vunpack.c.l.s4 1983009808
    %v2464 = vunpack.c.0.s8 %v2463
    %v2465 = vlaneseq
    %v2466 = vshrl.u32 %v2465, 7
    %v2467 = vsub.s32 %v2464, %v2466
    %v2468 = vrot.slane %v2460, %v2467
    %v2470 = vunpack.c.l.s4 1983009808
    %v2471 = vunpack.c.0.s8 %v2470
    %v2472 = vlaneseq
    %v2473 = vshrl.u32 %v2472, 7
    %v2474 = vsub.s32 %v2471, %v2473
    %v2475 = vrot.slane %v2461, %v2474
    %v2476 = vcombine.low %v2111, %v2123
    %v2477 = vcombine.high %v2111, %v2123
    %v2479 = vunpack.c.l.s4 1983009808
    %v2480 = vunpack.c.0.s8 %v2479
    %v2481 = vlaneseq
    %v2482 = vshrl.u32 %v2481, 7
    %v2483 = vsub.s32 %v2480, %v2482
    %v2484 = vrot.slane %v2476, %v2483
    %v2486 = vunpack.c.l.s4 1983009808
    %v2487 = vunpack.c.0.s8 %v2486
    %v2488 = vlaneseq
    %v2489 = vshrl.u32 %v2488, 7
    %v2490 = vsub.s32 %v2487, %v2489
    %v2491 = vrot.slane %v2477, %v2490
    %v2492 = vcombine.low %v2017, %v2137
    %v2493 = vcombine.high %v2017, %v2137
    %v2495 = vunpack.c.l.s4 1983009808
    %v2496 = vunpack.c.0.s8 %v2495
    %v2497 = vlaneseq
    %v2498 = vshrl.u32 %v2497, 7
    %v2499 = vsub.s32 %v2496, %v2498
    %v2500 = vrot.slane %v2492, %v2499
    %v2502 = vunpack.c.l.s4 1983009808
    %v2503 = vunpack.c.0.s8 %v2502
    %v2504 = vlaneseq
    %v2505 = vshrl.u32 %v2504, 7
    %v2506 = vsub.s32 %v2503, %v2505
    %v2507 = vrot.slane %v2493, %v2506
    %v2508 = vcombine.low %v2131, %v2143
    %v2509 = vcombine.high %v2131, %v2143
    %v2511 = vunpack.c.l.s4 1983009808
    %v2512 = vunpack.c.0.s8 %v2511
    %v2513 = vlaneseq
    %v2514 = vshrl.u32 %v2513, 7
    %v2515 = vsub.s32 %v2512, %v2514
    %v2516 = vrot.slane %v2508, %v2515
    %v2518 = vunpack.c.l.s4 1983009808
    %v2519 = vunpack.c.0.s8 %v2518
    %v2520 = vlaneseq
    %v2521 = vshrl.u32 %v2520, 7
    %v2522 = vsub.s32 %v2519, %v2521
    %v2523 = vrot.slane %v2509, %v2522
    %v2524 = vcombine.low %v2468, %v2484
    %v2525 = vcombine.high %v2468, %v2484
    %v2527 = vunpack.c.l.s4 1934713408
    %v2528 = vunpack.c.0.s8 %v2527
    %v2529 = vlaneseq
    %v2530 = vshrl.u32 %v2529, 7
    %v2531 = vsub.s32 %v2528, %v2530
    %v2532 = vrot.slane %v2524, %v2531
    %v2534 = vunpack.c.l.s4 1934713408
    %v2535 = vunpack.c.0.s8 %v2534
    %v2536 = vlaneseq
    %v2537 = vshrl.u32 %v2536, 7
    %v2538 = vsub.s32 %v2535, %v2537
    %v2539 = vrot.slane %v2525, %v2538
    %v2540 = vcombine.low %v2475, %v2491
    %v2541 = vcombine.high %v2475, %v2491
    %v2543 = vunpack.c.l.s4 1934713408
    %v2544 = vunpack.c.0.s8 %v2543
    %v2545 = vlaneseq
    %v2546 = vshrl.u32 %v2545, 7
    %v2547 = vsub.s32 %v2544, %v2546
    %v2548 = vrot.slane %v2540, %v2547
    %v2550 = vunpack.c.l.s4 1934713408
    %v2551 = vunpack.c.0.s8 %v2550
    %v2552 = vlaneseq
    %v2553 = vshrl.u32 %v2552, 7
    %v2554 = vsub.s32 %v2551, %v2553
    %v2555 = vrot.slane %v2541, %v2554
    %v2556 = vcombine.low %v2500, %v2516
    %v2557 = vcombine.high %v2500, %v2516
    %v2559 = vunpack.c.l.s4 1934713408
    %v2560 = vunpack.c.0.s8 %v2559
    %v2561 = vlaneseq
    %v2562 = vshrl.u32 %v2561, 7
    %v2563 = vsub.s32 %v2560, %v2562
    %v2564 = vrot.slane %v2556, %v2563
    %v2566 = vunpack.c.l.s4 1934713408
    %v2567 = vunpack.c.0.s8 %v2566
    %v2568 = vlaneseq
    %v2569 = vshrl.u32 %v2568, 7
    %v2570 = vsub.s32 %v2567, %v2569
    %v2571 = vrot.slane %v2557, %v2570
    %v2572 = vcombine.low %v2507, %v2523
    %v2573 = vcombine.high %v2507, %v2523
    %v2575 = vunpack.c.l.s4 1934713408
    %v2576 = vunpack.c.0.s8 %v2575
    %v2577 = vlaneseq
    %v2578 = vshrl.u32 %v2577, 7
    %v2579 = vsub.s32 %v2576, %v2578
    %v2580 = vrot.slane %v2572, %v2579
    %v2582 = vunpack.c.l.s4 1934713408
    %v2583 = vunpack.c.0.s8 %v2582
    %v2584 = vlaneseq
    %v2585 = vshrl.u32 %v2584, 7
    %v2586 = vsub.s32 %v2583, %v2585
    %v2587 = vrot.slane %v2573, %v2586
    %v2588 = vcombine.low %v2532, %v2564
    %v2589 = vcombine.high %v2532, %v2564
    %v2590 = vcombine.low %v2539, %v2571
    %v2591 = vcombine.high %v2539, %v2571
    %v2592 = vcombine.low %v2548, %v2580
    %v2593 = vcombine.high %v2548, %v2580
    %v2594 = vcombine.low %v2555, %v2587
    %v2595 = vcombine.high %v2555, %v2587
    %v2596 = vcombine.low %v2018, %v2157
    %v2597 = vcombine.high %v2018, %v2157
    %v2599 = vunpack.c.l.s4 1983009808
    %v2600 = vunpack.c.0.s8 %v2599
    %v2601 = vlaneseq
    %v2602 = vshrl.u32 %v2601, 7
    %v2603 = vsub.s32 %v2600, %v2602
    %v2604 = vrot.slane %v2596, %v2603
    %v2606 = vunpack.c.l.s4 1983009808
    %v2607 = vunpack.c.0.s8 %v2606
    %v2608 = vlaneseq
    %v2609 = vshrl.u32 %v2608, 7
    %v2610 = vsub.s32 %v2607, %v2609
    %v2611 = vrot.slane %v2597, %v2610
    %v2612 = vcombine.low %v2151, %v2163
    %v2613 = vcombine.high %v2151, %v2163
    %v2615 = vunpack.c.l.s4 1983009808
    %v2616 = vunpack.c.0.s8 %v2615
    %v2617 = vlaneseq
    %v2618 = vshrl.u32 %v2617, 7
    %v2619 = vsub.s32 %v2616, %v2618
    %v2620 = vrot.slane %v2612, %v2619
    %v2622 = vunpack.c.l.s4 1983009808
    %v2623 = vunpack.c.0.s8 %v2622
    %v2624 = vlaneseq
    %v2625 = vshrl.u32 %v2624, 7
    %v2626 = vsub.s32 %v2623, %v2625
    %v2627 = vrot.slane %v2613, %v2626
    %v2628 = vcombine.low %v2019, %v2177
    %v2629 = vcombine.high %v2019, %v2177
    %v2631 = vunpack.c.l.s4 1983009808
    %v2632 = vunpack.c.0.s8 %v2631
    %v2633 = vlaneseq
    %v2634 = vshrl.u32 %v2633, 7
    %v2635 = vsub.s32 %v2632, %v2634
    %v2636 = vrot.slane %v2628, %v2635
    %v2638 = vunpack.c.l.s4 1983009808
    %v2639 = vunpack.c.0.s8 %v2638
    %v2640 = vlaneseq
    %v2641 = vshrl.u32 %v2640, 7
    %v2642 = vsub.s32 %v2639, %v2641
    %v2643 = vrot.slane %v2629, %v2642
    %v2644 = vcombine.low %v2171, %v2183
    %v2645 = vcombine.high %v2171, %v2183
    %v2647 = vunpack.c.l.s4 1983009808
    %v2648 = vunpack.c.0.s8 %v2647
    %v2649 = vlaneseq
    %v2650 = vshrl.u32 %v2649, 7
    %v2651 = vsub.s32 %v2648, %v2650
    %v2652 = vrot.slane %v2644, %v2651
    %v2654 = vunpack.c.l.s4 1983009808
    %v2655 = vunpack.c.0.s8 %v2654
    %v2656 = vlaneseq
    %v2657 = vshrl.u32 %v2656, 7
    %v2658 = vsub.s32 %v2655, %v2657
    %v2659 = vrot.slane %v2645, %v2658
    %v2660 = vcombine.low %v2604, %v2620
    %v2661 = vcombine.high %v2604, %v2620
    %v2663 = vunpack.c.l.s4 1934713408
    %v2664 = vunpack.c.0.s8 %v2663
    %v2665 = vlaneseq
    %v2666 = vshrl.u32 %v2665, 7
    %v2667 = vsub.s32 %v2664, %v2666
    %v2668 = vrot.slane %v2660, %v2667
    %v2670 = vunpack.c.l.s4 1934713408
    %v2671 = vunpack.c.0.s8 %v2670
    %v2672 = vlaneseq
    %v2673 = vshrl.u32 %v2672, 7
    %v2674 = vsub.s32 %v2671, %v2673
    %v2675 = vrot.slane %v2661, %v2674
    %v2676 = vcombine.low %v2611, %v2627
    %v2677 = vcombine.high %v2611, %v2627
    %v2679 = vunpack.c.l.s4 1934713408
    %v2680 = vunpack.c.0.s8 %v2679
    %v2681 = vlaneseq
    %v2682 = vshrl.u32 %v2681, 7
    %v2683 = vsub.s32 %v2680, %v2682
    %v2684 = vrot.slane %v2676, %v2683
    %v2686 = vunpack.c.l.s4 1934713408
    %v2687 = vunpack.c.0.s8 %v2686
    %v2688 = vlaneseq
    %v2689 = vshrl.u32 %v2688, 7
    %v2690 = vsub.s32 %v2687, %v2689
    %v2691 = vrot.slane %v2677, %v2690
    %v2692 = vcombine.low %v2636, %v2652
    %v2693 = vcombine.high %v2636, %v2652
    %v2695 = vunpack.c.l.s4 1934713408
    %v2696 = vunpack.c.0.s8 %v2695
    %v2697 = vlaneseq
    %v2698 = vshrl.u32 %v2697, 7
    %v2699 = vsub.s32 %v2696, %v2698
    %v2700 = vrot.slane %v2692, %v2699
    %v2702 = vunpack.c.l.s4 1934713408
    %v2703 = vunpack.c.0.s8 %v2702
    %v2704 = vlaneseq
    %v2705 = vshrl.u32 %v2704, 7
    %v2706 = vsub.s32 %v2703, %v2705
    %v2707 = vrot.slane %v2693, %v2706
    %v2708 = vcombine.low %v2643, %v2659
    %v2709 = vcombine.high %v2643, %v2659
    %v2711 = vunpack.c.l.s4 1934713408
    %v2712 = vunpack.c.0.s8 %v2711
    %v2713 = vlaneseq
    %v2714 = vshrl.u32 %v2713, 7
    %v2715 = vsub.s32 %v2712, %v2714
    %v2716 = vrot.slane %v2708, %v2715
    %v2718 = vunpack.c.l.s4 1934713408
    %v2719 = vunpack.c.0.s8 %v2718
    %v2720 = vlaneseq
    %v2721 = vshrl.u32 %v2720, 7
    %v2722 = vsub.s32 %v2719, %v2721
    %v2723 = vrot.slane %v2709, %v2722
    %v2724 = vcombine.low %v2668, %v2700
    %v2725 = vcombine.high %v2668, %v2700
    %v2726 = vcombine.low %v2675, %v2707
    %v2727 = vcombine.high %v2675, %v2707
    %v2728 = vcombine.low %v2684, %v2716
    %v2729 = vcombine.high %v2684, %v2716
    %v2730 = vcombine.low %v2691, %v2723
    %v2731 = vcombine.high %v2691, %v2723
    %v2732 = vcombine.low %v2020, %v2039
    %v2733 = vcombine.high %v2020, %v2039
    %v2735 = vunpack.c.l.s4 1983009808
    %v2736 = vunpack.c.0.s8 %v2735
    %v2737 = vlaneseq
    %v2738 = vshrl.u32 %v2737, 7
    %v2739 = vsub.s32 %v2736, %v2738
    %v2740 = vrot.slane %v2732, %v2739
    %v2742 = vunpack.c.l.s4 1983009808
    %v2743 = vunpack.c.0.s8 %v2742
    %v2744 = vlaneseq
    %v2745 = vshrl.u32 %v2744, 7
    %v2746 = vsub.s32 %v2743, %v2745
    %v2747 = vrot.slane %v2733, %v2746
    %v2748 = vcombine.low %v2033, %v2045
    %v2749 = vcombine.high %v2033, %v2045
    %v2751 = vunpack.c.l.s4 1983009808
    %v2752 = vunpack.c.0.s8 %v2751
    %v2753 = vlaneseq
    %v2754 = vshrl.u32 %v2753, 7
    %v2755 = vsub.s32 %v2752, %v2754
    %v2756 = vrot.slane %v2748, %v2755
    %v2758 = vunpack.c.l.s4 1983009808
    %v2759 = vunpack.c.0.s8 %v2758
    %v2760 = vlaneseq
    %v2761 = vshrl.u32 %v2760, 7
    %v2762 = vsub.s32 %v2759, %v2761
    %v2763 = vrot.slane %v2749, %v2762
    %v2764 = vcombine.low %v2021, %v2059
    %v2765 = vcombine.high %v2021, %v2059
    %v2767 = vunpack.c.l.s4 1983009808
    %v2768 = vunpack.c.0.s8 %v2767
    %v2769 = vlaneseq
    %v2770 = vshrl.u32 %v2769, 7
    %v2771 = vsub.s32 %v2768, %v2770
    %v2772 = vrot.slane %v2764, %v2771
    %v2774 = vunpack.c.l.s4 1983009808
    %v2775 = vunpack.c.0.s8 %v2774
    %v2776 = vlaneseq
    %v2777 = vshrl.u32 %v2776, 7
    %v2778 = vsub.s32 %v2775, %v2777
    %v2779 = vrot.slane %v2765, %v2778
    %v2780 = vcombine.low %v2053, %v2065
    %v2781 = vcombine.high %v2053, %v2065
    %v2783 = vunpack.c.l.s4 1983009808
    %v2784 = vunpack.c.0.s8 %v2783
    %v2785 = vlaneseq
    %v2786 = vshrl.u32 %v2785, 7
    %v2787 = vsub.s32 %v2784, %v2786
    %v2788 = vrot.slane %v2780, %v2787
    %v2790 = vunpack.c.l.s4 1983009808
    %v2791 = vunpack.c.0.s8 %v2790
    %v2792 = vlaneseq
    %v2793 = vshrl.u32 %v2792, 7
    %v2794 = vsub.s32 %v2791, %v2793
    %v2795 = vrot.slane %v2781, %v2794
    %v2796 = vcombine.low %v2740, %v2756
    %v2797 = vcombine.high %v2740, %v2756
    %v2799 = vunpack.c.l.s4 1934713408
    %v2800 = vunpack.c.0.s8 %v2799
    %v2801 = vlaneseq
    %v2802 = vshrl.u32 %v2801, 7
    %v2803 = vsub.s32 %v2800, %v2802
    %v2804 = vrot.slane %v2796, %v2803
    %v2806 = vunpack.c.l.s4 1934713408
    %v2807 = vunpack.c.0.s8 %v2806
    %v2808 = vlaneseq
    %v2809 = vshrl.u32 %v2808, 7
    %v2810 = vsub.s32 %v2807, %v2809
    %v2811 = vrot.slane %v2797, %v2810
    %v2812 = vcombine.low %v2747, %v2763
    %v2813 = vcombine.high %v2747, %v2763
    %v2815 = vunpack.c.l.s4 1934713408
    %v2816 = vunpack.c.0.s8 %v2815
    %v2817 = vlaneseq
    %v2818 = vshrl.u32 %v2817, 7
    %v2819 = vsub.s32 %v2816, %v2818
    %v2820 = vrot.slane %v2812, %v2819
    %v2822 = vunpack.c.l.s4 1934713408
    %v2823 = vunpack.c.0.s8 %v2822
    %v2824 = vlaneseq
    %v2825 = vshrl.u32 %v2824, 7
    %v2826 = vsub.s32 %v2823, %v2825
    %v2827 = vrot.slane %v2813, %v2826
    %v2828 = vcombine.low %v2772, %v2788
    %v2829 = vcombine.high %v2772, %v2788
    %v2831 = vunpack.c.l.s4 1934713408
    %v2832 = vunpack.c.0.s8 %v2831
    %v2833 = vlaneseq
    %v2834 = vshrl.u32 %v2833, 7
    %v2835 = vsub.s32 %v2832, %v2834
    %v2836 = vrot.slane %v2828, %v2835
    %v2838 = vunpack.c.l.s4 1934713408
    %v2839 = vunpack.c.0.s8 %v2838
    %v2840 = vlaneseq
    %v2841 = vshrl.u32 %v2840, 7
    %v2842 = vsub.s32 %v2839, %v2841
    %v2843 = vrot.slane %v2829, %v2842
    %v2844 = vcombine.low %v2779, %v2795
    %v2845 = vcombine.high %v2779, %v2795
    %v2847 = vunpack.c.l.s4 1934713408
    %v2848 = vunpack.c.0.s8 %v2847
    %v2849 = vlaneseq
    %v2850 = vshrl.u32 %v2849, 7
    %v2851 = vsub.s32 %v2848, %v2850
    %v2852 = vrot.slane %v2844, %v2851
    %v2854 = vunpack.c.l.s4 1934713408
    %v2855 = vunpack.c.0.s8 %v2854
    %v2856 = vlaneseq
    %v2857 = vshrl.u32 %v2856, 7
    %v2858 = vsub.s32 %v2855, %v2857
    %v2859 = vrot.slane %v2845, %v2858
    %v2860 = vcombine.low %v2804, %v2836
    %v2861 = vcombine.high %v2804, %v2836
    %v2862 = vcombine.low %v2811, %v2843
    %v2863 = vcombine.high %v2811, %v2843
    %v2864 = vcombine.low %v2820, %v2852
    %v2865 = vcombine.high %v2820, %v2852
    %v2866 = vcombine.low %v2827, %v2859
    %v2867 = vcombine.high %v2827, %v2859
    %v2868 = vcombine.low %v2022, %v2079
    %v2869 = vcombine.high %v2022, %v2079
    %v2871 = vunpack.c.l.s4 1983009808
    %v2872 = vunpack.c.0.s8 %v2871
    %v2873 = vlaneseq
    %v2874 = vshrl.u32 %v2873, 7
    %v2875 = vsub.s32 %v2872, %v2874
    %v2876 = vrot.slane %v2868, %v2875
    %v2878 = vunpack.c.l.s4 1983009808
    %v2879 = vunpack.c.0.s8 %v2878
    %v2880 = vlaneseq
    %v2881 = vshrl.u32 %v2880, 7
    %v2882 = vsub.s32 %v2879, %v2881
    %v2883 = vrot.slane %v2869, %v2882
    %v2884 = vcombine.low %v2073, %v2085
    %v2885 = vcombine.high %v2073, %v2085
    %v2887 = vunpack.c.l.s4 1983009808
    %v2888 = vunpack.c.0.s8 %v2887
    %v2889 = vlaneseq
    %v2890 = vshrl.u32 %v2889, 7
    %v2891 = vsub.s32 %v2888, %v2890
    %v2892 = vrot.slane %v2884, %v2891
    %v2894 = vunpack.c.l.s4 1983009808
    %v2895 = vunpack.c.0.s8 %v2894
    %v2896 = vlaneseq
    %v2897 = vshrl.u32 %v2896, 7
    %v2898 = vsub.s32 %v2895, %v2897
    %v2899 = vrot.slane %v2885, %v2898
    %v2900 = vcombine.low %v2023, %v2099
    %v2901 = vcombine.high %v2023, %v2099
    %v2903 = vunpack.c.l.s4 1983009808
    %v2904 = vunpack.c.0.s8 %v2903
    %v2905 = vlaneseq
    %v2906 = vshrl.u32 %v2905, 7
    %v2907 = vsub.s32 %v2904, %v2906
    %v2908 = vrot.slane %v2900, %v2907
    %v2910 = vunpack.c.l.s4 1983009808
    %v2911 = vunpack.c.0.s8 %v2910
    %v2912 = vlaneseq
    %v2913 = vshrl.u32 %v2912, 7
    %v2914 = vsub.s32 %v2911, %v2913
    %v2915 = vrot.slane %v2901, %v2914
    %v2916 = vcombine.low %v2093, %v2105
    %v2917 = vcombine.high %v2093, %v2105
    %v2919 = vunpack.c.l.s4 1983009808
    %v2920 = vunpack.c.0.s8 %v2919
    %v2921 = vlaneseq
    %v2922 = vshrl.u32 %v2921, 7
    %v2923 = vsub.s32 %v2920, %v2922
    %v2924 = vrot.slane %v2916, %v2923
    %v2926 = vunpack.c.l.s4 1983009808
    %v2927 = vunpack.c.0.s8 %v2926
    %v2928 = vlaneseq
    %v2929 = vshrl.u32 %v2928, 7
    %v2930 = vsub.s32 %v2927, %v2929
    %v2931 = vrot.slane %v2917, %v2930
    %v2932 = vcombine.low %v2876, %v2892
    %v2933 = vcombine.high %v2876, %v2892
    %v2935 = vunpack.c.l.s4 1934713408
    %v2936 = vunpack.c.0.s8 %v2935
    %v2937 = vlaneseq
    %v2938 = vshrl.u32 %v2937, 7
    %v2939 = vsub.s32 %v2936, %v2938
    %v2940 = vrot.slane %v2932, %v2939
    %v2942 = vunpack.c.l.s4 1934713408
    %v2943 = vunpack.c.0.s8 %v2942
    %v2944 = vlaneseq
    %v2945 = vshrl.u32 %v2944, 7
    %v2946 = vsub.s32 %v2943, %v2945
    %v2947 = vrot.slane %v2933, %v2946
    %v2948 = vcombine.low %v2883, %v2899
    %v2949 = vcombine.high %v2883, %v2899
    %v2951 = vunpack.c.l.s4 1934713408
    %v2952 = vunpack.c.0.s8 %v2951
    %v2953 = vlaneseq
    %v2954 = vshrl.u32 %v2953, 7
    %v2955 = vsub.s32 %v2952, %v2954
    %v2956 = vrot.slane %v2948, %v2955
    %v2958 = vunpack.c.l.s4 1934713408
    %v2959 = vunpack.c.0.s8 %v2958
    %v2960 = vlaneseq
    %v2961 = vshrl.u32 %v2960, 7
    %v2962 = vsub.s32 %v2959, %v2961
    %v2963 = vrot.slane %v2949, %v2962
    %v2964 = vcombine.low %v2908, %v2924
    %v2965 = vcombine.high %v2908, %v2924
    %v2967 = vunpack.c.l.s4 1934713408
    %v2968 = vunpack.c.0.s8 %v2967
    %v2969 = vlaneseq
    %v2970 = vshrl.u32 %v2969, 7
    %v2971 = vsub.s32 %v2968, %v2970
    %v2972 = vrot.slane %v2964, %v2971
    %v2974 = vunpack.c.l.s4 1934713408
    %v2975 = vunpack.c.0.s8 %v2974
    %v2976 = vlaneseq
    %v2977 = vshrl.u32 %v2976, 7
    %v2978 = vsub.s32 %v2975, %v2977
    %v2979 = vrot.slane %v2965, %v2978
    %v2980 = vcombine.low %v2915, %v2931
    %v2981 = vcombine.high %v2915, %v2931
    %v2983 = vunpack.c.l.s4 1934713408
    %v2984 = vunpack.c.0.s8 %v2983
    %v2985 = vlaneseq
    %v2986 = vshrl.u32 %v2985, 7
    %v2987 = vsub.s32 %v2984, %v2986
    %v2988 = vrot.slane %v2980, %v2987
    %v2990 = vunpack.c.l.s4 1934713408
    %v2991 = vunpack.c.0.s8 %v2990
    %v2992 = vlaneseq
    %v2993 = vshrl.u32 %v2992, 7
    %v2994 = vsub.s32 %v2991, %v2993
    %v2995 = vrot.slane %v2981, %v2994
    %v2996 = vcombine.low %v2940, %v2972
    %v2997 = vcombine.high %v2940, %v2972
    %v2998 = vcombine.low %v2947, %v2979
    %v2999 = vcombine.high %v2947, %v2979
    %v3000 = vcombine.low %v2956, %v2988
    %v3001 = vcombine.high %v2956, %v2988
    %v3002 = vcombine.low %v2963, %v2995
    %v3003 = vcombine.high %v2963, %v2995
    %v3004 = vcombine.low %v2024, %v2119
    %v3005 = vcombine.high %v2024, %v2119
    %v3007 = vunpack.c.l.s4 1983009808
    %v3008 = vunpack.c.0.s8 %v3007
    %v3009 = vlaneseq
    %v3010 = vshrl.u32 %v3009, 7
    %v3011 = vsub.s32 %v3008, %v3010
    %v3012 = vrot.slane %v3004, %v3011
    %v3014 = vunpack.c.l.s4 1983009808
    %v3015 = vunpack.c.0.s8 %v3014
    %v3016 = vlaneseq
    %v3017 = vshrl.u32 %v3016, 7
    %v3018 = vsub.s32 %v3015, %v3017
    %v3019 = vrot.slane %v3005, %v3018
    %v3020 = vcombine.low %v2113, %v2125
    %v3021 = vcombine.high %v2113, %v2125
    %v3023 = vunpack.c.l.s4 1983009808
    %v3024 = vunpack.c.0.s8 %v3023
    %v3025 = vlaneseq
    %v3026 = vshrl.u32 %v3025, 7
    %v3027 = vsub.s32 %v3024, %v3026
    %v3028 = vrot.slane %v3020, %v3027
    %v3030 = vunpack.c.l.s4 1983009808
    %v3031 = vunpack.c.0.s8 %v3030
    %v3032 = vlaneseq
    %v3033 = vshrl.u32 %v3032, 7
    %v3034 = vsub.s32 %v3031, %v3033
    %v3035 = vrot.slane %v3021, %v3034
    %v3036 = vcombine.low %v2025, %v2139
    %v3037 = vcombine.high %v2025, %v2139
    %v3039 = vunpack.c.l.s4 1983009808
    %v3040 = vunpack.c.0.s8 %v3039
    %v3041 = vlaneseq
    %v3042 = vshrl.u32 %v3041, 7
    %v3043 = vsub.s32 %v3040, %v3042
    %v3044 = vrot.slane %v3036, %v3043
    %v3046 = vunpack.c.l.s4 1983009808
    %v3047 = vunpack.c.0.s8 %v3046
    %v3048 = vlaneseq
    %v3049 = vshrl.u32 %v3048, 7
    %v3050 = vsub.s32 %v3047, %v3049
    %v3051 = vrot.slane %v3037, %v3050
    %v3052 = vcombine.low %v2133, %v2145
    %v3053 = vcombine.high %v2133, %v2145
    %v3055 = vunpack.c.l.s4 1983009808
    %v3056 = vunpack.c.0.s8 %v3055
    %v3057 = vlaneseq
    %v3058 = vshrl.u32 %v3057, 7
    %v3059 = vsub.s32 %v3056, %v3058
    %v3060 = vrot.slane %v3052, %v3059
    %v3062 = vunpack.c.l.s4 1983009808
    %v3063 = vunpack.c.0.s8 %v3062
    %v3064 = vlaneseq
    %v3065 = vshrl.u32 %v3064, 7
    %v3066 = vsub.s32 %v3063, %v3065
    %v3067 = vrot.slane %v3053, %v3066
    %v3068 = vcombine.low %v3012, %v3028
    %v3069 = vcombine.high %v3012, %v3028
    %v3071 = vunpack.c.l.s4 1934713408
    %v3072 = vunpack.c.0.s8 %v3071
    %v3073 = vlaneseq
    %v3074 = vshrl.u32 %v3073, 7
    %v3075 = vsub.s32 %v3072, %v3074
    %v3076 = vrot.slane %v3068, %v3075
    %v3078 = vunpack.c.l.s4 1934713408
    %v3079 = vunpack.c.0.s8 %v3078
    %v3080 = vlaneseq
    %v3081 = vshrl.u32 %v3080, 7
    %v3082 = vsub.s32 %v3079, %v3081
    %v3083 = vrot.slane %v3069, %v3082
    %v3084 = vcombine.low %v3019, %v3035
    %v3085 = vcombine.high %v3019, %v3035
    %v3087 = vunpack.c.l.s4 1934713408
    %v3088 = vunpack.c.0.s8 %v3087
    %v3089 = vlaneseq
    %v3090 = vshrl.u32 %v3089, 7
    %v3091 = vsub.s32 %v3088, %v3090
    %v3092 = vrot.slane %v3084, %v3091
    %v3094 = vunpack.c.l.s4 1934713408
    %v3095 = vunpack.c.0.s8 %v3094
    %v3096 = vlaneseq
    %v3097 = vshrl.u32 %v3096, 7
    %v3098 = vsub.s32 %v3095, %v3097
    %v3099 = vrot.slane %v3085, %v3098
    %v3100 = vcombine.low %v3044, %v3060
    %v3101 = vcombine.high %v3044, %v3060
    %v3103 = vunpack.c.l.s4 1934713408
    %v3104 = vunpack.c.0.s8 %v3103
    %v3105 = vlaneseq
    %v3106 = vshrl.u32 %v3105, 7
    %v3107 = vsub.s32 %v3104, %v3106
    %v3108 = vrot.slane %v3100, %v3107
    %v3110 = vunpack.c.l.s4 1934713408
    %v3111 = vunpack.c.0.s8 %v3110
    %v3112 = vlaneseq
    %v3113 = vshrl.u32 %v3112, 7
    %v3114 = vsub.s32 %v3111, %v3113
    %v3115 = vrot.slane %v3101, %v3114
    %v3116 = vcombine.low %v3051, %v3067
    %v3117 = vcombine.high %v3051, %v3067
    %v3119 = vunpack.c.l.s4 1934713408
    %v3120 = vunpack.c.0.s8 %v3119
    %v3121 = vlaneseq
    %v3122 = vshrl.u32 %v3121, 7
    %v3123 = vsub.s32 %v3120, %v3122
    %v3124 = vrot.slane %v3116, %v3123
    %v3126 = vunpack.c.l.s4 1934713408
    %v3127 = vunpack.c.0.s8 %v3126
    %v3128 = vlaneseq
    %v3129 = vshrl.u32 %v3128, 7
    %v3130 = vsub.s32 %v3127, %v3129
    %v3131 = vrot.slane %v3117, %v3130
    %v3132 = vcombine.low %v3076, %v3108
    %v3133 = vcombine.high %v3076, %v3108
    %v3134 = vcombine.low %v3083, %v3115
    %v3135 = vcombine.high %v3083, %v3115
    %v3136 = vcombine.low %v3092, %v3124
    %v3137 = vcombine.high %v3092, %v3124
    %v3138 = vcombine.low %v3099, %v3131
    %v3139 = vcombine.high %v3099, %v3131
    %v3140 = vcombine.low %v2026, %v2159
    %v3141 = vcombine.high %v2026, %v2159
    %v3143 = vunpack.c.l.s4 1983009808
    %v3144 = vunpack.c.0.s8 %v3143
    %v3145 = vlaneseq
    %v3146 = vshrl.u32 %v3145, 7
    %v3147 = vsub.s32 %v3144, %v3146
    %v3148 = vrot.slane %v3140, %v3147
    %v3150 = vunpack.c.l.s4 1983009808
    %v3151 = vunpack.c.0.s8 %v3150
    %v3152 = vlaneseq
    %v3153 = vshrl.u32 %v3152, 7
    %v3154 = vsub.s32 %v3151, %v3153
    %v3155 = vrot.slane %v3141, %v3154
    %v3156 = vcombine.low %v2153, %v2165
    %v3157 = vcombine.high %v2153, %v2165
    %v3159 = vunpack.c.l.s4 1983009808
    %v3160 = vunpack.c.0.s8 %v3159
    %v3161 = vlaneseq
    %v3162 = vshrl.u32 %v3161, 7
    %v3163 = vsub.s32 %v3160, %v3162
    %v3164 = vrot.slane %v3156, %v3163
    %v3166 = vunpack.c.l.s4 1983009808
    %v3167 = vunpack.c.0.s8 %v3166
    %v3168 = vlaneseq
    %v3169 = vshrl.u32 %v3168, 7
    %v3170 = vsub.s32 %v3167, %v3169
    %v3171 = vrot.slane %v3157, %v3170
    %v3172 = vcombine.low %v2027, %v2179
    %v3173 = vcombine.high %v2027, %v2179
    %v3175 = vunpack.c.l.s4 1983009808
    %v3176 = vunpack.c.0.s8 %v3175
    %v3177 = vlaneseq
    %v3178 = vshrl.u32 %v3177, 7
    %v3179 = vsub.s32 %v3176, %v3178
    %v3180 = vrot.slane %v3172, %v3179
    %v3182 = vunpack.c.l.s4 1983009808
    %v3183 = vunpack.c.0.s8 %v3182
    %v3184 = vlaneseq
    %v3185 = vshrl.u32 %v3184, 7
    %v3186 = vsub.s32 %v3183, %v3185
    %v3187 = vrot.slane %v3173, %v3186
    %v3188 = vcombine.low %v2173, %v2185
    %v3189 = vcombine.high %v2173, %v2185
    %v3191 = vunpack.c.l.s4 1983009808
    %v3192 = vunpack.c.0.s8 %v3191
    %v3193 = vlaneseq
    %v3194 = vshrl.u32 %v3193, 7
    %v3195 = vsub.s32 %v3192, %v3194
    %v3196 = vrot.slane %v3188, %v3195
    %v3198 = vunpack.c.l.s4 1983009808
    %v3199 = vunpack.c.0.s8 %v3198
    %v3200 = vlaneseq
    %v3201 = vshrl.u32 %v3200, 7
    %v3202 = vsub.s32 %v3199, %v3201
    %v3203 = vrot.slane %v3189, %v3202
    %v3204 = vcombine.low %v3148, %v3164
    %v3205 = vcombine.high %v3148, %v3164
    %v3207 = vunpack.c.l.s4 1934713408
    %v3208 = vunpack.c.0.s8 %v3207
    %v3209 = vlaneseq
    %v3210 = vshrl.u32 %v3209, 7
    %v3211 = vsub.s32 %v3208, %v3210
    %v3212 = vrot.slane %v3204, %v3211
    %v3214 = vunpack.c.l.s4 1934713408
    %v3215 = vunpack.c.0.s8 %v3214
    %v3216 = vlaneseq
    %v3217 = vshrl.u32 %v3216, 7
    %v3218 = vsub.s32 %v3215, %v3217
    %v3219 = vrot.slane %v3205, %v3218
    %v3220 = vcombine.low %v3155, %v3171
    %v3221 = vcombine.high %v3155, %v3171
    %v3223 = vunpack.c.l.s4 1934713408
    %v3224 = vunpack.c.0.s8 %v3223
    %v3225 = vlaneseq
    %v3226 = vshrl.u32 %v3225, 7
    %v3227 = vsub.s32 %v3224, %v3226
    %v3228 = vrot.slane %v3220, %v3227
    %v3230 = vunpack.c.l.s4 1934713408
    %v3231 = vunpack.c.0.s8 %v3230
    %v3232 = vlaneseq
    %v3233 = vshrl.u32 %v3232, 7
    %v3234 = vsub.s32 %v3231, %v3233
    %v3235 = vrot.slane %v3221, %v3234
    %v3236 = vcombine.low %v3180, %v3196
    %v3237 = vcombine.high %v3180, %v3196
    %v3239 = vunpack.c.l.s4 1934713408
    %v3240 = vunpack.c.0.s8 %v3239
    %v3241 = vlaneseq
    %v3242 = vshrl.u32 %v3241, 7
    %v3243 = vsub.s32 %v3240, %v3242
    %v3244 = vrot.slane %v3236, %v3243
    %v3246 = vunpack.c.l.s4 1934713408
    %v3247 = vunpack.c.0.s8 %v3246
    %v3248 = vlaneseq
    %v3249 = vshrl.u32 %v3248, 7
    %v3250 = vsub.s32 %v3247, %v3249
    %v3251 = vrot.slane %v3237, %v3250
    %v3252 = vcombine.low %v3187, %v3203
    %v3253 = vcombine.high %v3187, %v3203
    %v3255 = vunpack.c.l.s4 1934713408
    %v3256 = vunpack.c.0.s8 %v3255
    %v3257 = vlaneseq
    %v3258 = vshrl.u32 %v3257, 7
    %v3259 = vsub.s32 %v3256, %v3258
    %v3260 = vrot.slane %v3252, %v3259
    %v3262 = vunpack.c.l.s4 1934713408
    %v3263 = vunpack.c.0.s8 %v3262
    %v3264 = vlaneseq
    %v3265 = vshrl.u32 %v3264, 7
    %v3266 = vsub.s32 %v3263, %v3265
    %v3267 = vrot.slane %v3253, %v3266
    %v3268 = vcombine.low %v3212, %v3244
    %v3269 = vcombine.high %v3212, %v3244
    %v3270 = vcombine.low %v3219, %v3251
    %v3271 = vcombine.high %v3219, %v3251
    %v3272 = vcombine.low %v3228, %v3260
    %v3273 = vcombine.high %v3228, %v3260
    %v3274 = vcombine.low %v3235, %v3267
    %v3275 = vcombine.high %v3235, %v3267
    %3276 = vst.msk [vmem:[#allocation3] sm:$0xff] %vm46, %v2316
    %3277 = vst.msk [vmem:[#allocation3 + $0x8] sm:$0xff] %vm46, %v2452
    %3278 = vst.msk [vmem:[#allocation3 + $0x10] sm:$0xff] %vm46, %v2588
    %3279 = vst.msk [vmem:[#allocation3 + $0x18] sm:$0xff] %vm46, %v2724
    %3280 = vst.msk [vmem:[#allocation3 + $0x20] sm:$0xff] %vm46, %v2317
    %3281 = vst.msk [vmem:[#allocation3 + $0x28] sm:$0xff] %vm46, %v2453
    %3282 = vst.msk [vmem:[#allocation3 + $0x30] sm:$0xff] %vm46, %v2589
    %3283 = vst.msk [vmem:[#allocation3 + $0x38] sm:$0xff] %vm46, %v2725
    %3284 = vst.msk [vmem:[#allocation3 + $0x40] sm:$0xff] %vm46, %v2318
    %3285 = vst.msk [vmem:[#allocation3 + $0x48] sm:$0xff] %vm46, %v2454
    %3286 = vst.msk [vmem:[#allocation3 + $0x50] sm:$0xff] %vm46, %v2590
    %3287 = vst.msk [vmem:[#allocation3 + $0x58] sm:$0xff] %vm46, %v2726
    %3288 = vst.msk [vmem:[#allocation3 + $0x60] sm:$0xff] %vm46, %v2319
    %3289 = vst.msk [vmem:[#allocation3 + $0x68] sm:$0xff] %vm46, %v2455
    %3290 = vst.msk [vmem:[#allocation3 + $0x70] sm:$0xff] %vm46, %v2591
    %3291 = vst.msk [vmem:[#allocation3 + $0x78] sm:$0xff] %vm46, %v2727
    %3292 = vst.msk [vmem:[#allocation3 + $0x80] sm:$0xff] %vm46, %v2320
    %3293 = vst.msk [vmem:[#allocation3 + $0x88] sm:$0xff] %vm46, %v2456
    %3294 = vst.msk [vmem:[#allocation3 + $0x90] sm:$0xff] %vm46, %v2592
    %3295 = vst.msk [vmem:[#allocation3 + $0x98] sm:$0xff] %vm46, %v2728
    %3296 = vst.msk [vmem:[#allocation3 + $0xa0] sm:$0xff] %vm46, %v2321
    %3297 = vst.msk [vmem:[#allocation3 + $0xa8] sm:$0xff] %vm46, %v2457
    %3298 = vst.msk [vmem:[#allocation3 + $0xb0] sm:$0xff] %vm46, %v2593
    %3299 = vst.msk [vmem:[#allocation3 + $0xb8] sm:$0xff] %vm46, %v2729
    %3300 = vst.msk [vmem:[#allocation3 + $0xc0] sm:$0xff] %vm46, %v2322
    %3301 = vst.msk [vmem:[#allocation3 + $0xc8] sm:$0xff] %vm46, %v2458
    %3302 = vst.msk [vmem:[#allocation3 + $0xd0] sm:$0xff] %vm46, %v2594
    %3303 = vst.msk [vmem:[#allocation3 + $0xd8] sm:$0xff] %vm46, %v2730
    %3304 = vst.msk [vmem:[#allocation3 + $0xe0] sm:$0xff] %vm46, %v2323
    %3305 = vst.msk [vmem:[#allocation3 + $0xe8] sm:$0xff] %vm46, %v2459
    %3306 = vst.msk [vmem:[#allocation3 + $0xf0] sm:$0xff] %vm46, %v2595
    %3307 = vst.msk [vmem:[#allocation3 + $0xf8] sm:$0xff] %vm46, %v2731
    %3308 = vst.msk [vmem:[#allocation3 + $0x100] sm:$0xff] %vm46, %v2860
    %3309 = vst.msk [vmem:[#allocation3 + $0x108] sm:$0xff] %vm46, %v2996
    %3310 = vst.msk [vmem:[#allocation3 + $0x110] sm:$0xff] %vm46, %v3132
    %3311 = vst.msk [vmem:[#allocation3 + $0x118] sm:$0xff] %vm46, %v3268
    %3312 = vst.msk [vmem:[#allocation3 + $0x120] sm:$0xff] %vm46, %v2861
    %3313 = vst.msk [vmem:[#allocation3 + $0x128] sm:$0xff] %vm46, %v2997
    %3314 = vst.msk [vmem:[#allocation3 + $0x130] sm:$0xff] %vm46, %v3133
    %3315 = vst.msk [vmem:[#allocation3 + $0x138] sm:$0xff] %vm46, %v3269
    %3316 = vst.msk [vmem:[#allocation3 + $0x140] sm:$0xff] %vm46, %v2862
    %3317 = vst.msk [vmem:[#allocation3 + $0x148] sm:$0xff] %vm46, %v2998
    %3318 = vst.msk [vmem:[#allocation3 + $0x150] sm:$0xff] %vm46, %v3134
    %3319 = vst.msk [vmem:[#allocation3 + $0x158] sm:$0xff] %vm46, %v3270
    %3320 = vst.msk [vmem:[#allocation3 + $0x160] sm:$0xff] %vm46, %v2863
    %3321 = vst.msk [vmem:[#allocation3 + $0x168] sm:$0xff] %vm46, %v2999
    %3322 = vst.msk [vmem:[#allocation3 + $0x170] sm:$0xff] %vm46, %v3135
    %3323 = vst.msk [vmem:[#allocation3 + $0x178] sm:$0xff] %vm46, %v3271
    %3324 = vst.msk [vmem:[#allocation3 + $0x180] sm:$0xff] %vm46, %v2864
    %3325 = vst.msk [vmem:[#allocation3 + $0x188] sm:$0xff] %vm46, %v3000
    %3326 = vst.msk [vmem:[#allocation3 + $0x190] sm:$0xff] %vm46, %v3136
    %3327 = vst.msk [vmem:[#allocation3 + $0x198] sm:$0xff] %vm46, %v3272
    %3328 = vst.msk [vmem:[#allocation3 + $0x1a0] sm:$0xff] %vm46, %v2865
    %3329 = vst.msk [vmem:[#allocation3 + $0x1a8] sm:$0xff] %vm46, %v3001
    %3330 = vst.msk [vmem:[#allocation3 + $0x1b0] sm:$0xff] %vm46, %v3137
    %3331 = vst.msk [vmem:[#allocation3 + $0x1b8] sm:$0xff] %vm46, %v3273
    %3332 = vst.msk [vmem:[#allocation3 + $0x1c0] sm:$0xff] %vm46, %v2866
    %3333 = vst.msk [vmem:[#allocation3 + $0x1c8] sm:$0xff] %vm46, %v3002
    %3334 = vst.msk [vmem:[#allocation3 + $0x1d0] sm:$0xff] %vm46, %v3138
    %3335 = vst.msk [vmem:[#allocation3 + $0x1d8] sm:$0xff] %vm46, %v3274
    %3336 = vst.msk [vmem:[#allocation3 + $0x1e0] sm:$0xff] %vm46, %v2867
    %3337 = vst.msk [vmem:[#allocation3 + $0x1e8] sm:$0xff] %vm46, %v3003
    %3338 = vst.msk [vmem:[#allocation3 + $0x1f0] sm:$0xff] %vm46, %v3139
    %3339 = vst.msk [vmem:[#allocation3 + $0x1f8] sm:$0xff] %vm46, %v3275
    %3340 = vst.msk [vmem:[#allocation4] sm:$0xff] %vm46, %v120
    %3341 = vst.msk [vmem:[#allocation4 + $0x8] sm:$0xff] %vm46, %v125
    %v3342 = vld [vmem:[#allocation2] sm:$0x1]
    %v3343 = vld [vmem:[#allocation2 + $0x1] sm:$0x1]
    %v3344 = vld [vmem:[#allocation3] sm:$0xff]
    %v3345 = vld [vmem:[#allocation3 + $0x8] sm:$0xff]
    %v3346 = vld [vmem:[#allocation3 + $0x10] sm:$0xff]
    %v3347 = vld [vmem:[#allocation3 + $0x18] sm:$0xff]
    %v3348 = vld [vmem:[#allocation3 + $0x100] sm:$0xff]
    %v3349 = vld [vmem:[#allocation3 + $0x108] sm:$0xff]
    %v3350 = vld [vmem:[#allocation3 + $0x110] sm:$0xff]
    %v3351 = vld [vmem:[#allocation3 + $0x118] sm:$0xff]
    %v3352 = vld [vmem:[#allocation4] sm:$0x1]
    %v3353 = vld [vmem:[#allocation4 + $0x8] sm:$0x1]
    %v3355 = vsel %vm46, %v3342, 0
    %v3358 = vsel %vm46, %v3344, 0
    %v3361 = vsel %vm46, %v3345, 0
    %v3364 = vsel %vm46, %v3346, 0
    %v3367 = vsel %vm46, %v3347, 0
    %3369 = vmatprep.subr.mxu0 0.0
    %3370 = vmatpush1.xpose.msra.mxu0 %v3358
    %3371 = vmatprep.subr.mxu0 0.0
    %3372 = vmatpush1.xpose.msra.mxu0 %v3361
    %3373 = vmatprep.subr.mxu0 0.0
    %3374 = vmatpush1.xpose.msra.mxu0 %v3364
    %3375 = vmatprep.subr.mxu0 0.0
    %3376 = vmatpush1.xpose.msra.mxu0 %v3367
    %3377 = vmatprep.subr.mxu0 0.0
    %3378 = vmatpush1.xpose.msra.mxu0 0.0
    %3379 = vmatprep.subr.mxu0 0.0
    %3380 = vmatpush1.xpose.msra.mxu0 0.0
    %3381 = vmatprep.subr.mxu0 0.0
    %3382 = vmatpush1.xpose.msra.mxu0 0.0
    %3383 = vmatprep.subr.mxu0 0.0
    %3384 = vmatpush1.xpose.msra.mxu0 0.0
    %3385 = vmatprep.subr.mxu0 0.0
    %3386 = vmatpush1.xpose.msra.mxu0 0.0
    %3387 = vmatprep.subr.mxu0 0.0
    %3388 = vmatpush1.xpose.msra.mxu0 0.0
    %3389 = vmatprep.subr.mxu0 0.0
    %3390 = vmatpush1.xpose.msra.mxu0 0.0
    %3391 = vmatprep.subr.mxu0 0.0
    %3392 = vmatpush1.xpose.msra.mxu0 0.0
    %3393 = vmatprep.subr.mxu0 0.0
    %3394 = vmatpush1.xpose.msra.mxu0 0.0
    %3395 = vmatprep.subr.mxu0 0.0
    %3396 = vmatpush1.xpose.msra.mxu0 0.0
    %3397 = vmatprep.subr.mxu0 0.0
    %3398 = vmatpush1.xpose.msra.mxu0 0.0
    %3399 = vmatprep.subr.mxu0 0.0
    %3400 = vmatpush1.xpose.msra.mxu0 0.0
    %3401 = vmatprep.subr.mxu0 0.0
    %3402 = vmatpush1.xpose.msra.mxu0 0.0
    %3403 = vmatprep.subr.mxu0 0.0
    %3404 = vmatpush1.xpose.msra.mxu0 0.0
    %3405 = vmatprep.subr.mxu0 0.0
    %3406 = vmatpush1.xpose.msra.mxu0 0.0
    %3407 = vmatprep.subr.mxu0 0.0
    %3408 = vmatpush1.xpose.msra.mxu0 0.0
    %3409 = vmatprep.subr.mxu0 0.0
    %3410 = vmatpush1.xpose.msra.mxu0 0.0
    %3411 = vmatprep.subr.mxu0 0.0
    %3412 = vmatpush1.xpose.msra.mxu0 0.0
    %3413 = vmatprep.subr.mxu0 0.0
    %3414 = vmatpush1.xpose.msra.mxu0 0.0
    %3415 = vmatprep.subr.mxu0 0.0
    %3416 = vmatpush1.xpose.msra.mxu0 0.0
    %3417 = vmatprep.subr.mxu0 0.0
    %3418 = vmatpush1.xpose.msra.mxu0 0.0
    %3419 = vmatprep.subr.mxu0 0.0
    %3420 = vmatpush1.xpose.msra.mxu0 0.0
    %3421 = vmatprep.subr.mxu0 0.0
    %3422 = vmatpush1.xpose.msra.mxu0 0.0
    %3423 = vmatprep.subr.mxu0 0.0
    %3424 = vmatpush1.xpose.msra.mxu0 0.0
    %3425 = vmatprep.subr.mxu0 0.0
    %3426 = vmatpush1.xpose.msra.mxu0 0.0
    %3427 = vmatprep.subr.mxu0 0.0
    %3428 = vmatpush1.xpose.msra.mxu0 0.0
    %3429 = vmatprep.subr.mxu0 0.0
    %3430 = vmatpush1.xpose.msra.mxu0 0.0
    %3431 = vmatprep.subr.mxu0 0.0
    %3432 = vmatpush1.xpose.msra.mxu0 0.0
    %3433 = vmatprep.mubr.f32.mxu0 0.0
    %3434 = vmatmul.mubr.f32.gmra.mrb[0].mxu0 %v3355
    %v3435 = vpop.f32.mrb[0].mxu0
    %v3436 = vadd.f32 %v3352, %v3435
    %v3437 = vpop.f32.mrb[0].mxu0
    %3438 = vdwg.mxu0
    %v3440 = vsel %vm46, %v3343, 0
    %v3443 = vsel %vm46, %v3348, 0
    %v3446 = vsel %vm46, %v3349, 0
    %v3449 = vsel %vm46, %v3350, 0
    %v3452 = vsel %vm46, %v3351, 0
    %3454 = vmatprep.subr.mxu0 0.0
    %3455 = vmatpush1.xpose.msra.mxu0 %v3443
    %3456 = vmatprep.subr.mxu0 0.0
    %3457 = vmatpush1.xpose.msra.mxu0 %v3446
    %3458 = vmatprep.subr.mxu0 0.0
    %3459 = vmatpush1.xpose.msra.mxu0 %v3449
    %3460 = vmatprep.subr.mxu0 0.0
    %3461 = vmatpush1.xpose.msra.mxu0 %v3452
    %3462 = vmatprep.subr.mxu0 0.0
    %3463 = vmatpush1.xpose.msra.mxu0 0.0
    %3464 = vmatprep.subr.mxu0 0.0
    %3465 = vmatpush1.xpose.msra.mxu0 0.0
    %3466 = vmatprep.subr.mxu0 0.0
    %3467 = vmatpush1.xpose.msra.mxu0 0.0
    %3468 = vmatprep.subr.mxu0 0.0
    %3469 = vmatpush1.xpose.msra.mxu0 0.0
    %3470 = vmatprep.subr.mxu0 0.0
    %3471 = vmatpush1.xpose.msra.mxu0 0.0
    %3472 = vmatprep.subr.mxu0 0.0
    %3473 = vmatpush1.xpose.msra.mxu0 0.0
    %3474 = vmatprep.subr.mxu0 0.0
    %3475 = vmatpush1.xpose.msra.mxu0 0.0
    %3476 = vmatprep.subr.mxu0 0.0
    %3477 = vmatpush1.xpose.msra.mxu0 0.0
    %3478 = vmatprep.subr.mxu0 0.0
    %3479 = vmatpush1.xpose.msra.mxu0 0.0
    %3480 = vmatprep.subr.mxu0 0.0
    %3481 = vmatpush1.xpose.msra.mxu0 0.0
    %3482 = vmatprep.subr.mxu0 0.0
    %3483 = vmatpush1.xpose.msra.mxu0 0.0
    %3484 = vmatprep.subr.mxu0 0.0
    %3485 = vmatpush1.xpose.msra.mxu0 0.0
    %3486 = vmatprep.subr.mxu0 0.0
    %3487 = vmatpush1.xpose.msra.mxu0 0.0
    %3488 = vmatprep.subr.mxu0 0.0
    %3489 = vmatpush1.xpose.msra.mxu0 0.0
    %3490 = vmatprep.subr.mxu0 0.0
    %3491 = vmatpush1.xpose.msra.mxu0 0.0
    %3492 = vmatprep.subr.mxu0 0.0
    %3493 = vmatpush1.xpose.msra.mxu0 0.0
    %3494 = vmatprep.subr.mxu0 0.0
    %3495 = vmatpush1.xpose.msra.mxu0 0.0
    %3496 = vmatprep.subr.mxu0 0.0
    %3497 = vmatpush1.xpose.msra.mxu0 0.0
    %3498 = vmatprep.subr.mxu0 0.0
    %3499 = vmatpush1.xpose.msra.mxu0 0.0
    %3500 = vmatprep.subr.mxu0 0.0
    %3501 = vmatpush1.xpose.msra.mxu0 0.0
    %3502 = vmatprep.subr.mxu0 0.0
    %3503 = vmatpush1.xpose.msra.mxu0 0.0
    %3504 = vmatprep.subr.mxu0 0.0
    %3505 = vmatpush1.xpose.msra.mxu0 0.0
    %3506 = vmatprep.subr.mxu0 0.0
    %3507 = vmatpush1.xpose.msra.mxu0 0.0
    %3508 = vmatprep.subr.mxu0 0.0
    %3509 = vmatpush1.xpose.msra.mxu0 0.0
    %3510 = vmatprep.subr.mxu0 0.0
    %3511 = vmatpush1.xpose.msra.mxu0 0.0
    %3512 = vmatprep.subr.mxu0 0.0
    %3513 = vmatpush1.xpose.msra.mxu0 0.0
    %3514 = vmatprep.subr.mxu0 0.0
    %3515 = vmatpush1.xpose.msra.mxu0 0.0
    %3516 = vmatprep.subr.mxu0 0.0
    %3517 = vmatpush1.xpose.msra.mxu0 0.0
    %3518 = vmatprep.mubr.f32.mxu0 0.0
    %3519 = vmatmul.mubr.f32.gmra.mrb[0].mxu0 %v3440
    %v3520 = vpop.f32.mrb[0].mxu0
    %v3521 = vadd.f32 %v3353, %v3520
    %v3522 = vpop.f32.mrb[0].mxu0
    %3523 = vdwg.mxu0
    %s3524 = scalar_lea.vmem [#allocation3], 32
    %v3525 = vld [vmem:[%s3524] sm:$0xff]
    %v3526 = vld [vmem:[%s3524 + $0x8] sm:$0xff]
    %v3527 = vld [vmem:[%s3524 + $0x10] sm:$0xff]
    %v3528 = vld [vmem:[%s3524 + $0x18] sm:$0xff]
    %v3529 = vld [vmem:[%s3524 + $0x100] sm:$0xff]
    %v3530 = vld [vmem:[%s3524 + $0x108] sm:$0xff]
    %v3531 = vld [vmem:[%s3524 + $0x110] sm:$0xff]
    %v3532 = vld [vmem:[%s3524 + $0x118] sm:$0xff]
    %v3533 = vld [vmem:[#allocation4 + $0x1] sm:$0x1]
    %v3534 = vld [vmem:[#allocation4 + $0x9] sm:$0x1]
    %v3536 = vsel %vm46, %v3436, 0
    %v3539 = vsel %vm46, %v3525, 0
    %v3542 = vsel %vm46, %v3526, 0
    %v3545 = vsel %vm46, %v3527, 0
    %v3548 = vsel %vm46, %v3528, 0
    %3550 = vmatprep.subr.mxu0 0.0
    %3551 = vmatpush1.xpose.msra.mxu0 %v3539
    %3552 = vmatprep.subr.mxu0 0.0
    %3553 = vmatpush1.xpose.msra.mxu0 %v3542
    %3554 = vmatprep.subr.mxu0 0.0
    %3555 = vmatpush1.xpose.msra.mxu0 %v3545
    %3556 = vmatprep.subr.mxu0 0.0
    %3557 = vmatpush1.xpose.msra.mxu0 %v3548
    %3558 = vmatprep.subr.mxu0 0.0
    %3559 = vmatpush1.xpose.msra.mxu0 0.0
    %3560 = vmatprep.subr.mxu0 0.0
    %3561 = vmatpush1.xpose.msra.mxu0 0.0
    %3562 = vmatprep.subr.mxu0 0.0
    %3563 = vmatpush1.xpose.msra.mxu0 0.0
    %3564 = vmatprep.subr.mxu0 0.0
    %3565 = vmatpush1.xpose.msra.mxu0 0.0
    %3566 = vmatprep.subr.mxu0 0.0
    %3567 = vmatpush1.xpose.msra.mxu0 0.0
    %3568 = vmatprep.subr.mxu0 0.0
    %3569 = vmatpush1.xpose.msra.mxu0 0.0
    %3570 = vmatprep.subr.mxu0 0.0
    %3571 = vmatpush1.xpose.msra.mxu0 0.0
    %3572 = vmatprep.subr.mxu0 0.0
    %3573 = vmatpush1.xpose.msra.mxu0 0.0
    %3574 = vmatprep.subr.mxu0 0.0
    %3575 = vmatpush1.xpose.msra.mxu0 0.0
    %3576 = vmatprep.subr.mxu0 0.0
    %3577 = vmatpush1.xpose.msra.mxu0 0.0
    %3578 = vmatprep.subr.mxu0 0.0
    %3579 = vmatpush1.xpose.msra.mxu0 0.0
    %3580 = vmatprep.subr.mxu0 0.0
    %3581 = vmatpush1.xpose.msra.mxu0 0.0
    %3582 = vmatprep.subr.mxu0 0.0
    %3583 = vmatpush1.xpose.msra.mxu0 0.0
    %3584 = vmatprep.subr.mxu0 0.0
    %3585 = vmatpush1.xpose.msra.mxu0 0.0
    %3586 = vmatprep.subr.mxu0 0.0
    %3587 = vmatpush1.xpose.msra.mxu0 0.0
    %3588 = vmatprep.subr.mxu0 0.0
    %3589 = vmatpush1.xpose.msra.mxu0 0.0
    %3590 = vmatprep.subr.mxu0 0.0
    %3591 = vmatpush1.xpose.msra.mxu0 0.0
    %3592 = vmatprep.subr.mxu0 0.0
    %3593 = vmatpush1.xpose.msra.mxu0 0.0
    %3594 = vmatprep.subr.mxu0 0.0
    %3595 = vmatpush1.xpose.msra.mxu0 0.0
    %3596 = vmatprep.subr.mxu0 0.0
    %3597 = vmatpush1.xpose.msra.mxu0 0.0
    %3598 = vmatprep.subr.mxu0 0.0
    %3599 = vmatpush1.xpose.msra.mxu0 0.0
    %3600 = vmatprep.subr.mxu0 0.0
    %3601 = vmatpush1.xpose.msra.mxu0 0.0
    %3602 = vmatprep.subr.mxu0 0.0
    %3603 = vmatpush1.xpose.msra.mxu0 0.0
    %3604 = vmatprep.subr.mxu0 0.0
    %3605 = vmatpush1.xpose.msra.mxu0 0.0
    %3606 = vmatprep.subr.mxu0 0.0
    %3607 = vmatpush1.xpose.msra.mxu0 0.0
    %3608 = vmatprep.subr.mxu0 0.0
    %3609 = vmatpush1.xpose.msra.mxu0 0.0
    %3610 = vmatprep.subr.mxu0 0.0
    %3611 = vmatpush1.xpose.msra.mxu0 0.0
    %3612 = vmatprep.subr.mxu0 0.0
    %3613 = vmatpush1.xpose.msra.mxu0 0.0
    %3614 = vmatprep.mubr.f32.mxu0 0.0
    %3615 = vmatmul.mubr.f32.gmra.mrb[0].mxu0 %v3536
    %v3616 = vpop.f32.mrb[0].mxu0
    %v3617 = vadd.f32 %v3533, %v3616
    %v3618 = vpop.f32.mrb[0].mxu0
    %3619 = vdwg.mxu0
    %v3621 = vsel %vm46, %v3521, 0
    %v3624 = vsel %vm46, %v3529, 0
    %v3627 = vsel %vm46, %v3530, 0
    %v3630 = vsel %vm46, %v3531, 0
    %v3633 = vsel %vm46, %v3532, 0
    %3635 = vmatprep.subr.mxu0 0.0
    %3636 = vmatpush1.xpose.msra.mxu0 %v3624
    %3637 = vmatprep.subr.mxu0 0.0
    %3638 = vmatpush1.xpose.msra.mxu0 %v3627
    %3639 = vmatprep.subr.mxu0 0.0
    %3640 = vmatpush1.xpose.msra.mxu0 %v3630
    %3641 = vmatprep.subr.mxu0 0.0
    %3642 = vmatpush1.xpose.msra.mxu0 %v3633
    %3643 = vmatprep.subr.mxu0 0.0
    %3644 = vmatpush1.xpose.msra.mxu0 0.0
    %3645 = vmatprep.subr.mxu0 0.0
    %3646 = vmatpush1.xpose.msra.mxu0 0.0
    %3647 = vmatprep.subr.mxu0 0.0
    %3648 = vmatpush1.xpose.msra.mxu0 0.0
    %3649 = vmatprep.subr.mxu0 0.0
    %3650 = vmatpush1.xpose.msra.mxu0 0.0
    %3651 = vmatprep.subr.mxu0 0.0
    %3652 = vmatpush1.xpose.msra.mxu0 0.0
    %3653 = vmatprep.subr.mxu0 0.0
    %3654 = vmatpush1.xpose.msra.mxu0 0.0
    %3655 = vmatprep.subr.mxu0 0.0
    %3656 = vmatpush1.xpose.msra.mxu0 0.0
    %3657 = vmatprep.subr.mxu0 0.0
    %3658 = vmatpush1.xpose.msra.mxu0 0.0
    %3659 = vmatprep.subr.mxu0 0.0
    %3660 = vmatpush1.xpose.msra.mxu0 0.0
    %3661 = vmatprep.subr.mxu0 0.0
    %3662 = vmatpush1.xpose.msra.mxu0 0.0
    %3663 = vmatprep.subr.mxu0 0.0
    %3664 = vmatpush1.xpose.msra.mxu0 0.0
    %3665 = vmatprep.subr.mxu0 0.0
    %3666 = vmatpush1.xpose.msra.mxu0 0.0
    %3667 = vmatprep.subr.mxu0 0.0
    %3668 = vmatpush1.xpose.msra.mxu0 0.0
    %3669 = vmatprep.subr.mxu0 0.0
    %3670 = vmatpush1.xpose.msra.mxu0 0.0
    %3671 = vmatprep.subr.mxu0 0.0
    %3672 = vmatpush1.xpose.msra.mxu0 0.0
    %3673 = vmatprep.subr.mxu0 0.0
    %3674 = vmatpush1.xpose.msra.mxu0 0.0
    %3675 = vmatprep.subr.mxu0 0.0
    %3676 = vmatpush1.xpose.msra.mxu0 0.0
    %3677 = vmatprep.subr.mxu0 0.0
    %3678 = vmatpush1.xpose.msra.mxu0 0.0
    %3679 = vmatprep.subr.mxu0 0.0
    %3680 = vmatpush1.xpose.msra.mxu0 0.0
    %3681 = vmatprep.subr.mxu0 0.0
    %3682 = vmatpush1.xpose.msra.mxu0 0.0
    %3683 = vmatprep.subr.mxu0 0.0
    %3684 = vmatpush1.xpose.msra.mxu0 0.0
    %3685 = vmatprep.subr.mxu0 0.0
    %3686 = vmatpush1.xpose.msra.mxu0 0.0
    %3687 = vmatprep.subr.mxu0 0.0
    %3688 = vmatpush1.xpose.msra.mxu0 0.0
    %3689 = vmatprep.subr.mxu0 0.0
    %3690 = vmatpush1.xpose.msra.mxu0 0.0
    %3691 = vmatprep.subr.mxu0 0.0
    %3692 = vmatpush1.xpose.msra.mxu0 0.0
    %3693 = vmatprep.subr.mxu0 0.0
    %3694 = vmatpush1.xpose.msra.mxu0 0.0
    %3695 = vmatprep.subr.mxu0 0.0
    %3696 = vmatpush1.xpose.msra.mxu0 0.0
    %3697 = vmatprep.subr.mxu0 0.0
    %3698 = vmatpush1.xpose.msra.mxu0 0.0
    %3699 = vmatprep.mubr.f32.mxu0 0.0
    %3700 = vmatmul.mubr.f32.gmra.mrb[0].mxu0 %v3621
    %v3701 = vpop.f32.mrb[0].mxu0
    %v3702 = vadd.f32 %v3534, %v3701
    %v3703 = vpop.f32.mrb[0].mxu0
    %3704 = vdwg.mxu0
    %s3705 = scalar_lea.vmem [#allocation3], 64
    %v3706 = vld [vmem:[%s3705] sm:$0xff]
    %v3707 = vld [vmem:[%s3705 + $0x8] sm:$0xff]
    %v3708 = vld [vmem:[%s3705 + $0x10] sm:$0xff]
    %v3709 = vld [vmem:[%s3705 + $0x18] sm:$0xff]
    %v3710 = vld [vmem:[%s3705 + $0x100] sm:$0xff]
    %v3711 = vld [vmem:[%s3705 + $0x108] sm:$0xff]
    %v3712 = vld [vmem:[%s3705 + $0x110] sm:$0xff]
    %v3713 = vld [vmem:[%s3705 + $0x118] sm:$0xff]
    %v3714 = vld [vmem:[#allocation4 + $0x2] sm:$0x1]
    %v3715 = vld [vmem:[#allocation4 + $0xa] sm:$0x1]
    %v3717 = vsel %vm46, %v3617, 0
    %v3720 = vsel %vm46, %v3706, 0
    %v3723 = vsel %vm46, %v3707, 0
    %v3726 = vsel %vm46, %v3708, 0
    %v3729 = vsel %vm46, %v3709, 0
    %3731 = vmatprep.subr.mxu0 0.0
    %3732 = vmatpush1.xpose.msra.mxu0 %v3720
    %3733 = vmatprep.subr.mxu0 0.0
    %3734 = vmatpush1.xpose.msra.mxu0 %v3723
    %3735 = vmatprep.subr.mxu0 0.0
    %3736 = vmatpush1.xpose.msra.mxu0 %v3726
    %3737 = vmatprep.subr.mxu0 0.0
    %3738 = vmatpush1.xpose.msra.mxu0 %v3729
    %3739 = vmatprep.subr.mxu0 0.0
    %3740 = vmatpush1.xpose.msra.mxu0 0.0
    %3741 = vmatprep.subr.mxu0 0.0
    %3742 = vmatpush1.xpose.msra.mxu0 0.0
    %3743 = vmatprep.subr.mxu0 0.0
    %3744 = vmatpush1.xpose.msra.mxu0 0.0
    %3745 = vmatprep.subr.mxu0 0.0
    %3746 = vmatpush1.xpose.msra.mxu0 0.0
    %3747 = vmatprep.subr.mxu0 0.0
    %3748 = vmatpush1.xpose.msra.mxu0 0.0
    %3749 = vmatprep.subr.mxu0 0.0
    %3750 = vmatpush1.xpose.msra.mxu0 0.0
    %3751 = vmatprep.subr.mxu0 0.0
    %3752 = vmatpush1.xpose.msra.mxu0 0.0
    %3753 = vmatprep.subr.mxu0 0.0
    %3754 = vmatpush1.xpose.msra.mxu0 0.0
    %3755 = vmatprep.subr.mxu0 0.0
    %3756 = vmatpush1.xpose.msra.mxu0 0.0
    %3757 = vmatprep.subr.mxu0 0.0
    %3758 = vmatpush1.xpose.msra.mxu0 0.0
    %3759 = vmatprep.subr.mxu0 0.0
    %3760 = vmatpush1.xpose.msra.mxu0 0.0
    %3761 = vmatprep.subr.mxu0 0.0
    %3762 = vmatpush1.xpose.msra.mxu0 0.0
    %3763 = vmatprep.subr.mxu0 0.0
    %3764 = vmatpush1.xpose.msra.mxu0 0.0
    %3765 = vmatprep.subr.mxu0 0.0
    %3766 = vmatpush1.xpose.msra.mxu0 0.0
    %3767 = vmatprep.subr.mxu0 0.0
    %3768 = vmatpush1.xpose.msra.mxu0 0.0
    %3769 = vmatprep.subr.mxu0 0.0
    %3770 = vmatpush1.xpose.msra.mxu0 0.0
    %3771 = vmatprep.subr.mxu0 0.0
    %3772 = vmatpush1.xpose.msra.mxu0 0.0
    %3773 = vmatprep.subr.mxu0 0.0
    %3774 = vmatpush1.xpose.msra.mxu0 0.0
    %3775 = vmatprep.subr.mxu0 0.0
    %3776 = vmatpush1.xpose.msra.mxu0 0.0
    %3777 = vmatprep.subr.mxu0 0.0
    %3778 = vmatpush1.xpose.msra.mxu0 0.0
    %3779 = vmatprep.subr.mxu0 0.0
    %3780 = vmatpush1.xpose.msra.mxu0 0.0
    %3781 = vmatprep.subr.mxu0 0.0
    %3782 = vmatpush1.xpose.msra.mxu0 0.0
    %3783 = vmatprep.subr.mxu0 0.0
    %3784 = vmatpush1.xpose.msra.mxu0 0.0
    %3785 = vmatprep.subr.mxu0 0.0
    %3786 = vmatpush1.xpose.msra.mxu0 0.0
    %3787 = vmatprep.subr.mxu0 0.0
    %3788 = vmatpush1.xpose.msra.mxu0 0.0
    %3789 = vmatprep.subr.mxu0 0.0
    %3790 = vmatpush1.xpose.msra.mxu0 0.0
    %3791 = vmatprep.subr.mxu0 0.0
    %3792 = vmatpush1.xpose.msra.mxu0 0.0
    %3793 = vmatprep.subr.mxu0 0.0
    %3794 = vmatpush1.xpose.msra.mxu0 0.0
    %3795 = vmatprep.mubr.f32.mxu0 0.0
    %3796 = vmatmul.mubr.f32.gmra.mrb[0].mxu0 %v3717
    %v3797 = vpop.f32.mrb[0].mxu0
    %v3798 = vadd.f32 %v3714, %v3797
    %v3799 = vpop.f32.mrb[0].mxu0
    %3800 = vdwg.mxu0
    %v3802 = vsel %vm46, %v3702, 0
    %v3805 = vsel %vm46, %v3710, 0
    %v3808 = vsel %vm46, %v3711, 0
    %v3811 = vsel %vm46, %v3712, 0
    %v3814 = vsel %vm46, %v3713, 0
    %3816 = vmatprep.subr.mxu0 0.0
    %3817 = vmatpush1.xpose.msra.mxu0 %v3805
    %3818 = vmatprep.subr.mxu0 0.0
    %3819 = vmatpush1.xpose.msra.mxu0 %v3808
    %3820 = vmatprep.subr.mxu0 0.0
    %3821 = vmatpush1.xpose.msra.mxu0 %v3811
    %3822 = vmatprep.subr.mxu0 0.0
    %3823 = vmatpush1.xpose.msra.mxu0 %v3814
    %3824 = vmatprep.subr.mxu0 0.0
    %3825 = vmatpush1.xpose.msra.mxu0 0.0
    %3826 = vmatprep.subr.mxu0 0.0
    %3827 = vmatpush1.xpose.msra.mxu0 0.0
    %3828 = vmatprep.subr.mxu0 0.0
    %3829 = vmatpush1.xpose.msra.mxu0 0.0
    %3830 = vmatprep.subr.mxu0 0.0
    %3831 = vmatpush1.xpose.msra.mxu0 0.0
    %3832 = vmatprep.subr.mxu0 0.0
    %3833 = vmatpush1.xpose.msra.mxu0 0.0
    %3834 = vmatprep.subr.mxu0 0.0
    %3835 = vmatpush1.xpose.msra.mxu0 0.0
    %3836 = vmatprep.subr.mxu0 0.0
    %3837 = vmatpush1.xpose.msra.mxu0 0.0
    %3838 = vmatprep.subr.mxu0 0.0
    %3839 = vmatpush1.xpose.msra.mxu0 0.0
    %3840 = vmatprep.subr.mxu0 0.0
    %3841 = vmatpush1.xpose.msra.mxu0 0.0
    %3842 = vmatprep.subr.mxu0 0.0
    %3843 = vmatpush1.xpose.msra.mxu0 0.0
    %3844 = vmatprep.subr.mxu0 0.0
    %3845 = vmatpush1.xpose.msra.mxu0 0.0
    %3846 = vmatprep.subr.mxu0 0.0
    %3847 = vmatpush1.xpose.msra.mxu0 0.0
    %3848 = vmatprep.subr.mxu0 0.0
    %3849 = vmatpush1.xpose.msra.mxu0 0.0
    %3850 = vmatprep.subr.mxu0 0.0
    %3851 = vmatpush1.xpose.msra.mxu0 0.0
    %3852 = vmatprep.subr.mxu0 0.0
    %3853 = vmatpush1.xpose.msra.mxu0 0.0
    %3854 = vmatprep.subr.mxu0 0.0
    %3855 = vmatpush1.xpose.msra.mxu0 0.0
    %3856 = vmatprep.subr.mxu0 0.0
    %3857 = vmatpush1.xpose.msra.mxu0 0.0
    %3858 = vmatprep.subr.mxu0 0.0
    %3859 = vmatpush1.xpose.msra.mxu0 0.0
    %3860 = vmatprep.subr.mxu0 0.0
    %3861 = vmatpush1.xpose.msra.mxu0 0.0
    %3862 = vmatprep.subr.mxu0 0.0
    %3863 = vmatpush1.xpose.msra.mxu0 0.0
    %3864 = vmatprep.subr.mxu0 0.0
    %3865 = vmatpush1.xpose.msra.mxu0 0.0
    %3866 = vmatprep.subr.mxu0 0.0
    %3867 = vmatpush1.xpose.msra.mxu0 0.0
    %3868 = vmatprep.subr.mxu0 0.0
    %3869 = vmatpush1.xpose.msra.mxu0 0.0
    %3870 = vmatprep.subr.mxu0 0.0
    %3871 = vmatpush1.xpose.msra.mxu0 0.0
    %3872 = vmatprep.subr.mxu0 0.0
    %3873 = vmatpush1.xpose.msra.mxu0 0.0
    %3874 = vmatprep.subr.mxu0 0.0
    %3875 = vmatpush1.xpose.msra.mxu0 0.0
    %3876 = vmatprep.subr.mxu0 0.0
    %3877 = vmatpush1.xpose.msra.mxu0 0.0
    %3878 = vmatprep.subr.mxu0 0.0
    %3879 = vmatpush1.xpose.msra.mxu0 0.0
    %3880 = vmatprep.mubr.f32.mxu0 0.0
    %3881 = vmatmul.mubr.f32.gmra.mrb[0].mxu0 %v3802
    %v3882 = vpop.f32.mrb[0].mxu0
    %v3883 = vadd.f32 %v3715, %v3882
    %v3884 = vpop.f32.mrb[0].mxu0
    %3885 = vdwg.mxu0
    %s3886 = scalar_lea.vmem [#allocation3], 96
    %v3887 = vld [vmem:[%s3886] sm:$0xff]
    %v3888 = vld [vmem:[%s3886 + $0x8] sm:$0xff]
    %v3889 = vld [vmem:[%s3886 + $0x10] sm:$0xff]
    %v3890 = vld [vmem:[%s3886 + $0x18] sm:$0xff]
    %v3891 = vld [vmem:[%s3886 + $0x100] sm:$0xff]
    %v3892 = vld [vmem:[%s3886 + $0x108] sm:$0xff]
    %v3893 = vld [vmem:[%s3886 + $0x110] sm:$0xff]
    %v3894 = vld [vmem:[%s3886 + $0x118] sm:$0xff]
    %v3895 = vld [vmem:[#allocation4 + $0x3] sm:$0x1]
    %v3896 = vld [vmem:[#allocation4 + $0xb] sm:$0x1]
    %v3898 = vsel %vm46, %v3798, 0
    %v3901 = vsel %vm46, %v3887, 0
    %v3904 = vsel %vm46, %v3888, 0
    %v3907 = vsel %vm46, %v3889, 0
    %v3910 = vsel %vm46, %v3890, 0
    %3912 = vmatprep.subr.mxu0 0.0
    %3913 = vmatpush1.xpose.msra.mxu0 %v3901
    %3914 = vmatprep.subr.mxu0 0.0
    %3915 = vmatpush1.xpose.msra.mxu0 %v3904
    %3916 = vmatprep.subr.mxu0 0.0
    %3917 = vmatpush1.xpose.msra.mxu0 %v3907
    %3918 = vmatprep.subr.mxu0 0.0
    %3919 = vmatpush1.xpose.msra.mxu0 %v3910
    %3920 = vmatprep.subr.mxu0 0.0
    %3921 = vmatpush1.xpose.msra.mxu0 0.0
    %3922 = vmatprep.subr.mxu0 0.0
    %3923 = vmatpush1.xpose.msra.mxu0 0.0
    %3924 = vmatprep.subr.mxu0 0.0
    %3925 = vmatpush1.xpose.msra.mxu0 0.0
    %3926 = vmatprep.subr.mxu0 0.0
    %3927 = vmatpush1.xpose.msra.mxu0 0.0
    %3928 = vmatprep.subr.mxu0 0.0
    %3929 = vmatpush1.xpose.msra.mxu0 0.0
    %3930 = vmatprep.subr.mxu0 0.0
    %3931 = vmatpush1.xpose.msra.mxu0 0.0
    %3932 = vmatprep.subr.mxu0 0.0
    %3933 = vmatpush1.xpose.msra.mxu0 0.0
    %3934 = vmatprep.subr.mxu0 0.0
    %3935 = vmatpush1.xpose.msra.mxu0 0.0
    %3936 = vmatprep.subr.mxu0 0.0
    %3937 = vmatpush1.xpose.msra.mxu0 0.0
    %3938 = vmatprep.subr.mxu0 0.0
    %3939 = vmatpush1.xpose.msra.mxu0 0.0
    %3940 = vmatprep.subr.mxu0 0.0
    %3941 = vmatpush1.xpose.msra.mxu0 0.0
    %3942 = vmatprep.subr.mxu0 0.0
    %3943 = vmatpush1.xpose.msra.mxu0 0.0
    %3944 = vmatprep.subr.mxu0 0.0
    %3945 = vmatpush1.xpose.msra.mxu0 0.0
    %3946 = vmatprep.subr.mxu0 0.0
    %3947 = vmatpush1.xpose.msra.mxu0 0.0
    %3948 = vmatprep.subr.mxu0 0.0
    %3949 = vmatpush1.xpose.msra.mxu0 0.0
    %3950 = vmatprep.subr.mxu0 0.0
    %3951 = vmatpush1.xpose.msra.mxu0 0.0
    %3952 = vmatprep.subr.mxu0 0.0
    %3953 = vmatpush1.xpose.msra.mxu0 0.0
    %3954 = vmatprep.subr.mxu0 0.0
    %3955 = vmatpush1.xpose.msra.mxu0 0.0
    %3956 = vmatprep.subr.mxu0 0.0
    %3957 = vmatpush1.xpose.msra.mxu0 0.0
    %3958 = vmatprep.subr.mxu0 0.0
    %3959 = vmatpush1.xpose.msra.mxu0 0.0
    %3960 = vmatprep.subr.mxu0 0.0
    %3961 = vmatpush1.xpose.msra.mxu0 0.0
    %3962 = vmatprep.subr.mxu0 0.0
    %3963 = vmatpush1.xpose.msra.mxu0 0.0
    %3964 = vmatprep.subr.mxu0 0.0
    %3965 = vmatpush1.xpose.msra.mxu0 0.0
    %3966 = vmatprep.subr.mxu0 0.0
    %3967 = vmatpush1.xpose.msra.mxu0 0.0
    %3968 = vmatprep.subr.mxu0 0.0
    %3969 = vmatpush1.xpose.msra.mxu0 0.0
    %3970 = vmatprep.subr.mxu0 0.0
    %3971 = vmatpush1.xpose.msra.mxu0 0.0
    %3972 = vmatprep.subr.mxu0 0.0
    %3973 = vmatpush1.xpose.msra.mxu0 0.0
    %3974 = vmatprep.subr.mxu0 0.0
    %3975 = vmatpush1.xpose.msra.mxu0 0.0
    %3976 = vmatprep.mubr.f32.mxu0 0.0
    %3977 = vmatmul.mubr.f32.gmra.mrb[0].mxu0 %v3898
    %v3978 = vpop.f32.mrb[0].mxu0
    %v3979 = vadd.f32 %v3895, %v3978
    %v3980 = vpop.f32.mrb[0].mxu0
    %3981 = vdwg.mxu0
    %v3983 = vsel %vm46, %v3883, 0
    %v3986 = vsel %vm46, %v3891, 0
    %v3989 = vsel %vm46, %v3892, 0
    %v3992 = vsel %vm46, %v3893, 0
    %v3995 = vsel %vm46, %v3894, 0
    %3997 = vmatprep.subr.mxu0 0.0
    %3998 = vmatpush1.xpose.msra.mxu0 %v3986
    %3999 = vmatprep.subr.mxu0 0.0
    %4000 = vmatpush1.xpose.msra.mxu0 %v3989
    %4001 = vmatprep.subr.mxu0 0.0
    %4002 = vmatpush1.xpose.msra.mxu0 %v3992
    %4003 = vmatprep.subr.mxu0 0.0
    %4004 = vmatpush1.xpose.msra.mxu0 %v3995
    %4005 = vmatprep.subr.mxu0 0.0
    %4006 = vmatpush1.xpose.msra.mxu0 0.0
    %4007 = vmatprep.subr.mxu0 0.0
    %4008 = vmatpush1.xpose.msra.mxu0 0.0
    %4009 = vmatprep.subr.mxu0 0.0
    %4010 = vmatpush1.xpose.msra.mxu0 0.0
    %4011 = vmatprep.subr.mxu0 0.0
    %4012 = vmatpush1.xpose.msra.mxu0 0.0
    %4013 = vmatprep.subr.mxu0 0.0
    %4014 = vmatpush1.xpose.msra.mxu0 0.0
    %4015 = vmatprep.subr.mxu0 0.0
    %4016 = vmatpush1.xpose.msra.mxu0 0.0
    %4017 = vmatprep.subr.mxu0 0.0
    %4018 = vmatpush1.xpose.msra.mxu0 0.0
    %4019 = vmatprep.subr.mxu0 0.0
    %4020 = vmatpush1.xpose.msra.mxu0 0.0
    %4021 = vmatprep.subr.mxu0 0.0
    %4022 = vmatpush1.xpose.msra.mxu0 0.0
    %4023 = vmatprep.subr.mxu0 0.0
    %4024 = vmatpush1.xpose.msra.mxu0 0.0
    %4025 = vmatprep.subr.mxu0 0.0
    %4026 = vmatpush1.xpose.msra.mxu0 0.0
    %4027 = vmatprep.subr.mxu0 0.0
    %4028 = vmatpush1.xpose.msra.mxu0 0.0
    %4029 = vmatprep.subr.mxu0 0.0
    %4030 = vmatpush1.xpose.msra.mxu0 0.0
    %4031 = vmatprep.subr.mxu0 0.0
    %4032 = vmatpush1.xpose.msra.mxu0 0.0
    %4033 = vmatprep.subr.mxu0 0.0
    %4034 = vmatpush1.xpose.msra.mxu0 0.0
    %4035 = vmatprep.subr.mxu0 0.0
    %4036 = vmatpush1.xpose.msra.mxu0 0.0
    %4037 = vmatprep.subr.mxu0 0.0
    %4038 = vmatpush1.xpose.msra.mxu0 0.0
    %4039 = vmatprep.subr.mxu0 0.0
    %4040 = vmatpush1.xpose.msra.mxu0 0.0
    %4041 = vmatprep.subr.mxu0 0.0
    %4042 = vmatpush1.xpose.msra.mxu0 0.0
    %4043 = vmatprep.subr.mxu0 0.0
    %4044 = vmatpush1.xpose.msra.mxu0 0.0
    %4045 = vmatprep.subr.mxu0 0.0
    %4046 = vmatpush1.xpose.msra.mxu0 0.0
    %4047 = vmatprep.subr.mxu0 0.0
    %4048 = vmatpush1.xpose.msra.mxu0 0.0
    %4049 = vmatprep.subr.mxu0 0.0
    %4050 = vmatpush1.xpose.msra.mxu0 0.0
    %4051 = vmatprep.subr.mxu0 0.0
    %4052 = vmatpush1.xpose.msra.mxu0 0.0
    %4053 = vmatprep.subr.mxu0 0.0
    %4054 = vmatpush1.xpose.msra.mxu0 0.0
    %4055 = vmatprep.subr.mxu0 0.0
    %4056 = vmatpush1.xpose.msra.mxu0 0.0
    %4057 = vmatprep.subr.mxu0 0.0
    %4058 = vmatpush1.xpose.msra.mxu0 0.0
    %4059 = vmatprep.subr.mxu0 0.0
    %4060 = vmatpush1.xpose.msra.mxu0 0.0
    %4061 = vmatprep.mubr.f32.mxu0 0.0
    %4062 = vmatmul.mubr.f32.gmra.mrb[0].mxu0 %v3983
    %v4063 = vpop.f32.mrb[0].mxu0
    %v4064 = vadd.f32 %v3896, %v4063
    %v4065 = vpop.f32.mrb[0].mxu0
    %4066 = vdwg.mxu0
    %s4067 = scalar_lea.vmem [#allocation3], 128
    %v4068 = vld [vmem:[%s4067] sm:$0xff]
    %v4069 = vld [vmem:[%s4067 + $0x8] sm:$0xff]
    %v4070 = vld [vmem:[%s4067 + $0x10] sm:$0xff]
    %v4071 = vld [vmem:[%s4067 + $0x18] sm:$0xff]
    %v4072 = vld [vmem:[%s4067 + $0x100] sm:$0xff]
    %v4073 = vld [vmem:[%s4067 + $0x108] sm:$0xff]
    %v4074 = vld [vmem:[%s4067 + $0x110] sm:$0xff]
    %v4075 = vld [vmem:[%s4067 + $0x118] sm:$0xff]
    %v4076 = vld [vmem:[#allocation4 + $0x4] sm:$0x1]
    %v4077 = vld [vmem:[#allocation4 + $0xc] sm:$0x1]
    %v4079 = vsel %vm46, %v3979, 0
    %v4082 = vsel %vm46, %v4068, 0
    %v4085 = vsel %vm46, %v4069, 0
    %v4088 = vsel %vm46, %v4070, 0
    %v4091 = vsel %vm46, %v4071, 0
    %4093 = vmatprep.subr.mxu0 0.0
    %4094 = vmatpush1.xpose.msra.mxu0 %v4082
    %4095 = vmatprep.subr.mxu0 0.0
    %4096 = vmatpush1.xpose.msra.mxu0 %v4085
    %4097 = vmatprep.subr.mxu0 0.0
    %4098 = vmatpush1.xpose.msra.mxu0 %v4088
    %4099 = vmatprep.subr.mxu0 0.0
    %4100 = vmatpush1.xpose.msra.mxu0 %v4091
    %4101 = vmatprep.subr.mxu0 0.0
    %4102 = vmatpush1.xpose.msra.mxu0 0.0
    %4103 = vmatprep.subr.mxu0 0.0
    %4104 = vmatpush1.xpose.msra.mxu0 0.0
    %4105 = vmatprep.subr.mxu0 0.0
    %4106 = vmatpush1.xpose.msra.mxu0 0.0
    %4107 = vmatprep.subr.mxu0 0.0
    %4108 = vmatpush1.xpose.msra.mxu0 0.0
    %4109 = vmatprep.subr.mxu0 0.0
    %4110 = vmatpush1.xpose.msra.mxu0 0.0
    %4111 = vmatprep.subr.mxu0 0.0
    %4112 = vmatpush1.xpose.msra.mxu0 0.0
    %4113 = vmatprep.subr.mxu0 0.0
    %4114 = vmatpush1.xpose.msra.mxu0 0.0
    %4115 = vmatprep.subr.mxu0 0.0
    %4116 = vmatpush1.xpose.msra.mxu0 0.0
    %4117 = vmatprep.subr.mxu0 0.0
    %4118 = vmatpush1.xpose.msra.mxu0 0.0
    %4119 = vmatprep.subr.mxu0 0.0
    %4120 = vmatpush1.xpose.msra.mxu0 0.0
    %4121 = vmatprep.subr.mxu0 0.0
    %4122 = vmatpush1.xpose.msra.mxu0 0.0
    %4123 = vmatprep.subr.mxu0 0.0
    %4124 = vmatpush1.xpose.msra.mxu0 0.0
    %4125 = vmatprep.subr.mxu0 0.0
    %4126 = vmatpush1.xpose.msra.mxu0 0.0
    %4127 = vmatprep.subr.mxu0 0.0
    %4128 = vmatpush1.xpose.msra.mxu0 0.0
    %4129 = vmatprep.subr.mxu0 0.0
    %4130 = vmatpush1.xpose.msra.mxu0 0.0
    %4131 = vmatprep.subr.mxu0 0.0
    %4132 = vmatpush1.xpose.msra.mxu0 0.0
    %4133 = vmatprep.subr.mxu0 0.0
    %4134 = vmatpush1.xpose.msra.mxu0 0.0
    %4135 = vmatprep.subr.mxu0 0.0
    %4136 = vmatpush1.xpose.msra.mxu0 0.0
    %4137 = vmatprep.subr.mxu0 0.0
    %4138 = vmatpush1.xpose.msra.mxu0 0.0
    %4139 = vmatprep.subr.mxu0 0.0
    %4140 = vmatpush1.xpose.msra.mxu0 0.0
    %4141 = vmatprep.subr.mxu0 0.0
    %4142 = vmatpush1.xpose.msra.mxu0 0.0
    %4143 = vmatprep.subr.mxu0 0.0
    %4144 = vmatpush1.xpose.msra.mxu0 0.0
    %4145 = vmatprep.subr.mxu0 0.0
    %4146 = vmatpush1.xpose.msra.mxu0 0.0
    %4147 = vmatprep.subr.mxu0 0.0
    %4148 = vmatpush1.xpose.msra.mxu0 0.0
    %4149 = vmatprep.subr.mxu0 0.0
    %4150 = vmatpush1.xpose.msra.mxu0 0.0
    %4151 = vmatprep.subr.mxu0 0.0
    %4152 = vmatpush1.xpose.msra.mxu0 0.0
    %4153 = vmatprep.subr.mxu0 0.0
    %4154 = vmatpush1.xpose.msra.mxu0 0.0
    %4155 = vmatprep.subr.mxu0 0.0
    %4156 = vmatpush1.xpose.msra.mxu0 0.0
    %4157 = vmatprep.mubr.f32.mxu0 0.0
    %4158 = vmatmul.mubr.f32.gmra.mrb[0].mxu0 %v4079
    %v4159 = vpop.f32.mrb[0].mxu0
    %v4160 = vadd.f32 %v4076, %v4159
    %v4161 = vpop.f32.mrb[0].mxu0
    %4162 = vdwg.mxu0
    %v4164 = vsel %vm46, %v4064, 0
    %v4167 = vsel %vm46, %v4072, 0
    %v4170 = vsel %vm46, %v4073, 0
    %v4173 = vsel %vm46, %v4074, 0
    %v4176 = vsel %vm46, %v4075, 0
    %4178 = vmatprep.subr.mxu0 0.0
    %4179 = vmatpush1.xpose.msra.mxu0 %v4167
    %4180 = vmatprep.subr.mxu0 0.0
    %4181 = vmatpush1.xpose.msra.mxu0 %v4170
    %4182 = vmatprep.subr.mxu0 0.0
    %4183 = vmatpush1.xpose.msra.mxu0 %v4173
    %4184 = vmatprep.subr.mxu0 0.0
    %4185 = vmatpush1.xpose.msra.mxu0 %v4176
    %4186 = vmatprep.subr.mxu0 0.0
    %4187 = vmatpush1.xpose.msra.mxu0 0.0
    %4188 = vmatprep.subr.mxu0 0.0
    %4189 = vmatpush1.xpose.msra.mxu0 0.0
    %4190 = vmatprep.subr.mxu0 0.0
    %4191 = vmatpush1.xpose.msra.mxu0 0.0
    %4192 = vmatprep.subr.mxu0 0.0
    %4193 = vmatpush1.xpose.msra.mxu0 0.0
    %4194 = vmatprep.subr.mxu0 0.0
    %4195 = vmatpush1.xpose.msra.mxu0 0.0
    %4196 = vmatprep.subr.mxu0 0.0
    %4197 = vmatpush1.xpose.msra.mxu0 0.0
    %4198 = vmatprep.subr.mxu0 0.0
    %4199 = vmatpush1.xpose.msra.mxu0 0.0
    %4200 = vmatprep.subr.mxu0 0.0
    %4201 = vmatpush1.xpose.msra.mxu0 0.0
    %4202 = vmatprep.subr.mxu0 0.0
    %4203 = vmatpush1.xpose.msra.mxu0 0.0
    %4204 = vmatprep.subr.mxu0 0.0
    %4205 = vmatpush1.xpose.msra.mxu0 0.0
    %4206 = vmatprep.subr.mxu0 0.0
    %4207 = vmatpush1.xpose.msra.mxu0 0.0
    %4208 = vmatprep.subr.mxu0 0.0
    %4209 = vmatpush1.xpose.msra.mxu0 0.0
    %4210 = vmatprep.subr.mxu0 0.0
    %4211 = vmatpush1.xpose.msra.mxu0 0.0
    %4212 = vmatprep.subr.mxu0 0.0
    %4213 = vmatpush1.xpose.msra.mxu0 0.0
    %4214 = vmatprep.subr.mxu0 0.0
    %4215 = vmatpush1.xpose.msra.mxu0 0.0
    %4216 = vmatprep.subr.mxu0 0.0
    %4217 = vmatpush1.xpose.msra.mxu0 0.0
    %4218 = vmatprep.subr.mxu0 0.0
    %4219 = vmatpush1.xpose.msra.mxu0 0.0
    %4220 = vmatprep.subr.mxu0 0.0
    %4221 = vmatpush1.xpose.msra.mxu0 0.0
    %4222 = vmatprep.subr.mxu0 0.0
    %4223 = vmatpush1.xpose.msra.mxu0 0.0
    %4224 = vmatprep.subr.mxu0 0.0
    %4225 = vmatpush1.xpose.msra.mxu0 0.0
    %4226 = vmatprep.subr.mxu0 0.0
    %4227 = vmatpush1.xpose.msra.mxu0 0.0
    %4228 = vmatprep.subr.mxu0 0.0
    %4229 = vmatpush1.xpose.msra.mxu0 0.0
    %4230 = vmatprep.subr.mxu0 0.0
    %4231 = vmatpush1.xpose.msra.mxu0 0.0
    %4232 = vmatprep.subr.mxu0 0.0
    %4233 = vmatpush1.xpose.msra.mxu0 0.0
    %4234 = vmatprep.subr.mxu0 0.0
    %4235 = vmatpush1.xpose.msra.mxu0 0.0
    %4236 = vmatprep.subr.mxu0 0.0
    %4237 = vmatpush1.xpose.msra.mxu0 0.0
    %4238 = vmatprep.subr.mxu0 0.0
    %4239 = vmatpush1.xpose.msra.mxu0 0.0
    %4240 = vmatprep.subr.mxu0 0.0
    %4241 = vmatpush1.xpose.msra.mxu0 0.0
    %4242 = vmatprep.mubr.f32.mxu0 0.0
    %4243 = vmatmul.mubr.f32.gmra.mrb[0].mxu0 %v4164
    %v4244 = vpop.f32.mrb[0].mxu0
    %v4245 = vadd.f32 %v4077, %v4244
    %v4246 = vpop.f32.mrb[0].mxu0
    %4247 = vdwg.mxu0
    %s4248 = scalar_lea.vmem [#allocation3], 160
    %v4249 = vld [vmem:[%s4248] sm:$0xff]
    %v4250 = vld [vmem:[%s4248 + $0x8] sm:$0xff]
    %v4251 = vld [vmem:[%s4248 + $0x10] sm:$0xff]
    %v4252 = vld [vmem:[%s4248 + $0x18] sm:$0xff]
    %v4253 = vld [vmem:[%s4248 + $0x100] sm:$0xff]
    %v4254 = vld [vmem:[%s4248 + $0x108] sm:$0xff]
    %v4255 = vld [vmem:[%s4248 + $0x110] sm:$0xff]
    %v4256 = vld [vmem:[%s4248 + $0x118] sm:$0xff]
    %v4257 = vld [vmem:[#allocation4 + $0x5] sm:$0x1]
    %v4258 = vld [vmem:[#allocation4 + $0xd] sm:$0x1]
    %v4260 = vsel %vm46, %v4160, 0
    %v4263 = vsel %vm46, %v4249, 0
    %v4266 = vsel %vm46, %v4250, 0
    %v4269 = vsel %vm46, %v4251, 0
    %v4272 = vsel %vm46, %v4252, 0
    %4274 = vmatprep.subr.mxu0 0.0
    %4275 = vmatpush1.xpose.msra.mxu0 %v4263
    %4276 = vmatprep.subr.mxu0 0.0
    %4277 = vmatpush1.xpose.msra.mxu0 %v4266
    %4278 = vmatprep.subr.mxu0 0.0
    %4279 = vmatpush1.xpose.msra.mxu0 %v4269
    %4280 = vmatprep.subr.mxu0 0.0
    %4281 = vmatpush1.xpose.msra.mxu0 %v4272
    %4282 = vmatprep.subr.mxu0 0.0
    %4283 = vmatpush1.xpose.msra.mxu0 0.0
    %4284 = vmatprep.subr.mxu0 0.0
    %4285 = vmatpush1.xpose.msra.mxu0 0.0
    %4286 = vmatprep.subr.mxu0 0.0
    %4287 = vmatpush1.xpose.msra.mxu0 0.0
    %4288 = vmatprep.subr.mxu0 0.0
    %4289 = vmatpush1.xpose.msra.mxu0 0.0
    %4290 = vmatprep.subr.mxu0 0.0
    %4291 = vmatpush1.xpose.msra.mxu0 0.0
    %4292 = vmatprep.subr.mxu0 0.0
    %4293 = vmatpush1.xpose.msra.mxu0 0.0
    %4294 = vmatprep.subr.mxu0 0.0
    %4295 = vmatpush1.xpose.msra.mxu0 0.0
    %4296 = vmatprep.subr.mxu0 0.0
    %4297 = vmatpush1.xpose.msra.mxu0 0.0
    %4298 = vmatprep.subr.mxu0 0.0
    %4299 = vmatpush1.xpose.msra.mxu0 0.0
    %4300 = vmatprep.subr.mxu0 0.0
    %4301 = vmatpush1.xpose.msra.mxu0 0.0
    %4302 = vmatprep.subr.mxu0 0.0
    %4303 = vmatpush1.xpose.msra.mxu0 0.0
    %4304 = vmatprep.subr.mxu0 0.0
    %4305 = vmatpush1.xpose.msra.mxu0 0.0
    %4306 = vmatprep.subr.mxu0 0.0
    %4307 = vmatpush1.xpose.msra.mxu0 0.0
    %4308 = vmatprep.subr.mxu0 0.0
    %4309 = vmatpush1.xpose.msra.mxu0 0.0
    %4310 = vmatprep.subr.mxu0 0.0
    %4311 = vmatpush1.xpose.msra.mxu0 0.0
    %4312 = vmatprep.subr.mxu0 0.0
    %4313 = vmatpush1.xpose.msra.mxu0 0.0
    %4314 = vmatprep.subr.mxu0 0.0
    %4315 = vmatpush1.xpose.msra.mxu0 0.0
    %4316 = vmatprep.subr.mxu0 0.0
    %4317 = vmatpush1.xpose.msra.mxu0 0.0
    %4318 = vmatprep.subr.mxu0 0.0
    %4319 = vmatpush1.xpose.msra.mxu0 0.0
    %4320 = vmatprep.subr.mxu0 0.0
    %4321 = vmatpush1.xpose.msra.mxu0 0.0
    %4322 = vmatprep.subr.mxu0 0.0
    %4323 = vmatpush1.xpose.msra.mxu0 0.0
    %4324 = vmatprep.subr.mxu0 0.0
    %4325 = vmatpush1.xpose.msra.mxu0 0.0
    %4326 = vmatprep.subr.mxu0 0.0
    %4327 = vmatpush1.xpose.msra.mxu0 0.0
    %4328 = vmatprep.subr.mxu0 0.0
    %4329 = vmatpush1.xpose.msra.mxu0 0.0
    %4330 = vmatprep.subr.mxu0 0.0
    %4331 = vmatpush1.xpose.msra.mxu0 0.0
    %4332 = vmatprep.subr.mxu0 0.0
    %4333 = vmatpush1.xpose.msra.mxu0 0.0
    %4334 = vmatprep.subr.mxu0 0.0
    %4335 = vmatpush1.xpose.msra.mxu0 0.0
    %4336 = vmatprep.subr.mxu0 0.0
    %4337 = vmatpush1.xpose.msra.mxu0 0.0
    %4338 = vmatprep.mubr.f32.mxu0 0.0
    %4339 = vmatmul.mubr.f32.gmra.mrb[0].mxu0 %v4260
    %v4340 = vpop.f32.mrb[0].mxu0
    %v4341 = vadd.f32 %v4257, %v4340
    %v4342 = vpop.f32.mrb[0].mxu0
    %4343 = vdwg.mxu0
    %v4345 = vsel %vm46, %v4245, 0
    %v4348 = vsel %vm46, %v4253, 0
    %v4351 = vsel %vm46, %v4254, 0
    %v4354 = vsel %vm46, %v4255, 0
    %v4357 = vsel %vm46, %v4256, 0
    %4359 = vmatprep.subr.mxu0 0.0
    %4360 = vmatpush1.xpose.msra.mxu0 %v4348
    %4361 = vmatprep.subr.mxu0 0.0
    %4362 = vmatpush1.xpose.msra.mxu0 %v4351
    %4363 = vmatprep.subr.mxu0 0.0
    %4364 = vmatpush1.xpose.msra.mxu0 %v4354
    %4365 = vmatprep.subr.mxu0 0.0
    %4366 = vmatpush1.xpose.msra.mxu0 %v4357
    %4367 = vmatprep.subr.mxu0 0.0
    %4368 = vmatpush1.xpose.msra.mxu0 0.0
    %4369 = vmatprep.subr.mxu0 0.0
    %4370 = vmatpush1.xpose.msra.mxu0 0.0
    %4371 = vmatprep.subr.mxu0 0.0
    %4372 = vmatpush1.xpose.msra.mxu0 0.0
    %4373 = vmatprep.subr.mxu0 0.0
    %4374 = vmatpush1.xpose.msra.mxu0 0.0
    %4375 = vmatprep.subr.mxu0 0.0
    %4376 = vmatpush1.xpose.msra.mxu0 0.0
    %4377 = vmatprep.subr.mxu0 0.0
    %4378 = vmatpush1.xpose.msra.mxu0 0.0
    %4379 = vmatprep.subr.mxu0 0.0
    %4380 = vmatpush1.xpose.msra.mxu0 0.0
    %4381 = vmatprep.subr.mxu0 0.0
    %4382 = vmatpush1.xpose.msra.mxu0 0.0
    %4383 = vmatprep.subr.mxu0 0.0
    %4384 = vmatpush1.xpose.msra.mxu0 0.0
    %4385 = vmatprep.subr.mxu0 0.0
    %4386 = vmatpush1.xpose.msra.mxu0 0.0
    %4387 = vmatprep.subr.mxu0 0.0
    %4388 = vmatpush1.xpose.msra.mxu0 0.0
    %4389 = vmatprep.subr.mxu0 0.0
    %4390 = vmatpush1.xpose.msra.mxu0 0.0
    %4391 = vmatprep.subr.mxu0 0.0
    %4392 = vmatpush1.xpose.msra.mxu0 0.0
    %4393 = vmatprep.subr.mxu0 0.0
    %4394 = vmatpush1.xpose.msra.mxu0 0.0
    %4395 = vmatprep.subr.mxu0 0.0
    %4396 = vmatpush1.xpose.msra.mxu0 0.0
    %4397 = vmatprep.subr.mxu0 0.0
    %4398 = vmatpush1.xpose.msra.mxu0 0.0
    %4399 = vmatprep.subr.mxu0 0.0
    %4400 = vmatpush1.xpose.msra.mxu0 0.0
    %4401 = vmatprep.subr.mxu0 0.0
    %4402 = vmatpush1.xpose.msra.mxu0 0.0
    %4403 = vmatprep.subr.mxu0 0.0
    %4404 = vmatpush1.xpose.msra.mxu0 0.0
    %4405 = vmatprep.subr.mxu0 0.0
    %4406 = vmatpush1.xpose.msra.mxu0 0.0
    %4407 = vmatprep.subr.mxu0 0.0
    %4408 = vmatpush1.xpose.msra.mxu0 0.0
    %4409 = vmatprep.subr.mxu0 0.0
    %4410 = vmatpush1.xpose.msra.mxu0 0.0
    %4411 = vmatprep.subr.mxu0 0.0
    %4412 = vmatpush1.xpose.msra.mxu0 0.0
    %4413 = vmatprep.subr.mxu0 0.0
    %4414 = vmatpush1.xpose.msra.mxu0 0.0
    %4415 = vmatprep.subr.mxu0 0.0
    %4416 = vmatpush1.xpose.msra.mxu0 0.0
    %4417 = vmatprep.subr.mxu0 0.0
    %4418 = vmatpush1.xpose.msra.mxu0 0.0
    %4419 = vmatprep.subr.mxu0 0.0
    %4420 = vmatpush1.xpose.msra.mxu0 0.0
    %4421 = vmatprep.subr.mxu0 0.0
    %4422 = vmatpush1.xpose.msra.mxu0 0.0
    %4423 = vmatprep.mubr.f32.mxu0 0.0
    %4424 = vmatmul.mubr.f32.gmra.mrb[0].mxu0 %v4345
    %v4425 = vpop.f32.mrb[0].mxu0
    %v4426 = vadd.f32 %v4258, %v4425
    %v4427 = vpop.f32.mrb[0].mxu0
    %4428 = vdwg.mxu0
    %s4429 = scalar_lea.vmem [#allocation3], 192
    %v4430 = vld [vmem:[%s4429] sm:$0xff]
    %v4431 = vld [vmem:[%s4429 + $0x8] sm:$0xff]
    %v4432 = vld [vmem:[%s4429 + $0x10] sm:$0xff]
    %v4433 = vld [vmem:[%s4429 + $0x18] sm:$0xff]
    %v4434 = vld [vmem:[%s4429 + $0x100] sm:$0xff]
    %v4435 = vld [vmem:[%s4429 + $0x108] sm:$0xff]
    %v4436 = vld [vmem:[%s4429 + $0x110] sm:$0xff]
    %v4437 = vld [vmem:[%s4429 + $0x118] sm:$0xff]
    %v4438 = vld [vmem:[#allocation4 + $0x6] sm:$0x1]
    %v4439 = vld [vmem:[#allocation4 + $0xe] sm:$0x1]
    %v4441 = vsel %vm46, %v4341, 0
    %v4444 = vsel %vm46, %v4430, 0
    %v4447 = vsel %vm46, %v4431, 0
    %v4450 = vsel %vm46, %v4432, 0
    %v4453 = vsel %vm46, %v4433, 0
    %4455 = vmatprep.subr.mxu0 0.0
    %4456 = vmatpush1.xpose.msra.mxu0 %v4444
    %4457 = vmatprep.subr.mxu0 0.0
    %4458 = vmatpush1.xpose.msra.mxu0 %v4447
    %4459 = vmatprep.subr.mxu0 0.0
    %4460 = vmatpush1.xpose.msra.mxu0 %v4450
    %4461 = vmatprep.subr.mxu0 0.0
    %4462 = vmatpush1.xpose.msra.mxu0 %v4453
    %4463 = vmatprep.subr.mxu0 0.0
    %4464 = vmatpush1.xpose.msra.mxu0 0.0
    %4465 = vmatprep.subr.mxu0 0.0
    %4466 = vmatpush1.xpose.msra.mxu0 0.0
    %4467 = vmatprep.subr.mxu0 0.0
    %4468 = vmatpush1.xpose.msra.mxu0 0.0
    %4469 = vmatprep.subr.mxu0 0.0
    %4470 = vmatpush1.xpose.msra.mxu0 0.0
    %4471 = vmatprep.subr.mxu0 0.0
    %4472 = vmatpush1.xpose.msra.mxu0 0.0
    %4473 = vmatprep.subr.mxu0 0.0
    %4474 = vmatpush1.xpose.msra.mxu0 0.0
    %4475 = vmatprep.subr.mxu0 0.0
    %4476 = vmatpush1.xpose.msra.mxu0 0.0
    %4477 = vmatprep.subr.mxu0 0.0
    %4478 = vmatpush1.xpose.msra.mxu0 0.0
    %4479 = vmatprep.subr.mxu0 0.0
    %4480 = vmatpush1.xpose.msra.mxu0 0.0
    %4481 = vmatprep.subr.mxu0 0.0
    %4482 = vmatpush1.xpose.msra.mxu0 0.0
    %4483 = vmatprep.subr.mxu0 0.0
    %4484 = vmatpush1.xpose.msra.mxu0 0.0
    %4485 = vmatprep.subr.mxu0 0.0
    %4486 = vmatpush1.xpose.msra.mxu0 0.0
    %4487 = vmatprep.subr.mxu0 0.0
    %4488 = vmatpush1.xpose.msra.mxu0 0.0
    %4489 = vmatprep.subr.mxu0 0.0
    %4490 = vmatpush1.xpose.msra.mxu0 0.0
    %4491 = vmatprep.subr.mxu0 0.0
    %4492 = vmatpush1.xpose.msra.mxu0 0.0
    %4493 = vmatprep.subr.mxu0 0.0
    %4494 = vmatpush1.xpose.msra.mxu0 0.0
    %4495 = vmatprep.subr.mxu0 0.0
    %4496 = vmatpush1.xpose.msra.mxu0 0.0
    %4497 = vmatprep.subr.mxu0 0.0
    %4498 = vmatpush1.xpose.msra.mxu0 0.0
    %4499 = vmatprep.subr.mxu0 0.0
    %4500 = vmatpush1.xpose.msra.mxu0 0.0
    %4501 = vmatprep.subr.mxu0 0.0
    %4502 = vmatpush1.xpose.msra.mxu0 0.0
    %4503 = vmatprep.subr.mxu0 0.0
    %4504 = vmatpush1.xpose.msra.mxu0 0.0
    %4505 = vmatprep.subr.mxu0 0.0
    %4506 = vmatpush1.xpose.msra.mxu0 0.0
    %4507 = vmatprep.subr.mxu0 0.0
    %4508 = vmatpush1.xpose.msra.mxu0 0.0
    %4509 = vmatprep.subr.mxu0 0.0
    %4510 = vmatpush1.xpose.msra.mxu0 0.0
    %4511 = vmatprep.subr.mxu0 0.0
    %4512 = vmatpush1.xpose.msra.mxu0 0.0
    %4513 = vmatprep.subr.mxu0 0.0
    %4514 = vmatpush1.xpose.msra.mxu0 0.0
    %4515 = vmatprep.subr.mxu0 0.0
    %4516 = vmatpush1.xpose.msra.mxu0 0.0
    %4517 = vmatprep.subr.mxu0 0.0
    %4518 = vmatpush1.xpose.msra.mxu0 0.0
    %4519 = vmatprep.mubr.f32.mxu0 0.0
    %4520 = vmatmul.mubr.f32.gmra.mrb[0].mxu0 %v4441
    %v4521 = vpop.f32.mrb[0].mxu0
    %v4522 = vadd.f32 %v4438, %v4521
    %v4523 = vpop.f32.mrb[0].mxu0
    %4524 = vdwg.mxu0
    %v4526 = vsel %vm46, %v4426, 0
    %v4529 = vsel %vm46, %v4434, 0
    %v4532 = vsel %vm46, %v4435, 0
    %v4535 = vsel %vm46, %v4436, 0
    %v4538 = vsel %vm46, %v4437, 0
    %4540 = vmatprep.subr.mxu0 0.0
    %4541 = vmatpush1.xpose.msra.mxu0 %v4529
    %4542 = vmatprep.subr.mxu0 0.0
    %4543 = vmatpush1.xpose.msra.mxu0 %v4532
    %4544 = vmatprep.subr.mxu0 0.0
    %4545 = vmatpush1.xpose.msra.mxu0 %v4535
    %4546 = vmatprep.subr.mxu0 0.0
    %4547 = vmatpush1.xpose.msra.mxu0 %v4538
    %4548 = vmatprep.subr.mxu0 0.0
    %4549 = vmatpush1.xpose.msra.mxu0 0.0
    %4550 = vmatprep.subr.mxu0 0.0
    %4551 = vmatpush1.xpose.msra.mxu0 0.0
    %4552 = vmatprep.subr.mxu0 0.0
    %4553 = vmatpush1.xpose.msra.mxu0 0.0
    %4554 = vmatprep.subr.mxu0 0.0
    %4555 = vmatpush1.xpose.msra.mxu0 0.0
    %4556 = vmatprep.subr.mxu0 0.0
    %4557 = vmatpush1.xpose.msra.mxu0 0.0
    %4558 = vmatprep.subr.mxu0 0.0
    %4559 = vmatpush1.xpose.msra.mxu0 0.0
    %4560 = vmatprep.subr.mxu0 0.0
    %4561 = vmatpush1.xpose.msra.mxu0 0.0
    %4562 = vmatprep.subr.mxu0 0.0
    %4563 = vmatpush1.xpose.msra.mxu0 0.0
    %4564 = vmatprep.subr.mxu0 0.0
    %4565 = vmatpush1.xpose.msra.mxu0 0.0
    %4566 = vmatprep.subr.mxu0 0.0
    %4567 = vmatpush1.xpose.msra.mxu0 0.0
    %4568 = vmatprep.subr.mxu0 0.0
    %4569 = vmatpush1.xpose.msra.mxu0 0.0
    %4570 = vmatprep.subr.mxu0 0.0
    %4571 = vmatpush1.xpose.msra.mxu0 0.0
    %4572 = vmatprep.subr.mxu0 0.0
    %4573 = vmatpush1.xpose.msra.mxu0 0.0
    %4574 = vmatprep.subr.mxu0 0.0
    %4575 = vmatpush1.xpose.msra.mxu0 0.0
    %4576 = vmatprep.subr.mxu0 0.0
    %4577 = vmatpush1.xpose.msra.mxu0 0.0
    %4578 = vmatprep.subr.mxu0 0.0
    %4579 = vmatpush1.xpose.msra.mxu0 0.0
    %4580 = vmatprep.subr.mxu0 0.0
    %4581 = vmatpush1.xpose.msra.mxu0 0.0
    %4582 = vmatprep.subr.mxu0 0.0
    %4583 = vmatpush1.xpose.msra.mxu0 0.0
    %4584 = vmatprep.subr.mxu0 0.0
    %4585 = vmatpush1.xpose.msra.mxu0 0.0
    %4586 = vmatprep.subr.mxu0 0.0
    %4587 = vmatpush1.xpose.msra.mxu0 0.0
    %4588 = vmatprep.subr.mxu0 0.0
    %4589 = vmatpush1.xpose.msra.mxu0 0.0
    %4590 = vmatprep.subr.mxu0 0.0
    %4591 = vmatpush1.xpose.msra.mxu0 0.0
    %4592 = vmatprep.subr.mxu0 0.0
    %4593 = vmatpush1.xpose.msra.mxu0 0.0
    %4594 = vmatprep.subr.mxu0 0.0
    %4595 = vmatpush1.xpose.msra.mxu0 0.0
    %4596 = vmatprep.subr.mxu0 0.0
    %4597 = vmatpush1.xpose.msra.mxu0 0.0
    %4598 = vmatprep.subr.mxu0 0.0
    %4599 = vmatpush1.xpose.msra.mxu0 0.0
    %4600 = vmatprep.subr.mxu0 0.0
    %4601 = vmatpush1.xpose.msra.mxu0 0.0
    %4602 = vmatprep.subr.mxu0 0.0
    %4603 = vmatpush1.xpose.msra.mxu0 0.0
    %4604 = vmatprep.mubr.f32.mxu0 0.0
    %4605 = vmatmul.mubr.f32.gmra.mrb[0].mxu0 %v4526
    %v4606 = vpop.f32.mrb[0].mxu0
    %v4607 = vadd.f32 %v4439, %v4606
    %v4608 = vpop.f32.mrb[0].mxu0
    %4609 = vdwg.mxu0
    %s4610 = scalar_lea.vmem [#allocation3], 224
    %v4611 = vld [vmem:[%s4610] sm:$0xff]
    %v4612 = vld [vmem:[%s4610 + $0x8] sm:$0xff]
    %v4613 = vld [vmem:[%s4610 + $0x10] sm:$0xff]
    %v4614 = vld [vmem:[%s4610 + $0x18] sm:$0xff]
    %v4615 = vld [vmem:[%s4610 + $0x100] sm:$0xff]
    %v4616 = vld [vmem:[%s4610 + $0x108] sm:$0xff]
    %v4617 = vld [vmem:[%s4610 + $0x110] sm:$0xff]
    %v4618 = vld [vmem:[%s4610 + $0x118] sm:$0xff]
    %v4619 = vld [vmem:[#allocation4 + $0x7] sm:$0x1]
    %v4620 = vld [vmem:[#allocation4 + $0xf] sm:$0x1]
    %v4622 = vsel %vm46, %v4522, 0
    %v4625 = vsel %vm46, %v4611, 0
    %v4628 = vsel %vm46, %v4612, 0
    %v4631 = vsel %vm46, %v4613, 0
    %v4634 = vsel %vm46, %v4614, 0
    %4636 = vmatprep.subr.mxu0 0.0
    %4637 = vmatpush1.xpose.msra.mxu0 %v4625
    %4638 = vmatprep.subr.mxu0 0.0
    %4639 = vmatpush1.xpose.msra.mxu0 %v4628
    %4640 = vmatprep.subr.mxu0 0.0
    %4641 = vmatpush1.xpose.msra.mxu0 %v4631
    %4642 = vmatprep.subr.mxu0 0.0
    %4643 = vmatpush1.xpose.msra.mxu0 %v4634
    %4644 = vmatprep.subr.mxu0 0.0
    %4645 = vmatpush1.xpose.msra.mxu0 0.0
    %4646 = vmatprep.subr.mxu0 0.0
    %4647 = vmatpush1.xpose.msra.mxu0 0.0
    %4648 = vmatprep.subr.mxu0 0.0
    %4649 = vmatpush1.xpose.msra.mxu0 0.0
    %4650 = vmatprep.subr.mxu0 0.0
    %4651 = vmatpush1.xpose.msra.mxu0 0.0
    %4652 = vmatprep.subr.mxu0 0.0
    %4653 = vmatpush1.xpose.msra.mxu0 0.0
    %4654 = vmatprep.subr.mxu0 0.0
    %4655 = vmatpush1.xpose.msra.mxu0 0.0
    %4656 = vmatprep.subr.mxu0 0.0
    %4657 = vmatpush1.xpose.msra.mxu0 0.0
    %4658 = vmatprep.subr.mxu0 0.0
    %4659 = vmatpush1.xpose.msra.mxu0 0.0
    %4660 = vmatprep.subr.mxu0 0.0
    %4661 = vmatpush1.xpose.msra.mxu0 0.0
    %4662 = vmatprep.subr.mxu0 0.0
    %4663 = vmatpush1.xpose.msra.mxu0 0.0
    %4664 = vmatprep.subr.mxu0 0.0
    %4665 = vmatpush1.xpose.msra.mxu0 0.0
    %4666 = vmatprep.subr.mxu0 0.0
    %4667 = vmatpush1.xpose.msra.mxu0 0.0
    %4668 = vmatprep.subr.mxu0 0.0
    %4669 = vmatpush1.xpose.msra.mxu0 0.0
    %4670 = vmatprep.subr.mxu0 0.0
    %4671 = vmatpush1.xpose.msra.mxu0 0.0
    %4672 = vmatprep.subr.mxu0 0.0
    %4673 = vmatpush1.xpose.msra.mxu0 0.0
    %4674 = vmatprep.subr.mxu0 0.0
    %4675 = vmatpush1.xpose.msra.mxu0 0.0
    %4676 = vmatprep.subr.mxu0 0.0
    %4677 = vmatpush1.xpose.msra.mxu0 0.0
    %4678 = vmatprep.subr.mxu0 0.0
    %4679 = vmatpush1.xpose.msra.mxu0 0.0
    %4680 = vmatprep.subr.mxu0 0.0
    %4681 = vmatpush1.xpose.msra.mxu0 0.0
    %4682 = vmatprep.subr.mxu0 0.0
    %4683 = vmatpush1.xpose.msra.mxu0 0.0
    %4684 = vmatprep.subr.mxu0 0.0
    %4685 = vmatpush1.xpose.msra.mxu0 0.0
    %4686 = vmatprep.subr.mxu0 0.0
    %4687 = vmatpush1.xpose.msra.mxu0 0.0
    %4688 = vmatprep.subr.mxu0 0.0
    %4689 = vmatpush1.xpose.msra.mxu0 0.0
    %4690 = vmatprep.subr.mxu0 0.0
    %4691 = vmatpush1.xpose.msra.mxu0 0.0
    %4692 = vmatprep.subr.mxu0 0.0
    %4693 = vmatpush1.xpose.msra.mxu0 0.0
    %4694 = vmatprep.subr.mxu0 0.0
    %4695 = vmatpush1.xpose.msra.mxu0 0.0
    %4696 = vmatprep.subr.mxu0 0.0
    %4697 = vmatpush1.xpose.msra.mxu0 0.0
    %4698 = vmatprep.subr.mxu0 0.0
    %4699 = vmatpush1.xpose.msra.mxu0 0.0
    %4700 = vmatprep.mubr.f32.mxu0 0.0
    %4701 = vmatmul.mubr.f32.gmra.mrb[0].mxu0 %v4622
    %v4702 = vpop.f32.mrb[0].mxu0
    %v4703 = vadd.f32 %v4619, %v4702
    %v4704 = vpop.f32.mrb[0].mxu0
    %4705 = vdwg.mxu0
    %v4707 = vsel %vm46, %v4607, 0
    %v4710 = vsel %vm46, %v4615, 0
    %v4713 = vsel %vm46, %v4616, 0
    %v4716 = vsel %vm46, %v4617, 0
    %v4719 = vsel %vm46, %v4618, 0
    %4721 = vmatprep.subr.mxu0 0.0
    %4722 = vmatpush1.xpose.msra.mxu0 %v4710
    %4723 = vmatprep.subr.mxu0 0.0
    %4724 = vmatpush1.xpose.msra.mxu0 %v4713
    %4725 = vmatprep.subr.mxu0 0.0
    %4726 = vmatpush1.xpose.msra.mxu0 %v4716
    %4727 = vmatprep.subr.mxu0 0.0
    %4728 = vmatpush1.xpose.msra.mxu0 %v4719
    %4729 = vmatprep.subr.mxu0 0.0
    %4730 = vmatpush1.xpose.msra.mxu0 0.0
    %4731 = vmatprep.subr.mxu0 0.0
    %4732 = vmatpush1.xpose.msra.mxu0 0.0
    %4733 = vmatprep.subr.mxu0 0.0
    %4734 = vmatpush1.xpose.msra.mxu0 0.0
    %4735 = vmatprep.subr.mxu0 0.0
    %4736 = vmatpush1.xpose.msra.mxu0 0.0
    %4737 = vmatprep.subr.mxu0 0.0
    %4738 = vmatpush1.xpose.msra.mxu0 0.0
    %4739 = vmatprep.subr.mxu0 0.0
    %4740 = vmatpush1.xpose.msra.mxu0 0.0
    %4741 = vmatprep.subr.mxu0 0.0
    %4742 = vmatpush1.xpose.msra.mxu0 0.0
    %4743 = vmatprep.subr.mxu0 0.0
    %4744 = vmatpush1.xpose.msra.mxu0 0.0
    %4745 = vmatprep.subr.mxu0 0.0
    %4746 = vmatpush1.xpose.msra.mxu0 0.0
    %4747 = vmatprep.subr.mxu0 0.0
    %4748 = vmatpush1.xpose.msra.mxu0 0.0
    %4749 = vmatprep.subr.mxu0 0.0
    %4750 = vmatpush1.xpose.msra.mxu0 0.0
    %4751 = vmatprep.subr.mxu0 0.0
    %4752 = vmatpush1.xpose.msra.mxu0 0.0
    %4753 = vmatprep.subr.mxu0 0.0
    %4754 = vmatpush1.xpose.msra.mxu0 0.0
    %4755 = vmatprep.subr.mxu0 0.0
    %4756 = vmatpush1.xpose.msra.mxu0 0.0
    %4757 = vmatprep.subr.mxu0 0.0
    %4758 = vmatpush1.xpose.msra.mxu0 0.0
    %4759 = vmatprep.subr.mxu0 0.0
    %4760 = vmatpush1.xpose.msra.mxu0 0.0
    %4761 = vmatprep.subr.mxu0 0.0
    %4762 = vmatpush1.xpose.msra.mxu0 0.0
    %4763 = vmatprep.subr.mxu0 0.0
    %4764 = vmatpush1.xpose.msra.mxu0 0.0
    %4765 = vmatprep.subr.mxu0 0.0
    %4766 = vmatpush1.xpose.msra.mxu0 0.0
    %4767 = vmatprep.subr.mxu0 0.0
    %4768 = vmatpush1.xpose.msra.mxu0 0.0
    %4769 = vmatprep.subr.mxu0 0.0
    %4770 = vmatpush1.xpose.msra.mxu0 0.0
    %4771 = vmatprep.subr.mxu0 0.0
    %4772 = vmatpush1.xpose.msra.mxu0 0.0
    %4773 = vmatprep.subr.mxu0 0.0
    %4774 = vmatpush1.xpose.msra.mxu0 0.0
    %4775 = vmatprep.subr.mxu0 0.0
    %4776 = vmatpush1.xpose.msra.mxu0 0.0
    %4777 = vmatprep.subr.mxu0 0.0
    %4778 = vmatpush1.xpose.msra.mxu0 0.0
    %4779 = vmatprep.subr.mxu0 0.0
    %4780 = vmatpush1.xpose.msra.mxu0 0.0
    %4781 = vmatprep.subr.mxu0 0.0
    %4782 = vmatpush1.xpose.msra.mxu0 0.0
    %4783 = vmatprep.subr.mxu0 0.0
    %4784 = vmatpush1.xpose.msra.mxu0 0.0
    %4785 = vmatprep.mubr.f32.mxu0 0.0
    %4786 = vmatmul.mubr.f32.gmra.mrb[0].mxu0 %v4707
    %v4787 = vpop.f32.mrb[0].mxu0
    %v4788 = vadd.f32 %v4620, %v4787
    %v4789 = vpop.f32.mrb[0].mxu0
    %4790 = vdwg.mxu0
    %vm4791 = vcmask 253952
    %4792 = vst.msk [vmem:[#allocation2] sm:$0x1] %vm4791, %v4703
    %4793 = vst.msk [vmem:[#allocation2 + $0x1] sm:$0x1] %vm4791, %v4788
    // Predicated region
    $region42: #{tpu_custom_call.1} parent=1 // pred_check
      %p4794 = pneg %p33
    $region43: #{tpu_custom_call.1} parent=1 // pred_check_branch
      %4796 = sbr.rel (%p4794) target = $region45
    $region44: #{tpu_custom_call.1} parent=1 // pred_region
      %v4799 = vrot.slane %v4788, 7
      %vm4800 = vcmask 1041409
      %v4801 = vsel %vm4800, %v4799, %v4703
      %vm4803 = vcmask 254976
      %v4804 = vsel %vm4803, %v4801, 0.0
      %4805 = vadd.xlane.f32.xlu0 %v4804
      %v4806 = vpop.xlane.xlu0 %4805
      %v4807 = vrcp.pop 32.0
      %v4808 = vmul.f32 %v4806, %v4807
      %v4810 = vrot.slane %v4808, 1
      %v4813 = vsub.f32 %v4703, %v4808
      %v4814 = vsub.f32 %v4788, %v4810
      %v4815 = vmul.f32 %v4813, %v4813
      %v4816 = vmul.f32 %v4814, %v4814
      %v4819 = vrot.slane %v4816, 7
      %v4820 = vsel %vm4800, %v4819, %v4815
      %v4822 = vsel %vm4803, %v4820, 0.0
      %4823 = vadd.xlane.f32.xlu0 %v4822
      %v4824 = vpop.xlane.xlu0 %4823
      %v4825 = vmul.f32 %v4824, %v4807
      %v4826 = vadd.f32 %v4825, 1e-05
      %v4827 = vrsqrt.pop %v4826
      %v4829 = vrot.slane %v4827, 1
      %v4832 = vmul.f32 %v4813, %v4827
      %v4833 = vmul.f32 %v4814, %v4829
      %v4834 = vld [vmem:[%s5] sm:$0x1]
      %v4836 = vlaneseq
      %v4837 = vshrl.u32 %v4836, 7
      %v4838 = vsub.s32 0, %v4837
      %v4839 = vrot.slane %v4834, %v4838
      %v4841 = vmul.f32 %v4832, %v4839
      %v4842 = vmul.f32 %v4833, %v4839
      %v4843 = vld [vmem:[%s6] sm:$0x1]
      %v4845 = vlaneseq
      %v4846 = vshrl.u32 %v4845, 7
      %v4847 = vsub.s32 0, %v4846
      %v4848 = vrot.slane %v4843, %v4847
      %v4850 = vadd.f32 %v4841, %v4848
      %v4851 = vadd.f32 %v4842, %v4848
      %v4852 = vld [vmem:[%s7] sm:$0xff]
      %v4853 = vld [vmem:[%s7 + $0x8] sm:$0xff]
      %v4854 = vld [vmem:[%s7 + $0x10] sm:$0xff]
      %v4855 = vld [vmem:[%s7 + $0x18] sm:$0xff]
      %v4856 = vld [vmem:[%s8] sm:$0x1]
      %v4858 = vlaneseq
      %v4859 = vshrl.u32 %v4858, 7
      %v4860 = vsub.s32 0, %v4859
      %v4861 = vrot.slane %v4856, %v4860
      %v4865 = vrot.slane %v4851, 7
      %v4866 = vsel %vm4800, %v4865, %v4850
      %v4867 = vsel %vm46, %v4866, 0
      %4869 = vmatprep.subr.mxu0 0.0
      %4870 = vmatpush1.msra.mxu0 %v4852
      %4871 = vmatprep.subr.mxu0 0.0
      %4872 = vmatpush1.msra.mxu0 %v4853
      %4873 = vmatprep.subr.mxu0 0.0
      %4874 = vmatpush1.msra.mxu0 %v4854
      %4875 = vmatprep.subr.mxu0 0.0
      %4876 = vmatpush1.msra.mxu0 %v4855
      %4877 = vmatprep.subr.mxu0 0.0
      %4878 = vmatpush1.msra.mxu0 0.0
      %4879 = vmatprep.subr.mxu0 0.0
      %4880 = vmatpush1.msra.mxu0 0.0
      %4881 = vmatprep.subr.mxu0 0.0
      %4882 = vmatpush1.msra.mxu0 0.0
      %4883 = vmatprep.subr.mxu0 0.0
      %4884 = vmatpush1.msra.mxu0 0.0
      %4885 = vmatprep.subr.mxu0 0.0
      %4886 = vmatpush1.msra.mxu0 0.0
      %4887 = vmatprep.subr.mxu0 0.0
      %4888 = vmatpush1.msra.mxu0 0.0
      %4889 = vmatprep.subr.mxu0 0.0
      %4890 = vmatpush1.msra.mxu0 0.0
      %4891 = vmatprep.subr.mxu0 0.0
      %4892 = vmatpush1.msra.mxu0 0.0
      %4893 = vmatprep.subr.mxu0 0.0
      %4894 = vmatpush1.msra.mxu0 0.0
      %4895 = vmatprep.subr.mxu0 0.0
      %4896 = vmatpush1.msra.mxu0 0.0
      %4897 = vmatprep.subr.mxu0 0.0
      %4898 = vmatpush1.msra.mxu0 0.0
      %4899 = vmatprep.subr.mxu0 0.0
      %4900 = vmatpush1.msra.mxu0 0.0
      %4901 = vmatprep.subr.mxu0 0.0
      %4902 = vmatpush1.msra.mxu0 0.0
      %4903 = vmatprep.subr.mxu0 0.0
      %4904 = vmatpush1.msra.mxu0 0.0
      %4905 = vmatprep.subr.mxu0 0.0
      %4906 = vmatpush1.msra.mxu0 0.0
      %4907 = vmatprep.subr.mxu0 0.0
      %4908 = vmatpush1.msra.mxu0 0.0
      %4909 = vmatprep.subr.mxu0 0.0
      %4910 = vmatpush1.msra.mxu0 0.0
      %4911 = vmatprep.subr.mxu0 0.0
      %4912 = vmatpush1.msra.mxu0 0.0
      %4913 = vmatprep.subr.mxu0 0.0
      %4914 = vmatpush1.msra.mxu0 0.0
      %4915 = vmatprep.subr.mxu0 0.0
      %4916 = vmatpush1.msra.mxu0 0.0
      %4917 = vmatprep.subr.mxu0 0.0
      %4918 = vmatpush1.msra.mxu0 0.0
      %4919 = vmatprep.subr.mxu0 0.0
      %4920 = vmatpush1.msra.mxu0 0.0
      %4921 = vmatprep.subr.mxu0 0.0
      %4922 = vmatpush1.msra.mxu0 0.0
      %4923 = vmatprep.subr.mxu0 0.0
      %4924 = vmatpush1.msra.mxu0 0.0
      %4925 = vmatprep.subr.mxu0 0.0
      %4926 = vmatpush1.msra.mxu0 0.0
      %4927 = vmatprep.subr.mxu0 0.0
      %4928 = vmatpush1.msra.mxu0 0.0
      %4929 = vmatprep.subr.mxu0 0.0
      %4930 = vmatpush1.msra.mxu0 0.0
      %4931 = vmatprep.subr.mxu0 0.0
      %4932 = vmatpush1.msra.mxu0 0.0
      %4933 = vmatprep.mubr.f32.mxu0 0.0
      %4934 = vmatmul.mubr.f32.gmra.mrb[0].mxu0 %v4867
      %v4935 = vpop.f32.mrb[0].mxu0
      %v4936 = vadd.f32 %v4861, %v4935
      %v4937 = vpop.f32.mrb[0].mxu0
      %4938 = vdwg.mxu0
      %vm4939 = vcmask 58368
      %4940 = vst.msk [vmem:[#allocation5] sm:$0x3] %vm4939, %v4936
    $region45: #{tpu_custom_call.1} parent=1 // pred_fallthru
      _
    // Predicated region
    $region46: #{tpu_custom_call.1} parent=1 // pred_check
      _
    $region47: #{tpu_custom_call.1} parent=1 // pred_check_branch
      %4942 = sbr.rel (0) target = $region49
    $region48: #{tpu_custom_call.1} parent=1 // pred_region
      %s4944 = ssub.s32 32, 32
      %4945 = vsyncadd [#allocation6], %s4944
      %s4947 = sshll.u32 [#allocation5], 4
      %s4948 = int_to_ptr.vmem [resolvable:$true] %s4947
      %4950 = dma.vmem_to_hbm [thread:$0]  %s4948, 32, %s9, [#allocation6]
    $region49: #{tpu_custom_call.1} parent=1 // pred_fallthru
      _
    // Predicated region
    $region50: #{tpu_custom_call.1} parent=1 // pred_check
      _
    $region51: #{tpu_custom_call.1} parent=1 // pred_check_branch
      %4952 = sbr.rel (0) target = $region53
    $region52: #{tpu_custom_call.1} parent=1 // pred_region
      %4953 = dma.done [#allocation6], 32
    $region53: #{tpu_custom_call.1} parent=1 // pred_fallthru
      _
    %4954 = vsyncpa [#allocation6], 1

</llo_original>
